<compile_context>
chip_gen: v7x
topology: tpu7x:2x2x1
jax: 0.10.0
libtpu: 0.0.40
codegen_flags: <defaults>
</compile_context>

<pallas_src>
import functools
import math

import jax
import jax.numpy as jnp
from jax import lax
from jax.experimental import pallas as pl
from jax.experimental.pallas import tpu as pltpu


# ---------------------------------------------------------------------------
# Fused Pallas kernel: full forward for one batch element per grid step.
# ---------------------------------------------------------------------------
def _fused_dqn_kernel(p1_ref, w1_ref, b1_ref, w2_ref, b2_ref, w3_ref, b3_ref,
                      wn1_ref, bn1_ref, wn2_ref, bn2_ref, out_ref, *,
                      ow1, oh2, ow2, oh3, ow3, num_actions, num_atoms):
    f32 = jnp.float32
    bf16 = jnp.bfloat16

    # ---- conv1: patches [P1, Cin*8*8] (bf16, 1/255 folded into w1) ----
    h1 = jnp.dot(p1_ref[0], w1_ref[...], preferred_element_type=f32)
    h1 = jnp.maximum(h1 + b1_ref[...], 0.0)            # f32 [P1, 32], row = oh*OW1+ow

    # ---- conv2 (k=4, s=2): im2col built in-kernel from VMEM-resident h1 ----
    rows = []
    for oh in range(oh2):
        for ow in range(ow2):
            segs = []
            for i in range(4):
                for j in range(4):
                    r = (2 * oh + i) * ow1 + (2 * ow + j)
                    segs.append(h1[r:r + 1, :])
            rows.append(jnp.concatenate(segs, axis=1))  # [1, 4*4*32], (i, j, c) order
    p2 = jnp.concatenate(rows, axis=0).astype(bf16)     # [P2, 512]
    h2 = jnp.dot(p2, w2_ref[...], preferred_element_type=f32)
    h2 = jnp.maximum(h2 + b2_ref[...], 0.0)             # f32 [P2, 64], row = oh*OW2+ow

    # ---- conv3 (k=3, s=1): im2col built in-kernel from h2 ----
    rows = []
    for oh in range(oh3):
        for ow in range(ow3):
            segs = []
            for i in range(3):
                for j in range(3):
                    r = (oh + i) * ow2 + (ow + j)
                    segs.append(h2[r:r + 1, :])
            rows.append(jnp.concatenate(segs, axis=1))  # [1, 3*3*64], (i, j, c) order
    p3 = jnp.concatenate(rows, axis=0).astype(bf16)     # [P3, 576]
    h3 = jnp.dot(p3, w3_ref[...], preferred_element_type=f32)
    h3 = jnp.maximum(h3 + b3_ref[...], 0.0)             # f32 [P3, 64]

    # ---- flatten features in (h, w, c) order (noisy1 rows pre-permuted to match)
    if oh3 * ow3 == 1:
        feat = h3.astype(bf16)                          # [1, F]
    else:
        feat = jnp.concatenate([h3[p:p + 1, :] for p in range(oh3 * ow3)],
                               axis=1).astype(bf16)

    # ---- noisy1 (effective linear) + ReLU ----
    a1 = jnp.dot(feat, wn1_ref[...], preferred_element_type=f32)
    a1 = jnp.maximum(a1 + bn1_ref[...], 0.0).astype(bf16)         # [1, 512]

    # ---- noisy2 logits (kept in f32, never leave VMEM) ----
    logits = jnp.dot(a1, wn2_ref[...], preferred_element_type=f32) + bn2_ref[...]

    # ---- fused per-action softmax over atoms ----
    outs = []
    for a in range(num_actions):
        la = logits[:, a * num_atoms:(a + 1) * num_atoms]          # [1, atoms]
        m = jnp.max(la, axis=-1, keepdims=True)
        e = jnp.exp(la - m)
        s = jnp.sum(e, axis=-1, keepdims=True)
        outs.append(e / s)                                         # [1, atoms]
    probs = jnp.concatenate(outs, axis=0)                          # [A, atoms]
    out_ref[0] = probs.astype(out_ref.dtype)


# ---------------------------------------------------------------------------
# Glue: im2col for conv1 (layout only), parameter construction / packing.
# ---------------------------------------------------------------------------
def _conv_out(s, k, st):
    return (s - k) // st + 1


def _feature_dims(h, w):
    oh1, ow1 = _conv_out(h, 8, 4), _conv_out(w, 8, 4)
    oh2, ow2 = _conv_out(oh1, 4, 2), _conv_out(ow1, 4, 2)
    oh3, ow3 = _conv_out(oh2, 3, 1), _conv_out(ow2, 3, 1)
    return (oh1, ow1), (oh2, ow2), (oh3, ow3)


def _im2col(x, kh, kw, stride):
    """x: [B, C, H, W] -> patches [B, OH*OW, C*KH*KW] (PyTorch (c, kh, kw) order)."""
    B, C, H, W = x.shape
    OH = _conv_out(H, kh, stride)
    OW = _conv_out(W, kw, stride)
    cols = []
    for i in range(kh):
        for j in range(kw):
            cols.append(x[:, :, i:i + stride * OH:stride, j:j + stride * OW:stride])
    col = jnp.stack(cols, axis=2).reshape(B, C, kh, kw, OH, OW)
    col = col.transpose(0, 4, 5, 1, 2, 3).reshape(B, OH * OW, C * kh * kw)
    return col, OH, OW


def _noisy_linear_params(key, in_f, out_f, std_init=0.5):
    """Deterministic NoisyLinear params -> effective (W [in,out], b [out])."""
    k_mu_w, k_mu_b, k_eps_in, k_eps_out = jax.random.split(key, 4)
    mu_range = 1.0 / math.sqrt(in_f)
    weight_mu = jax.random.uniform(k_mu_w, (out_f, in_f), jnp.float32,
                                   -mu_range, mu_range)
    bias_mu = jax.random.uniform(k_mu_b, (out_f,), jnp.float32,
                                 -mu_range, mu_range)
    weight_sigma = jnp.full((out_f, in_f), std_init / math.sqrt(in_f), jnp.float32)
    bias_sigma = jnp.full((out_f,), std_init / math.sqrt(out_f), jnp.float32)

    def f(e):
        return jnp.sign(e) * jnp.sqrt(jnp.abs(e))

    eps_in = f(jax.random.normal(k_eps_in, (in_f,), jnp.float32))
    eps_out = f(jax.random.normal(k_eps_out, (out_f,), jnp.float32))
    weight_eps = jnp.outer(eps_out, eps_in)
    W = weight_mu + weight_sigma * weight_eps            # [out, in]
    b = bias_mu + bias_sigma * eps_out                   # [out]
    return W.T, b


def _conv_params(key, cout, cin, k):
    kw_, kb_ = jax.random.split(key)
    fan_in = cin * k * k
    bound = 1.0 / math.sqrt(fan_in)
    w = jax.random.uniform(kw_, (cout, cin, k, k), jnp.float32, -bound, bound)
    b = jax.random.uniform(kb_, (cout,), jnp.float32, -bound, bound)
    return w, b


def init_params(key, input_shape, num_actions, num_atoms):
    cin, h, w = input_shape
    k1, k2, k3, k4, k5 = jax.random.split(key, 5)
    conv1 = _conv_params(k1, 32, cin, 8)
    conv2 = _conv_params(k2, 64, 32, 4)
    conv3 = _conv_params(k3, 64, 64, 3)
    (_, _), (_, _), (oh3, ow3) = _feature_dims(h, w)
    feature_size = 64 * oh3 * ow3
    noisy1 = _noisy_linear_params(k4, feature_size, 512)
    noisy2 = _noisy_linear_params(k5, 512, num_actions * num_atoms)
    return dict(conv1=conv1, conv2=conv2, conv3=conv3,
                noisy1=noisy1, noisy2=noisy2)


def prepare_kernel_params(params, input_shape):
    """Reshape / cast module params into the fused kernel's operand layout."""
    cin, h, w = input_shape
    (_, _), (_, _), (oh3, ow3) = _feature_dims(h, w)
    w1, b1 = params["conv1"]            # [32, cin, 8, 8]
    w2, b2 = params["conv2"]            # [64, 32, 4, 4]
    w3, b3 = params["conv3"]            # [64, 64, 3, 3]
    Wn1, bn1 = params["noisy1"]         # [F, 512]
    Wn2, bn2 = params["noisy2"]         # [512, A*atoms]
    f32, bf16 = jnp.float32, jnp.bfloat16

    # conv1: (c, kh, kw) feature rows (matches wrapper im2col); fold the 1/255.
    w1p = (w1.reshape(w1.shape[0], -1).T / 255.0).astype(bf16)
    # conv2/conv3: the kernel builds patches in (kh, kw, c) order.
    w2p = w2.transpose(2, 3, 1, 0).reshape(-1, w2.shape[0]).astype(bf16)
    w3p = w3.transpose(2, 3, 1, 0).reshape(-1, w3.shape[0]).astype(bf16)
    # noisy1: permute rows from PyTorch (c, h, w) flatten to the kernel's (h, w, c).
    c3 = w3.shape[0]
    wn1p = Wn1.reshape(c3, oh3, ow3, -1).transpose(1, 2, 0, 3)
    wn1p = wn1p.reshape(c3 * oh3 * ow3, -1).astype(bf16)
    wn2p = Wn2.astype(bf16)
    return dict(
        w1=w1p, b1=b1.reshape(1, -1).astype(f32),
        w2=w2p, b2=b2.reshape(1, -1).astype(f32),
        w3=w3p, b3=b3.reshape(1, -1).astype(f32),
        wn1=wn1p, bn1=bn1.reshape(1, -1).astype(f32),
        wn2=wn2p, bn2=bn2.reshape(1, -1).astype(f32),
    )


def categorical_cnn_dqn_forward(params, x, input_shape, num_actions, num_atoms):
    """x: [B, C, H, W] float32 (0..255) -> [B, num_actions, num_atoms] probs."""
    B = x.shape[0]
    cin, h, w = input_shape
    (oh1, ow1), (oh2, ow2), (oh3, ow3) = _feature_dims(h, w)
    kp = prepare_kernel_params(params, input_shape)

    # conv1 im2col: pure layout prep of the raw input (single XLA pass), bf16 DMA.
    patches1, p_oh1, p_ow1 = _im2col(x, 8, 8, 4)       # [B, P1, cin*64]
    assert (p_oh1, p_ow1) == (oh1, ow1)
    patches1 = patches1.astype(jnp.bfloat16)
    p1_rows, p1_k = patches1.shape[1], patches1.shape[2]

    kern = functools.partial(
        _fused_dqn_kernel, ow1=ow1, oh2=oh2, ow2=ow2, oh3=oh3, ow3=ow3,
        num_actions=num_actions, num_atoms=num_atoms)

    def _full(shape):
        return pl.BlockSpec(shape, lambda b: tuple(0 for _ in shape))

    out = pl.pallas_call(
        kern,
        grid=(B,),
        out_shape=jax.ShapeDtypeStruct((B, num_actions, num_atoms), jnp.float32),
        in_specs=[
            pl.BlockSpec((1, p1_rows, p1_k), lambda b: (b, 0, 0)),
            _full(kp["w1"].shape), _full(kp["b1"].shape),
            _full(kp["w2"].shape), _full(kp["b2"].shape),
            _full(kp["w3"].shape), _full(kp["b3"].shape),
            _full(kp["wn1"].shape), _full(kp["bn1"].shape),
            _full(kp["wn2"].shape), _full(kp["bn2"].shape),
        ],
        out_specs=pl.BlockSpec((1, num_actions, num_atoms), lambda b: (b, 0, 0)),
        compiler_params=pltpu.CompilerParams(
            dimension_semantics=("parallel",)),
    )(patches1, kp["w1"], kp["b1"], kp["w2"], kp["b2"], kp["w3"], kp["b3"],
      kp["wn1"], kp["bn1"], kp["wn2"], kp["bn2"])
    return out


# ---------------------------------------------------------------------------
# Pure-JAX f32 reference (independent path: lax.conv) for correctness checking.
# ---------------------------------------------------------------------------
def reference_forward(params, x, num_actions, num_atoms):
    w1, b1 = params["conv1"]
    w2, b2 = params["conv2"]
    w3, b3 = params["conv3"]
    Wn1, bn1 = params["noisy1"]
    Wn2, bn2 = params["noisy2"]
    dn = ("NCHW", "OIHW", "NCHW")
    h = x / 255.0
    h = jax.nn.relu(lax.conv_general_dilated(h, w1, (4, 4), "VALID",
                                             dimension_numbers=dn)
                    + b1[None, :, None, None])
    h = jax.nn.relu(lax.conv_general_dilated(h, w2, (2, 2), "VALID",
                                             dimension_numbers=dn)
                    + b2[None, :, None, None])
    h = jax.nn.relu(lax.conv_general_dilated(h, w3, (1, 1), "VALID",
                                             dimension_numbers=dn)
                    + b3[None, :, None, None])
    h = h.reshape(x.shape[0], -1)
    h = jax.nn.relu(h @ Wn1 + bn1)
    logits = h @ Wn2 + bn2
    p = jax.nn.softmax(logits.reshape(-1, num_atoms), axis=-1)
    return p.reshape(-1, num_actions, num_atoms)


# TODO(synk): reset_noise() / act() are host-side policy utilities (noise
# resampling and argmax over the value projection); not part of the forward
# hot path, so they are not implemented as kernels.


if __name__ == "__main__":
    # Smallest spatial size the conv stack supports: 36x36 -> 8x8 -> 3x3 -> 1x1.
    input_shape = (4, 36, 36)   # (C, H, W)
    batch = 2
    num_actions = 6
    num_atoms = 51
    Vmin, Vmax = -10.0, 10.0    # part of the module interface; unused in forward

    key = jax.random.PRNGKey(0)
    k_params, k_x = jax.random.split(key)
    params = init_params(k_params, input_shape, num_actions, num_atoms)
    x = jax.random.uniform(k_x, (batch,) + input_shape, jnp.float32, 0.0, 255.0)

    fwd = jax.jit(functools.partial(categorical_cnn_dqn_forward,
                                    input_shape=input_shape,
                                    num_actions=num_actions,
                                    num_atoms=num_atoms))
    out = jax.block_until_ready(fwd(params, x))

    assert out.shape == (batch, num_actions, num_atoms), out.shape
    # distribution sanity: each (batch, action) row sums to 1
    assert bool(jnp.allclose(jnp.sum(out, axis=-1), 1.0, atol=1e-3))
    # numerical check vs. f32 reference (kernel matmuls are bf16 -> loose tol)
    ref = reference_forward(params, x, num_actions, num_atoms)
    assert bool(jnp.allclose(out, ref, atol=2e-2)), float(jnp.max(jnp.abs(out - ref)))
    print("KERNEL_OK")
</pallas_src>

<mosaic_0001>
module attributes {stable_mosaic.version = 11 : i64} {
  func.func @_fused_dqn_kernel(%arg0: i32, %arg1: memref<1x64x256xbf16, #tpu.memory_space<vmem>>, %arg2: memref<256x32xbf16, #tpu.memory_space<vmem>>, %arg3: memref<1x32xf32, #tpu.memory_space<vmem>>, %arg4: memref<512x64xbf16, #tpu.memory_space<vmem>>, %arg5: memref<1x64xf32, #tpu.memory_space<vmem>>, %arg6: memref<576x64xbf16, #tpu.memory_space<vmem>>, %arg7: memref<1x64xf32, #tpu.memory_space<vmem>>, %arg8: memref<64x512xbf16, #tpu.memory_space<vmem>>, %arg9: memref<1x512xf32, #tpu.memory_space<vmem>>, %arg10: memref<512x306xbf16, #tpu.memory_space<vmem>>, %arg11: memref<1x306xf32, #tpu.memory_space<vmem>>, %arg12: memref<1x6x51xf32, #tpu.memory_space<vmem>>) attributes {dimension_semantics = [#tpu.dimension_semantics<parallel>], iteration_bounds = array<i64: 2>, scalar_prefetch = 0 : i64, scratch_operands = 0 : i64, tpu.core_type = #tpu.core_type<tc>, window_params = [{transform_indices = @transform_0, window_bounds = array<i64: 1, 64, 256>}, {pipeline_mode = #tpu.pipeline_mode<synchronous>, transform_indices = @transform_1, window_bounds = array<i64: 256, 32>}, {pipeline_mode = #tpu.pipeline_mode<synchronous>, transform_indices = @transform_2, window_bounds = array<i64: 1, 32>}, {pipeline_mode = #tpu.pipeline_mode<synchronous>, transform_indices = @transform_3, window_bounds = array<i64: 512, 64>}, {pipeline_mode = #tpu.pipeline_mode<synchronous>, transform_indices = @transform_4, window_bounds = array<i64: 1, 64>}, {pipeline_mode = #tpu.pipeline_mode<synchronous>, transform_indices = @transform_5, window_bounds = array<i64: 576, 64>}, {pipeline_mode = #tpu.pipeline_mode<synchronous>, transform_indices = @transform_6, window_bounds = array<i64: 1, 64>}, {pipeline_mode = #tpu.pipeline_mode<synchronous>, transform_indices = @transform_7, window_bounds = array<i64: 64, 512>}, {pipeline_mode = #tpu.pipeline_mode<synchronous>, transform_indices = @transform_8, window_bounds = array<i64: 1, 512>}, {pipeline_mode = #tpu.pipeline_mode<synchronous>, transform_indices = @transform_9, window_bounds = array<i64: 512, 306>}, {pipeline_mode = #tpu.pipeline_mode<synchronous>, transform_indices = @transform_10, window_bounds = array<i64: 1, 306>}, {transform_indices = @transform_11, window_bounds = array<i64: 1, 6, 51>}]} {
    %c0 = arith.constant 0 : index
    %c0_0 = arith.constant 0 : index
    %c0_1 = arith.constant 0 : index
    %0 = vector.load %arg1[%c0, %c0_0, %c0_1] : memref<1x64x256xbf16, #tpu.memory_space<vmem>>, vector<1x64x256xbf16>
    %1 = vector.shape_cast %0 : vector<1x64x256xbf16> to vector<64x256xbf16>
    %c0_2 = arith.constant 0 : index
    %c0_3 = arith.constant 0 : index
    %2 = vector.load %arg2[%c0_2, %c0_3] : memref<256x32xbf16, #tpu.memory_space<vmem>>, vector<256x32xbf16>
    %cst = arith.constant dense<0.000000e+00> : vector<64x32xf32>
    %3 = tpu.matmul %1, %2, %cst {dimension_numbers = #tpu.dot_dimension_numbers<[1], [0], [0], [1], [0, 0, 1, 1], [], []>} : vector<64x256xbf16>, vector<256x32xbf16>, vector<64x32xf32> -> vector<64x32xf32>
    %c0_4 = arith.constant 0 : index
    %c0_5 = arith.constant 0 : index
    %4 = vector.load %arg3[%c0_4, %c0_5] : memref<1x32xf32, #tpu.memory_space<vmem>>, vector<1x32xf32>
    %5 = vector.broadcast %4 : vector<1x32xf32> to vector<64x32xf32>
    %6 = arith.addf %3, %5 : vector<64x32xf32>
    %cst_6 = arith.constant 0.000000e+00 : f32
    %7 = vector.broadcast %cst_6 : f32 to vector<64x32xf32>
    %8 = arith.maximumf %6, %7 : vector<64x32xf32>
    %9 = vector.extract_strided_slice %8 {offsets = [0, 0], sizes = [1, 32], strides = [1, 1]} : vector<64x32xf32> to vector<1x32xf32>
    %10 = vector.extract_strided_slice %8 {offsets = [1, 0], sizes = [1, 32], strides = [1, 1]} : vector<64x32xf32> to vector<1x32xf32>
    %11 = vector.extract_strided_slice %8 {offsets = [2, 0], sizes = [1, 32], strides = [1, 1]} : vector<64x32xf32> to vector<1x32xf32>
    %12 = vector.extract_strided_slice %8 {offsets = [3, 0], sizes = [1, 32], strides = [1, 1]} : vector<64x32xf32> to vector<1x32xf32>
    %13 = vector.extract_strided_slice %8 {offsets = [8, 0], sizes = [1, 32], strides = [1, 1]} : vector<64x32xf32> to vector<1x32xf32>
    %14 = vector.extract_strided_slice %8 {offsets = [9, 0], sizes = [1, 32], strides = [1, 1]} : vector<64x32xf32> to vector<1x32xf32>
    %15 = vector.extract_strided_slice %8 {offsets = [10, 0], sizes = [1, 32], strides = [1, 1]} : vector<64x32xf32> to vector<1x32xf32>
    %16 = vector.extract_strided_slice %8 {offsets = [11, 0], sizes = [1, 32], strides = [1, 1]} : vector<64x32xf32> to vector<1x32xf32>
    %17 = vector.extract_strided_slice %8 {offsets = [16, 0], sizes = [1, 32], strides = [1, 1]} : vector<64x32xf32> to vector<1x32xf32>
    %18 = vector.extract_strided_slice %8 {offsets = [17, 0], sizes = [1, 32], strides = [1, 1]} : vector<64x32xf32> to vector<1x32xf32>
    %19 = vector.extract_strided_slice %8 {offsets = [18, 0], sizes = [1, 32], strides = [1, 1]} : vector<64x32xf32> to vector<1x32xf32>
    %20 = vector.extract_strided_slice %8 {offsets = [19, 0], sizes = [1, 32], strides = [1, 1]} : vector<64x32xf32> to vector<1x32xf32>
    %21 = vector.extract_strided_slice %8 {offsets = [24, 0], sizes = [1, 32], strides = [1, 1]} : vector<64x32xf32> to vector<1x32xf32>
    %22 = vector.extract_strided_slice %8 {offsets = [25, 0], sizes = [1, 32], strides = [1, 1]} : vector<64x32xf32> to vector<1x32xf32>
    %23 = vector.extract_strided_slice %8 {offsets = [26, 0], sizes = [1, 32], strides = [1, 1]} : vector<64x32xf32> to vector<1x32xf32>
    %24 = vector.extract_strided_slice %8 {offsets = [27, 0], sizes = [1, 32], strides = [1, 1]} : vector<64x32xf32> to vector<1x32xf32>
    %25 = tpu.concatenate %9, %10, %11, %12, %13, %14, %15, %16, %17, %18, %19, %20, %21, %22, %23, %24 in 1 : vector<1x32xf32>, vector<1x32xf32>, vector<1x32xf32>, vector<1x32xf32>, vector<1x32xf32>, vector<1x32xf32>, vector<1x32xf32>, vector<1x32xf32>, vector<1x32xf32>, vector<1x32xf32>, vector<1x32xf32>, vector<1x32xf32>, vector<1x32xf32>, vector<1x32xf32>, vector<1x32xf32>, vector<1x32xf32> -> vector<1x512xf32>
    %26 = vector.extract_strided_slice %8 {offsets = [2, 0], sizes = [1, 32], strides = [1, 1]} : vector<64x32xf32> to vector<1x32xf32>
    %27 = vector.extract_strided_slice %8 {offsets = [3, 0], sizes = [1, 32], strides = [1, 1]} : vector<64x32xf32> to vector<1x32xf32>
    %28 = vector.extract_strided_slice %8 {offsets = [4, 0], sizes = [1, 32], strides = [1, 1]} : vector<64x32xf32> to vector<1x32xf32>
    %29 = vector.extract_strided_slice %8 {offsets = [5, 0], sizes = [1, 32], strides = [1, 1]} : vector<64x32xf32> to vector<1x32xf32>
    %30 = vector.extract_strided_slice %8 {offsets = [10, 0], sizes = [1, 32], strides = [1, 1]} : vector<64x32xf32> to vector<1x32xf32>
    %31 = vector.extract_strided_slice %8 {offsets = [11, 0], sizes = [1, 32], strides = [1, 1]} : vector<64x32xf32> to vector<1x32xf32>
    %32 = vector.extract_strided_slice %8 {offsets = [12, 0], sizes = [1, 32], strides = [1, 1]} : vector<64x32xf32> to vector<1x32xf32>
    %33 = vector.extract_strided_slice %8 {offsets = [13, 0], sizes = [1, 32], strides = [1, 1]} : vector<64x32xf32> to vector<1x32xf32>
    %34 = vector.extract_strided_slice %8 {offsets = [18, 0], sizes = [1, 32], strides = [1, 1]} : vector<64x32xf32> to vector<1x32xf32>
    %35 = vector.extract_strided_slice %8 {offsets = [19, 0], sizes = [1, 32], strides = [1, 1]} : vector<64x32xf32> to vector<1x32xf32>
    %36 = vector.extract_strided_slice %8 {offsets = [20, 0], sizes = [1, 32], strides = [1, 1]} : vector<64x32xf32> to vector<1x32xf32>
    %37 = vector.extract_strided_slice %8 {offsets = [21, 0], sizes = [1, 32], strides = [1, 1]} : vector<64x32xf32> to vector<1x32xf32>
    %38 = vector.extract_strided_slice %8 {offsets = [26, 0], sizes = [1, 32], strides = [1, 1]} : vector<64x32xf32> to vector<1x32xf32>
    %39 = vector.extract_strided_slice %8 {offsets = [27, 0], sizes = [1, 32], strides = [1, 1]} : vector<64x32xf32> to vector<1x32xf32>
    %40 = vector.extract_strided_slice %8 {offsets = [28, 0], sizes = [1, 32], strides = [1, 1]} : vector<64x32xf32> to vector<1x32xf32>
    %41 = vector.extract_strided_slice %8 {offsets = [29, 0], sizes = [1, 32], strides = [1, 1]} : vector<64x32xf32> to vector<1x32xf32>
    %42 = tpu.concatenate %26, %27, %28, %29, %30, %31, %32, %33, %34, %35, %36, %37, %38, %39, %40, %41 in 1 : vector<1x32xf32>, vector<1x32xf32>, vector<1x32xf32>, vector<1x32xf32>, vector<1x32xf32>, vector<1x32xf32>, vector<1x32xf32>, vector<1x32xf32>, vector<1x32xf32>, vector<1x32xf32>, vector<1x32xf32>, vector<1x32xf32>, vector<1x32xf32>, vector<1x32xf32>, vector<1x32xf32>, vector<1x32xf32> -> vector<1x512xf32>
    %43 = vector.extract_strided_slice %8 {offsets = [4, 0], sizes = [1, 32], strides = [1, 1]} : vector<64x32xf32> to vector<1x32xf32>
    %44 = vector.extract_strided_slice %8 {offsets = [5, 0], sizes = [1, 32], strides = [1, 1]} : vector<64x32xf32> to vector<1x32xf32>
    %45 = vector.extract_strided_slice %8 {offsets = [6, 0], sizes = [1, 32], strides = [1, 1]} : vector<64x32xf32> to vector<1x32xf32>
    %46 = vector.extract_strided_slice %8 {offsets = [7, 0], sizes = [1, 32], strides = [1, 1]} : vector<64x32xf32> to vector<1x32xf32>
    %47 = vector.extract_strided_slice %8 {offsets = [12, 0], sizes = [1, 32], strides = [1, 1]} : vector<64x32xf32> to vector<1x32xf32>
    %48 = vector.extract_strided_slice %8 {offsets = [13, 0], sizes = [1, 32], strides = [1, 1]} : vector<64x32xf32> to vector<1x32xf32>
    %49 = vector.extract_strided_slice %8 {offsets = [14, 0], sizes = [1, 32], strides = [1, 1]} : vector<64x32xf32> to vector<1x32xf32>
    %50 = vector.extract_strided_slice %8 {offsets = [15, 0], sizes = [1, 32], strides = [1, 1]} : vector<64x32xf32> to vector<1x32xf32>
    %51 = vector.extract_strided_slice %8 {offsets = [20, 0], sizes = [1, 32], strides = [1, 1]} : vector<64x32xf32> to vector<1x32xf32>
    %52 = vector.extract_strided_slice %8 {offsets = [21, 0], sizes = [1, 32], strides = [1, 1]} : vector<64x32xf32> to vector<1x32xf32>
    %53 = vector.extract_strided_slice %8 {offsets = [22, 0], sizes = [1, 32], strides = [1, 1]} : vector<64x32xf32> to vector<1x32xf32>
    %54 = vector.extract_strided_slice %8 {offsets = [23, 0], sizes = [1, 32], strides = [1, 1]} : vector<64x32xf32> to vector<1x32xf32>
    %55 = vector.extract_strided_slice %8 {offsets = [28, 0], sizes = [1, 32], strides = [1, 1]} : vector<64x32xf32> to vector<1x32xf32>
    %56 = vector.extract_strided_slice %8 {offsets = [29, 0], sizes = [1, 32], strides = [1, 1]} : vector<64x32xf32> to vector<1x32xf32>
    %57 = vector.extract_strided_slice %8 {offsets = [30, 0], sizes = [1, 32], strides = [1, 1]} : vector<64x32xf32> to vector<1x32xf32>
    %58 = vector.extract_strided_slice %8 {offsets = [31, 0], sizes = [1, 32], strides = [1, 1]} : vector<64x32xf32> to vector<1x32xf32>
    %59 = tpu.concatenate %43, %44, %45, %46, %47, %48, %49, %50, %51, %52, %53, %54, %55, %56, %57, %58 in 1 : vector<1x32xf32>, vector<1x32xf32>, vector<1x32xf32>, vector<1x32xf32>, vector<1x32xf32>, vector<1x32xf32>, vector<1x32xf32>, vector<1x32xf32>, vector<1x32xf32>, vector<1x32xf32>, vector<1x32xf32>, vector<1x32xf32>, vector<1x32xf32>, vector<1x32xf32>, vector<1x32xf32>, vector<1x32xf32> -> vector<1x512xf32>
    %60 = vector.extract_strided_slice %8 {offsets = [16, 0], sizes = [1, 32], strides = [1, 1]} : vector<64x32xf32> to vector<1x32xf32>
    %61 = vector.extract_strided_slice %8 {offsets = [17, 0], sizes = [1, 32], strides = [1, 1]} : vector<64x32xf32> to vector<1x32xf32>
    %62 = vector.extract_strided_slice %8 {offsets = [18, 0], sizes = [1, 32], strides = [1, 1]} : vector<64x32xf32> to vector<1x32xf32>
    %63 = vector.extract_strided_slice %8 {offsets = [19, 0], sizes = [1, 32], strides = [1, 1]} : vector<64x32xf32> to vector<1x32xf32>
    %64 = vector.extract_strided_slice %8 {offsets = [24, 0], sizes = [1, 32], strides = [1, 1]} : vector<64x32xf32> to vector<1x32xf32>
    %65 = vector.extract_strided_slice %8 {offsets = [25, 0], sizes = [1, 32], strides = [1, 1]} : vector<64x32xf32> to vector<1x32xf32>
    %66 = vector.extract_strided_slice %8 {offsets = [26, 0], sizes = [1, 32], strides = [1, 1]} : vector<64x32xf32> to vector<1x32xf32>
    %67 = vector.extract_strided_slice %8 {offsets = [27, 0], sizes = [1, 32], strides = [1, 1]} : vector<64x32xf32> to vector<1x32xf32>
    %68 = vector.extract_strided_slice %8 {offsets = [32, 0], sizes = [1, 32], strides = [1, 1]} : vector<64x32xf32> to vector<1x32xf32>
    %69 = vector.extract_strided_slice %8 {offsets = [33, 0], sizes = [1, 32], strides = [1, 1]} : vector<64x32xf32> to vector<1x32xf32>
    %70 = vector.extract_strided_slice %8 {offsets = [34, 0], sizes = [1, 32], strides = [1, 1]} : vector<64x32xf32> to vector<1x32xf32>
    %71 = vector.extract_strided_slice %8 {offsets = [35, 0], sizes = [1, 32], strides = [1, 1]} : vector<64x32xf32> to vector<1x32xf32>
    %72 = vector.extract_strided_slice %8 {offsets = [40, 0], sizes = [1, 32], strides = [1, 1]} : vector<64x32xf32> to vector<1x32xf32>
    %73 = vector.extract_strided_slice %8 {offsets = [41, 0], sizes = [1, 32], strides = [1, 1]} : vector<64x32xf32> to vector<1x32xf32>
    %74 = vector.extract_strided_slice %8 {offsets = [42, 0], sizes = [1, 32], strides = [1, 1]} : vector<64x32xf32> to vector<1x32xf32>
    %75 = vector.extract_strided_slice %8 {offsets = [43, 0], sizes = [1, 32], strides = [1, 1]} : vector<64x32xf32> to vector<1x32xf32>
    %76 = tpu.concatenate %60, %61, %62, %63, %64, %65, %66, %67, %68, %69, %70, %71, %72, %73, %74, %75 in 1 : vector<1x32xf32>, vector<1x32xf32>, vector<1x32xf32>, vector<1x32xf32>, vector<1x32xf32>, vector<1x32xf32>, vector<1x32xf32>, vector<1x32xf32>, vector<1x32xf32>, vector<1x32xf32>, vector<1x32xf32>, vector<1x32xf32>, vector<1x32xf32>, vector<1x32xf32>, vector<1x32xf32>, vector<1x32xf32> -> vector<1x512xf32>
    %77 = vector.extract_strided_slice %8 {offsets = [18, 0], sizes = [1, 32], strides = [1, 1]} : vector<64x32xf32> to vector<1x32xf32>
    %78 = vector.extract_strided_slice %8 {offsets = [19, 0], sizes = [1, 32], strides = [1, 1]} : vector<64x32xf32> to vector<1x32xf32>
    %79 = vector.extract_strided_slice %8 {offsets = [20, 0], sizes = [1, 32], strides = [1, 1]} : vector<64x32xf32> to vector<1x32xf32>
    %80 = vector.extract_strided_slice %8 {offsets = [21, 0], sizes = [1, 32], strides = [1, 1]} : vector<64x32xf32> to vector<1x32xf32>
    %81 = vector.extract_strided_slice %8 {offsets = [26, 0], sizes = [1, 32], strides = [1, 1]} : vector<64x32xf32> to vector<1x32xf32>
    %82 = vector.extract_strided_slice %8 {offsets = [27, 0], sizes = [1, 32], strides = [1, 1]} : vector<64x32xf32> to vector<1x32xf32>
    %83 = vector.extract_strided_slice %8 {offsets = [28, 0], sizes = [1, 32], strides = [1, 1]} : vector<64x32xf32> to vector<1x32xf32>
    %84 = vector.extract_strided_slice %8 {offsets = [29, 0], sizes = [1, 32], strides = [1, 1]} : vector<64x32xf32> to vector<1x32xf32>
    %85 = vector.extract_strided_slice %8 {offsets = [34, 0], sizes = [1, 32], strides = [1, 1]} : vector<64x32xf32> to vector<1x32xf32>
    %86 = vector.extract_strided_slice %8 {offsets = [35, 0], sizes = [1, 32], strides = [1, 1]} : vector<64x32xf32> to vector<1x32xf32>
    %87 = vector.extract_strided_slice %8 {offsets = [36, 0], sizes = [1, 32], strides = [1, 1]} : vector<64x32xf32> to vector<1x32xf32>
    %88 = vector.extract_strided_slice %8 {offsets = [37, 0], sizes = [1, 32], strides = [1, 1]} : vector<64x32xf32> to vector<1x32xf32>
    %89 = vector.extract_strided_slice %8 {offsets = [42, 0], sizes = [1, 32], strides = [1, 1]} : vector<64x32xf32> to vector<1x32xf32>
    %90 = vector.extract_strided_slice %8 {offsets = [43, 0], sizes = [1, 32], strides = [1, 1]} : vector<64x32xf32> to vector<1x32xf32>
    %91 = vector.extract_strided_slice %8 {offsets = [44, 0], sizes = [1, 32], strides = [1, 1]} : vector<64x32xf32> to vector<1x32xf32>
    %92 = vector.extract_strided_slice %8 {offsets = [45, 0], sizes = [1, 32], strides = [1, 1]} : vector<64x32xf32> to vector<1x32xf32>
    %93 = tpu.concatenate %77, %78, %79, %80, %81, %82, %83, %84, %85, %86, %87, %88, %89, %90, %91, %92 in 1 : vector<1x32xf32>, vector<1x32xf32>, vector<1x32xf32>, vector<1x32xf32>, vector<1x32xf32>, vector<1x32xf32>, vector<1x32xf32>, vector<1x32xf32>, vector<1x32xf32>, vector<1x32xf32>, vector<1x32xf32>, vector<1x32xf32>, vector<1x32xf32>, vector<1x32xf32>, vector<1x32xf32>, vector<1x32xf32> -> vector<1x512xf32>
    %94 = vector.extract_strided_slice %8 {offsets = [20, 0], sizes = [1, 32], strides = [1, 1]} : vector<64x32xf32> to vector<1x32xf32>
    %95 = vector.extract_strided_slice %8 {offsets = [21, 0], sizes = [1, 32], strides = [1, 1]} : vector<64x32xf32> to vector<1x32xf32>
    %96 = vector.extract_strided_slice %8 {offsets = [22, 0], sizes = [1, 32], strides = [1, 1]} : vector<64x32xf32> to vector<1x32xf32>
    %97 = vector.extract_strided_slice %8 {offsets = [23, 0], sizes = [1, 32], strides = [1, 1]} : vector<64x32xf32> to vector<1x32xf32>
    %98 = vector.extract_strided_slice %8 {offsets = [28, 0], sizes = [1, 32], strides = [1, 1]} : vector<64x32xf32> to vector<1x32xf32>
    %99 = vector.extract_strided_slice %8 {offsets = [29, 0], sizes = [1, 32], strides = [1, 1]} : vector<64x32xf32> to vector<1x32xf32>
    %100 = vector.extract_strided_slice %8 {offsets = [30, 0], sizes = [1, 32], strides = [1, 1]} : vector<64x32xf32> to vector<1x32xf32>
    %101 = vector.extract_strided_slice %8 {offsets = [31, 0], sizes = [1, 32], strides = [1, 1]} : vector<64x32xf32> to vector<1x32xf32>
    %102 = vector.extract_strided_slice %8 {offsets = [36, 0], sizes = [1, 32], strides = [1, 1]} : vector<64x32xf32> to vector<1x32xf32>
    %103 = vector.extract_strided_slice %8 {offsets = [37, 0], sizes = [1, 32], strides = [1, 1]} : vector<64x32xf32> to vector<1x32xf32>
    %104 = vector.extract_strided_slice %8 {offsets = [38, 0], sizes = [1, 32], strides = [1, 1]} : vector<64x32xf32> to vector<1x32xf32>
    %105 = vector.extract_strided_slice %8 {offsets = [39, 0], sizes = [1, 32], strides = [1, 1]} : vector<64x32xf32> to vector<1x32xf32>
    %106 = vector.extract_strided_slice %8 {offsets = [44, 0], sizes = [1, 32], strides = [1, 1]} : vector<64x32xf32> to vector<1x32xf32>
    %107 = vector.extract_strided_slice %8 {offsets = [45, 0], sizes = [1, 32], strides = [1, 1]} : vector<64x32xf32> to vector<1x32xf32>
    %108 = vector.extract_strided_slice %8 {offsets = [46, 0], sizes = [1, 32], strides = [1, 1]} : vector<64x32xf32> to vector<1x32xf32>
    %109 = vector.extract_strided_slice %8 {offsets = [47, 0], sizes = [1, 32], strides = [1, 1]} : vector<64x32xf32> to vector<1x32xf32>
    %110 = tpu.concatenate %94, %95, %96, %97, %98, %99, %100, %101, %102, %103, %104, %105, %106, %107, %108, %109 in 1 : vector<1x32xf32>, vector<1x32xf32>, vector<1x32xf32>, vector<1x32xf32>, vector<1x32xf32>, vector<1x32xf32>, vector<1x32xf32>, vector<1x32xf32>, vector<1x32xf32>, vector<1x32xf32>, vector<1x32xf32>, vector<1x32xf32>, vector<1x32xf32>, vector<1x32xf32>, vector<1x32xf32>, vector<1x32xf32> -> vector<1x512xf32>
    %111 = vector.extract_strided_slice %8 {offsets = [32, 0], sizes = [1, 32], strides = [1, 1]} : vector<64x32xf32> to vector<1x32xf32>
    %112 = vector.extract_strided_slice %8 {offsets = [33, 0], sizes = [1, 32], strides = [1, 1]} : vector<64x32xf32> to vector<1x32xf32>
    %113 = vector.extract_strided_slice %8 {offsets = [34, 0], sizes = [1, 32], strides = [1, 1]} : vector<64x32xf32> to vector<1x32xf32>
    %114 = vector.extract_strided_slice %8 {offsets = [35, 0], sizes = [1, 32], strides = [1, 1]} : vector<64x32xf32> to vector<1x32xf32>
    %115 = vector.extract_strided_slice %8 {offsets = [40, 0], sizes = [1, 32], strides = [1, 1]} : vector<64x32xf32> to vector<1x32xf32>
    %116 = vector.extract_strided_slice %8 {offsets = [41, 0], sizes = [1, 32], strides = [1, 1]} : vector<64x32xf32> to vector<1x32xf32>
    %117 = vector.extract_strided_slice %8 {offsets = [42, 0], sizes = [1, 32], strides = [1, 1]} : vector<64x32xf32> to vector<1x32xf32>
    %118 = vector.extract_strided_slice %8 {offsets = [43, 0], sizes = [1, 32], strides = [1, 1]} : vector<64x32xf32> to vector<1x32xf32>
    %119 = vector.extract_strided_slice %8 {offsets = [48, 0], sizes = [1, 32], strides = [1, 1]} : vector<64x32xf32> to vector<1x32xf32>
    %120 = vector.extract_strided_slice %8 {offsets = [49, 0], sizes = [1, 32], strides = [1, 1]} : vector<64x32xf32> to vector<1x32xf32>
    %121 = vector.extract_strided_slice %8 {offsets = [50, 0], sizes = [1, 32], strides = [1, 1]} : vector<64x32xf32> to vector<1x32xf32>
    %122 = vector.extract_strided_slice %8 {offsets = [51, 0], sizes = [1, 32], strides = [1, 1]} : vector<64x32xf32> to vector<1x32xf32>
    %123 = vector.extract_strided_slice %8 {offsets = [56, 0], sizes = [1, 32], strides = [1, 1]} : vector<64x32xf32> to vector<1x32xf32>
    %124 = vector.extract_strided_slice %8 {offsets = [57, 0], sizes = [1, 32], strides = [1, 1]} : vector<64x32xf32> to vector<1x32xf32>
    %125 = vector.extract_strided_slice %8 {offsets = [58, 0], sizes = [1, 32], strides = [1, 1]} : vector<64x32xf32> to vector<1x32xf32>
    %126 = vector.extract_strided_slice %8 {offsets = [59, 0], sizes = [1, 32], strides = [1, 1]} : vector<64x32xf32> to vector<1x32xf32>
    %127 = tpu.concatenate %111, %112, %113, %114, %115, %116, %117, %118, %119, %120, %121, %122, %123, %124, %125, %126 in 1 : vector<1x32xf32>, vector<1x32xf32>, vector<1x32xf32>, vector<1x32xf32>, vector<1x32xf32>, vector<1x32xf32>, vector<1x32xf32>, vector<1x32xf32>, vector<1x32xf32>, vector<1x32xf32>, vector<1x32xf32>, vector<1x32xf32>, vector<1x32xf32>, vector<1x32xf32>, vector<1x32xf32>, vector<1x32xf32> -> vector<1x512xf32>
    %128 = vector.extract_strided_slice %8 {offsets = [34, 0], sizes = [1, 32], strides = [1, 1]} : vector<64x32xf32> to vector<1x32xf32>
    %129 = vector.extract_strided_slice %8 {offsets = [35, 0], sizes = [1, 32], strides = [1, 1]} : vector<64x32xf32> to vector<1x32xf32>
    %130 = vector.extract_strided_slice %8 {offsets = [36, 0], sizes = [1, 32], strides = [1, 1]} : vector<64x32xf32> to vector<1x32xf32>
    %131 = vector.extract_strided_slice %8 {offsets = [37, 0], sizes = [1, 32], strides = [1, 1]} : vector<64x32xf32> to vector<1x32xf32>
    %132 = vector.extract_strided_slice %8 {offsets = [42, 0], sizes = [1, 32], strides = [1, 1]} : vector<64x32xf32> to vector<1x32xf32>
    %133 = vector.extract_strided_slice %8 {offsets = [43, 0], sizes = [1, 32], strides = [1, 1]} : vector<64x32xf32> to vector<1x32xf32>
    %134 = vector.extract_strided_slice %8 {offsets = [44, 0], sizes = [1, 32], strides = [1, 1]} : vector<64x32xf32> to vector<1x32xf32>
    %135 = vector.extract_strided_slice %8 {offsets = [45, 0], sizes = [1, 32], strides = [1, 1]} : vector<64x32xf32> to vector<1x32xf32>
    %136 = vector.extract_strided_slice %8 {offsets = [50, 0], sizes = [1, 32], strides = [1, 1]} : vector<64x32xf32> to vector<1x32xf32>
    %137 = vector.extract_strided_slice %8 {offsets = [51, 0], sizes = [1, 32], strides = [1, 1]} : vector<64x32xf32> to vector<1x32xf32>
    %138 = vector.extract_strided_slice %8 {offsets = [52, 0], sizes = [1, 32], strides = [1, 1]} : vector<64x32xf32> to vector<1x32xf32>
    %139 = vector.extract_strided_slice %8 {offsets = [53, 0], sizes = [1, 32], strides = [1, 1]} : vector<64x32xf32> to vector<1x32xf32>
    %140 = vector.extract_strided_slice %8 {offsets = [58, 0], sizes = [1, 32], strides = [1, 1]} : vector<64x32xf32> to vector<1x32xf32>
    %141 = vector.extract_strided_slice %8 {offsets = [59, 0], sizes = [1, 32], strides = [1, 1]} : vector<64x32xf32> to vector<1x32xf32>
    %142 = vector.extract_strided_slice %8 {offsets = [60, 0], sizes = [1, 32], strides = [1, 1]} : vector<64x32xf32> to vector<1x32xf32>
    %143 = vector.extract_strided_slice %8 {offsets = [61, 0], sizes = [1, 32], strides = [1, 1]} : vector<64x32xf32> to vector<1x32xf32>
    %144 = tpu.concatenate %128, %129, %130, %131, %132, %133, %134, %135, %136, %137, %138, %139, %140, %141, %142, %143 in 1 : vector<1x32xf32>, vector<1x32xf32>, vector<1x32xf32>, vector<1x32xf32>, vector<1x32xf32>, vector<1x32xf32>, vector<1x32xf32>, vector<1x32xf32>, vector<1x32xf32>, vector<1x32xf32>, vector<1x32xf32>, vector<1x32xf32>, vector<1x32xf32>, vector<1x32xf32>, vector<1x32xf32>, vector<1x32xf32> -> vector<1x512xf32>
    %145 = vector.extract_strided_slice %8 {offsets = [36, 0], sizes = [1, 32], strides = [1, 1]} : vector<64x32xf32> to vector<1x32xf32>
    %146 = vector.extract_strided_slice %8 {offsets = [37, 0], sizes = [1, 32], strides = [1, 1]} : vector<64x32xf32> to vector<1x32xf32>
    %147 = vector.extract_strided_slice %8 {offsets = [38, 0], sizes = [1, 32], strides = [1, 1]} : vector<64x32xf32> to vector<1x32xf32>
    %148 = vector.extract_strided_slice %8 {offsets = [39, 0], sizes = [1, 32], strides = [1, 1]} : vector<64x32xf32> to vector<1x32xf32>
    %149 = vector.extract_strided_slice %8 {offsets = [44, 0], sizes = [1, 32], strides = [1, 1]} : vector<64x32xf32> to vector<1x32xf32>
    %150 = vector.extract_strided_slice %8 {offsets = [45, 0], sizes = [1, 32], strides = [1, 1]} : vector<64x32xf32> to vector<1x32xf32>
    %151 = vector.extract_strided_slice %8 {offsets = [46, 0], sizes = [1, 32], strides = [1, 1]} : vector<64x32xf32> to vector<1x32xf32>
    %152 = vector.extract_strided_slice %8 {offsets = [47, 0], sizes = [1, 32], strides = [1, 1]} : vector<64x32xf32> to vector<1x32xf32>
    %153 = vector.extract_strided_slice %8 {offsets = [52, 0], sizes = [1, 32], strides = [1, 1]} : vector<64x32xf32> to vector<1x32xf32>
    %154 = vector.extract_strided_slice %8 {offsets = [53, 0], sizes = [1, 32], strides = [1, 1]} : vector<64x32xf32> to vector<1x32xf32>
    %155 = vector.extract_strided_slice %8 {offsets = [54, 0], sizes = [1, 32], strides = [1, 1]} : vector<64x32xf32> to vector<1x32xf32>
    %156 = vector.extract_strided_slice %8 {offsets = [55, 0], sizes = [1, 32], strides = [1, 1]} : vector<64x32xf32> to vector<1x32xf32>
    %157 = vector.extract_strided_slice %8 {offsets = [60, 0], sizes = [1, 32], strides = [1, 1]} : vector<64x32xf32> to vector<1x32xf32>
    %158 = vector.extract_strided_slice %8 {offsets = [61, 0], sizes = [1, 32], strides = [1, 1]} : vector<64x32xf32> to vector<1x32xf32>
    %159 = vector.extract_strided_slice %8 {offsets = [62, 0], sizes = [1, 32], strides = [1, 1]} : vector<64x32xf32> to vector<1x32xf32>
    %160 = vector.extract_strided_slice %8 {offsets = [63, 0], sizes = [1, 32], strides = [1, 1]} : vector<64x32xf32> to vector<1x32xf32>
    %161 = tpu.concatenate %145, %146, %147, %148, %149, %150, %151, %152, %153, %154, %155, %156, %157, %158, %159, %160 in 1 : vector<1x32xf32>, vector<1x32xf32>, vector<1x32xf32>, vector<1x32xf32>, vector<1x32xf32>, vector<1x32xf32>, vector<1x32xf32>, vector<1x32xf32>, vector<1x32xf32>, vector<1x32xf32>, vector<1x32xf32>, vector<1x32xf32>, vector<1x32xf32>, vector<1x32xf32>, vector<1x32xf32>, vector<1x32xf32> -> vector<1x512xf32>
    %162 = tpu.concatenate %25, %42, %59, %76, %93, %110, %127, %144, %161 in 0 : vector<1x512xf32>, vector<1x512xf32>, vector<1x512xf32>, vector<1x512xf32>, vector<1x512xf32>, vector<1x512xf32>, vector<1x512xf32>, vector<1x512xf32>, vector<1x512xf32> -> vector<9x512xf32>
    %163 = arith.truncf %162 : vector<9x512xf32> to vector<9x512xbf16>
    %c0_7 = arith.constant 0 : index
    %c0_8 = arith.constant 0 : index
    %164 = vector.load %arg4[%c0_7, %c0_8] : memref<512x64xbf16, #tpu.memory_space<vmem>>, vector<512x64xbf16>
    %cst_9 = arith.constant dense<0.000000e+00> : vector<9x64xf32>
    %165 = tpu.matmul %163, %164, %cst_9 {dimension_numbers = #tpu.dot_dimension_numbers<[1], [0], [0], [1], [0, 0, 1, 1], [], []>} : vector<9x512xbf16>, vector<512x64xbf16>, vector<9x64xf32> -> vector<9x64xf32>
    %c0_10 = arith.constant 0 : index
    %c0_11 = arith.constant 0 : index
    %166 = vector.load %arg5[%c0_10, %c0_11] : memref<1x64xf32, #tpu.memory_space<vmem>>, vector<1x64xf32>
    %167 = vector.broadcast %166 : vector<1x64xf32> to vector<9x64xf32>
    %168 = arith.addf %165, %167 : vector<9x64xf32>
    %cst_12 = arith.constant 0.000000e+00 : f32
    %169 = vector.broadcast %cst_12 : f32 to vector<9x64xf32>
    %170 = arith.maximumf %168, %169 : vector<9x64xf32>
    %171 = vector.extract_strided_slice %170 {offsets = [0, 0], sizes = [1, 64], strides = [1, 1]} : vector<9x64xf32> to vector<1x64xf32>
    %172 = vector.extract_strided_slice %170 {offsets = [1, 0], sizes = [1, 64], strides = [1, 1]} : vector<9x64xf32> to vector<1x64xf32>
    %173 = vector.extract_strided_slice %170 {offsets = [2, 0], sizes = [1, 64], strides = [1, 1]} : vector<9x64xf32> to vector<1x64xf32>
    %174 = vector.extract_strided_slice %170 {offsets = [3, 0], sizes = [1, 64], strides = [1, 1]} : vector<9x64xf32> to vector<1x64xf32>
    %175 = vector.extract_strided_slice %170 {offsets = [4, 0], sizes = [1, 64], strides = [1, 1]} : vector<9x64xf32> to vector<1x64xf32>
    %176 = vector.extract_strided_slice %170 {offsets = [5, 0], sizes = [1, 64], strides = [1, 1]} : vector<9x64xf32> to vector<1x64xf32>
    %177 = vector.extract_strided_slice %170 {offsets = [6, 0], sizes = [1, 64], strides = [1, 1]} : vector<9x64xf32> to vector<1x64xf32>
    %178 = vector.extract_strided_slice %170 {offsets = [7, 0], sizes = [1, 64], strides = [1, 1]} : vector<9x64xf32> to vector<1x64xf32>
    %179 = vector.extract_strided_slice %170 {offsets = [8, 0], sizes = [1, 64], strides = [1, 1]} : vector<9x64xf32> to vector<1x64xf32>
    %180 = tpu.concatenate %171, %172, %173, %174, %175, %176, %177, %178, %179 in 1 : vector<1x64xf32>, vector<1x64xf32>, vector<1x64xf32>, vector<1x64xf32>, vector<1x64xf32>, vector<1x64xf32>, vector<1x64xf32>, vector<1x64xf32>, vector<1x64xf32> -> vector<1x576xf32>
    %181 = arith.truncf %180 : vector<1x576xf32> to vector<1x576xbf16>
    %c0_13 = arith.constant 0 : index
    %c0_14 = arith.constant 0 : index
    %182 = vector.load %arg6[%c0_13, %c0_14] : memref<576x64xbf16, #tpu.memory_space<vmem>>, vector<576x64xbf16>
    %cst_15 = arith.constant dense<0.000000e+00> : vector<1x64xf32>
    %183 = tpu.matmul %181, %182, %cst_15 {dimension_numbers = #tpu.dot_dimension_numbers<[1], [0], [0], [1], [0, 0, 1, 1], [], []>} : vector<1x576xbf16>, vector<576x64xbf16>, vector<1x64xf32> -> vector<1x64xf32>
    %c0_16 = arith.constant 0 : index
    %c0_17 = arith.constant 0 : index
    %184 = vector.load %arg7[%c0_16, %c0_17] : memref<1x64xf32, #tpu.memory_space<vmem>>, vector<1x64xf32>
    %185 = arith.addf %183, %184 : vector<1x64xf32>
    %cst_18 = arith.constant 0.000000e+00 : f32
    %186 = vector.broadcast %cst_18 : f32 to vector<1x64xf32>
    %187 = arith.maximumf %185, %186 : vector<1x64xf32>
    %188 = arith.truncf %187 : vector<1x64xf32> to vector<1x64xbf16>
    %c0_19 = arith.constant 0 : index
    %c0_20 = arith.constant 0 : index
    %189 = vector.load %arg8[%c0_19, %c0_20] : memref<64x512xbf16, #tpu.memory_space<vmem>>, vector<64x512xbf16>
    %cst_21 = arith.constant dense<0.000000e+00> : vector<1x512xf32>
    %190 = tpu.matmul %188, %189, %cst_21 {dimension_numbers = #tpu.dot_dimension_numbers<[1], [0], [0], [1], [0, 0, 1, 1], [], []>} : vector<1x64xbf16>, vector<64x512xbf16>, vector<1x512xf32> -> vector<1x512xf32>
    %c0_22 = arith.constant 0 : index
    %c0_23 = arith.constant 0 : index
    %191 = vector.load %arg9[%c0_22, %c0_23] : memref<1x512xf32, #tpu.memory_space<vmem>>, vector<1x512xf32>
    %192 = arith.addf %190, %191 : vector<1x512xf32>
    %cst_24 = arith.constant 0.000000e+00 : f32
    %193 = vector.broadcast %cst_24 : f32 to vector<1x512xf32>
    %194 = arith.maximumf %192, %193 : vector<1x512xf32>
    %195 = arith.truncf %194 : vector<1x512xf32> to vector<1x512xbf16>
    %c0_25 = arith.constant 0 : index
    %c0_26 = arith.constant 0 : index
    %196 = vector.load %arg10[%c0_25, %c0_26] : memref<512x306xbf16, #tpu.memory_space<vmem>>, vector<512x306xbf16>
    %cst_27 = arith.constant dense<0.000000e+00> : vector<1x306xf32>
    %197 = tpu.matmul %195, %196, %cst_27 {dimension_numbers = #tpu.dot_dimension_numbers<[1], [0], [0], [1], [0, 0, 1, 1], [], []>} : vector<1x512xbf16>, vector<512x306xbf16>, vector<1x306xf32> -> vector<1x306xf32>
    %c0_28 = arith.constant 0 : index
    %c0_29 = arith.constant 0 : index
    %198 = vector.load %arg11[%c0_28, %c0_29] : memref<1x306xf32, #tpu.memory_space<vmem>>, vector<1x306xf32>
    %199 = arith.addf %197, %198 : vector<1x306xf32>
    %200 = vector.extract_strided_slice %199 {offsets = [0, 0], sizes = [1, 51], strides = [1, 1]} : vector<1x306xf32> to vector<1x51xf32>
    %cst_30 = arith.constant dense<0xFF800000> : vector<1xf32>
    %201 = vector.multi_reduction <maximumf>, %200, %cst_30 [1] : vector<1x51xf32> to vector<1xf32>
    %202 = vector.shape_cast %201 : vector<1xf32> to vector<1x1xf32>
    %203 = vector.broadcast %202 : vector<1x1xf32> to vector<1x51xf32>
    %204 = arith.subf %200, %203 : vector<1x51xf32>
    %205 = math.exp %204 : vector<1x51xf32>
    %cst_31 = arith.constant dense<0.000000e+00> : vector<1xf32>
    %206 = vector.multi_reduction <add>, %205, %cst_31 [1] : vector<1x51xf32> to vector<1xf32>
    %207 = vector.shape_cast %206 : vector<1xf32> to vector<1x1xf32>
    %208 = vector.broadcast %207 : vector<1x1xf32> to vector<1x51xf32>
    %209 = arith.divf %205, %208 : vector<1x51xf32>
    %210 = vector.extract_strided_slice %199 {offsets = [0, 51], sizes = [1, 51], strides = [1, 1]} : vector<1x306xf32> to vector<1x51xf32>
    %cst_32 = arith.constant dense<0xFF800000> : vector<1xf32>
    %211 = vector.multi_reduction <maximumf>, %210, %cst_32 [1] : vector<1x51xf32> to vector<1xf32>
    %212 = vector.shape_cast %211 : vector<1xf32> to vector<1x1xf32>
    %213 = vector.broadcast %212 : vector<1x1xf32> to vector<1x51xf32>
    %214 = arith.subf %210, %213 : vector<1x51xf32>
    %215 = math.exp %214 : vector<1x51xf32>
    %cst_33 = arith.constant dense<0.000000e+00> : vector<1xf32>
    %216 = vector.multi_reduction <add>, %215, %cst_33 [1] : vector<1x51xf32> to vector<1xf32>
    %217 = vector.shape_cast %216 : vector<1xf32> to vector<1x1xf32>
    %218 = vector.broadcast %217 : vector<1x1xf32> to vector<1x51xf32>
    %219 = arith.divf %215, %218 : vector<1x51xf32>
    %220 = vector.extract_strided_slice %199 {offsets = [0, 102], sizes = [1, 51], strides = [1, 1]} : vector<1x306xf32> to vector<1x51xf32>
    %cst_34 = arith.constant dense<0xFF800000> : vector<1xf32>
    %221 = vector.multi_reduction <maximumf>, %220, %cst_34 [1] : vector<1x51xf32> to vector<1xf32>
    %222 = vector.shape_cast %221 : vector<1xf32> to vector<1x1xf32>
    %223 = vector.broadcast %222 : vector<1x1xf32> to vector<1x51xf32>
    %224 = arith.subf %220, %223 : vector<1x51xf32>
    %225 = math.exp %224 : vector<1x51xf32>
    %cst_35 = arith.constant dense<0.000000e+00> : vector<1xf32>
    %226 = vector.multi_reduction <add>, %225, %cst_35 [1] : vector<1x51xf32> to vector<1xf32>
    %227 = vector.shape_cast %226 : vector<1xf32> to vector<1x1xf32>
    %228 = vector.broadcast %227 : vector<1x1xf32> to vector<1x51xf32>
    %229 = arith.divf %225, %228 : vector<1x51xf32>
    %230 = vector.extract_strided_slice %199 {offsets = [0, 153], sizes = [1, 51], strides = [1, 1]} : vector<1x306xf32> to vector<1x51xf32>
    %cst_36 = arith.constant dense<0xFF800000> : vector<1xf32>
    %231 = vector.multi_reduction <maximumf>, %230, %cst_36 [1] : vector<1x51xf32> to vector<1xf32>
    %232 = vector.shape_cast %231 : vector<1xf32> to vector<1x1xf32>
    %233 = vector.broadcast %232 : vector<1x1xf32> to vector<1x51xf32>
    %234 = arith.subf %230, %233 : vector<1x51xf32>
    %235 = math.exp %234 : vector<1x51xf32>
    %cst_37 = arith.constant dense<0.000000e+00> : vector<1xf32>
    %236 = vector.multi_reduction <add>, %235, %cst_37 [1] : vector<1x51xf32> to vector<1xf32>
    %237 = vector.shape_cast %236 : vector<1xf32> to vector<1x1xf32>
    %238 = vector.broadcast %237 : vector<1x1xf32> to vector<1x51xf32>
    %239 = arith.divf %235, %238 : vector<1x51xf32>
    %240 = vector.extract_strided_slice %199 {offsets = [0, 204], sizes = [1, 51], strides = [1, 1]} : vector<1x306xf32> to vector<1x51xf32>
    %cst_38 = arith.constant dense<0xFF800000> : vector<1xf32>
    %241 = vector.multi_reduction <maximumf>, %240, %cst_38 [1] : vector<1x51xf32> to vector<1xf32>
    %242 = vector.shape_cast %241 : vector<1xf32> to vector<1x1xf32>
    %243 = vector.broadcast %242 : vector<1x1xf32> to vector<1x51xf32>
    %244 = arith.subf %240, %243 : vector<1x51xf32>
    %245 = math.exp %244 : vector<1x51xf32>
    %cst_39 = arith.constant dense<0.000000e+00> : vector<1xf32>
    %246 = vector.multi_reduction <add>, %245, %cst_39 [1] : vector<1x51xf32> to vector<1xf32>
    %247 = vector.shape_cast %246 : vector<1xf32> to vector<1x1xf32>
    %248 = vector.broadcast %247 : vector<1x1xf32> to vector<1x51xf32>
    %249 = arith.divf %245, %248 : vector<1x51xf32>
    %250 = vector.extract_strided_slice %199 {offsets = [0, 255], sizes = [1, 51], strides = [1, 1]} : vector<1x306xf32> to vector<1x51xf32>
    %cst_40 = arith.constant dense<0xFF800000> : vector<1xf32>
    %251 = vector.multi_reduction <maximumf>, %250, %cst_40 [1] : vector<1x51xf32> to vector<1xf32>
    %252 = vector.shape_cast %251 : vector<1xf32> to vector<1x1xf32>
    %253 = vector.broadcast %252 : vector<1x1xf32> to vector<1x51xf32>
    %254 = arith.subf %250, %253 : vector<1x51xf32>
    %255 = math.exp %254 : vector<1x51xf32>
    %cst_41 = arith.constant dense<0.000000e+00> : vector<1xf32>
    %256 = vector.multi_reduction <add>, %255, %cst_41 [1] : vector<1x51xf32> to vector<1xf32>
    %257 = vector.shape_cast %256 : vector<1xf32> to vector<1x1xf32>
    %258 = vector.broadcast %257 : vector<1x1xf32> to vector<1x51xf32>
    %259 = arith.divf %255, %258 : vector<1x51xf32>
    %260 = tpu.concatenate %209, %219, %229, %239, %249, %259 in 0 : vector<1x51xf32>, vector<1x51xf32>, vector<1x51xf32>, vector<1x51xf32>, vector<1x51xf32>, vector<1x51xf32> -> vector<6x51xf32>
    %c0_42 = arith.constant 0 : index
    %c0_43 = arith.constant 0 : index
    %c0_44 = arith.constant 0 : index
    %261 = vector.load %arg12[%c0_42, %c0_43, %c0_44] : memref<1x6x51xf32, #tpu.memory_space<vmem>>, vector<1x6x51xf32>
    %262 = vector.shape_cast %261 : vector<1x6x51xf32> to vector<6x51xf32>
    %263 = vector.shape_cast %260 : vector<6x51xf32> to vector<1x6x51xf32>
    tpu.vector_store %arg12[%c0_42, %c0_43, %c0_44], %263 {strides = array<i32>} : memref<1x6x51xf32, #tpu.memory_space<vmem>>, vector<1x6x51xf32>,
    return
  }
  func.func @transform_0(%arg0: i32) -> (i32, i32, i32) {
    %c0_i32 = arith.constant 0 : i32
    %c0_i32_0 = arith.constant 0 : i32
    %c0_i32_1 = arith.constant 0 : i32
    return %arg0, %c0_i32, %c0_i32_0 : i32, i32, i32
  }
  func.func @transform_1(%arg0: i32) -> (i32, i32) {
    %c0_i32 = arith.constant 0 : i32
    %c0_i32_0 = arith.constant 0 : i32
    %c0_i32_1 = arith.constant 0 : i32
    return %c0_i32, %c0_i32_0 : i32, i32
  }
  func.func @transform_2(%arg0: i32) -> (i32, i32) {
    %c0_i32 = arith.constant 0 : i32
    %c0_i32_0 = arith.constant 0 : i32
    %c0_i32_1 = arith.constant 0 : i32
    return %c0_i32, %c0_i32_0 : i32, i32
  }
  func.func @transform_3(%arg0: i32) -> (i32, i32) {
    %c0_i32 = arith.constant 0 : i32
    %c0_i32_0 = arith.constant 0 : i32
    %c0_i32_1 = arith.constant 0 : i32
    return %c0_i32, %c0_i32_0 : i32, i32
  }
  func.func @transform_4(%arg0: i32) -> (i32, i32) {
    %c0_i32 = arith.constant 0 : i32
    %c0_i32_0 = arith.constant 0 : i32
    %c0_i32_1 = arith.constant 0 : i32
    return %c0_i32, %c0_i32_0 : i32, i32
  }
  func.func @transform_5(%arg0: i32) -> (i32, i32) {
    %c0_i32 = arith.constant 0 : i32
    %c0_i32_0 = arith.constant 0 : i32
    %c0_i32_1 = arith.constant 0 : i32
    return %c0_i32, %c0_i32_0 : i32, i32
  }
  func.func @transform_6(%arg0: i32) -> (i32, i32) {
    %c0_i32 = arith.constant 0 : i32
    %c0_i32_0 = arith.constant 0 : i32
    %c0_i32_1 = arith.constant 0 : i32
    return %c0_i32, %c0_i32_0 : i32, i32
  }
  func.func @transform_7(%arg0: i32) -> (i32, i32) {
    %c0_i32 = arith.constant 0 : i32
    %c0_i32_0 = arith.constant 0 : i32
    %c0_i32_1 = arith.constant 0 : i32
    return %c0_i32, %c0_i32_0 : i32, i32
  }
  func.func @transform_8(%arg0: i32) -> (i32, i32) {
    %c0_i32 = arith.constant 0 : i32
    %c0_i32_0 = arith.constant 0 : i32
    %c0_i32_1 = arith.constant 0 : i32
    return %c0_i32, %c0_i32_0 : i32, i32
  }
  func.func @transform_9(%arg0: i32) -> (i32, i32) {
    %c0_i32 = arith.constant 0 : i32
    %c0_i32_0 = arith.constant 0 : i32
    %c0_i32_1 = arith.constant 0 : i32
    return %c0_i32, %c0_i32_0 : i32, i32
  }
  func.func @transform_10(%arg0: i32) -> (i32, i32) {
    %c0_i32 = arith.constant 0 : i32
    %c0_i32_0 = arith.constant 0 : i32
    %c0_i32_1 = arith.constant 0 : i32
    return %c0_i32, %c0_i32_0 : i32, i32
  }
  func.func @transform_11(%arg0: i32) -> (i32, i32, i32) {
    %c0_i32 = arith.constant 0 : i32
    %c0_i32_0 = arith.constant 0 : i32
    %c0_i32_1 = arith.constant 0 : i32
    return %arg0, %c0_i32, %c0_i32_0 : i32, i32, i32
  }
}

</mosaic_0001>

<llo_original>
// kernel: categorical_cnn_dqn_forward.1
$region0: #{categorical_cnn_dqn_forward.1}
  #allocation0 [shape = 'u32[]', space=smem, size = 0x4, offset = 0x4, fixed_abs, tag = 'smem constant byte address 0x4 - core index']
  #allocation1 [shape = 'u32[144,128]{1,0:T(1,128)}', space=vmem, size = 0x12000, scoped, tag = 'internal scratch']
  %s0 = inlined_call_operand.vmem [shape: bf16[2,64,256], index: 0, kind: input, shape index: {}]
  %s1 = inlined_call_operand.vmem [shape: bf16[256,32], index: 1, kind: input, shape index: {}]
  %s2 = inlined_call_operand.vmem [shape: f32[1,32], index: 2, kind: input, shape index: {}]
  %s3 = inlined_call_operand.vmem [shape: bf16[512,64], index: 3, kind: input, shape index: {}]
  %s4 = inlined_call_operand.vmem [shape: f32[1,64], index: 4, kind: input, shape index: {}]
  %s5 = inlined_call_operand.vmem [shape: bf16[576,64], index: 5, kind: input, shape index: {}]
  %s6 = inlined_call_operand.vmem [shape: f32[1,64], index: 6, kind: input, shape index: {}]
  %s7 = inlined_call_operand.vmem [shape: bf16[64,512], index: 7, kind: input, shape index: {}]
  %s8 = inlined_call_operand.vmem [shape: f32[1,512], index: 8, kind: input, shape index: {}]
  %s9 = inlined_call_operand.vmem [shape: bf16[512,306], index: 9, kind: input, shape index: {}]
  %s10 = inlined_call_operand.vmem [shape: f32[1,306], index: 10, kind: input, shape index: {}]
  %s11 = inlined_call_operand.vmem [shape: f32[2,6,51], index: 11, kind: output, shape index: {}]
  %s12 = sld [smem:[#allocation0]]
  $region77: #{categorical_cnn_dqn_forward.1} parent=0
    _
  %s14 = ssub.s32 1, %s12
  %s15 = scalar_select 0, %s14, %s12
  loop: start=0, step=1, limit=4
  $region2: #{categorical_cnn_dqn_forward.1} parent=0 // loop_pre_header
    _
  $region3: #{categorical_cnn_dqn_forward.1} parent=0 // loop_header
    %s17 = sphi 0, %s21
    %p18 = scmp.ge.s32.totalorder %s17, 4
    %s27 = sphi 0, %s29
    %s30 = sphi 0, %s27
    %s31 = sphi 0, %s30
    %s47 = sphi 0, %s31
    %s51 = sphi 0, %s51
    %s53 = sphi 0, %s51
    %s54 = sphi 0, %s53
    %s68 = sphi 0, %s54
    %s72 = sphi 0, %s72
    %s74 = sphi 0, %s72
    %s75 = sphi 0, %s74
    %s89 = sphi 0, %s75
    %s93 = sphi 0, %s93
    %s95 = sphi 0, %s93
    %s96 = sphi 0, %s95
    %s110 = sphi 0, %s96
    %s114 = sphi 0, %s114
    %s116 = sphi 0, %s114
    %s117 = sphi 0, %s116
    %s131 = sphi 0, %s117
    %s135 = sphi 0, %s135
    %s137 = sphi 0, %s135
    %s138 = sphi 0, %s137
    %s152 = sphi 0, %s138
    %s156 = sphi 0, %s156
    %s158 = sphi 0, %s156
    %s159 = sphi 0, %s158
    %s173 = sphi 0, %s159
    %s177 = sphi 0, %s177
    %s179 = sphi 0, %s177
    %s180 = sphi 0, %s179
    %s194 = sphi 0, %s180
    %s198 = sphi 0, %s198
    %s200 = sphi 0, %s198
    %s201 = sphi 0, %s200
    %s215 = sphi 0, %s201
    %s219 = sphi 0, %s219
    %s221 = sphi 0, %s219
    %s222 = sphi 0, %s221
    %s236 = sphi 0, %s222
    %s240 = sphi 0, %s240
    %s242 = sphi 0, %s240
    %s243 = sphi 0, %s242
    %s257 = sphi 0, %s243
    %s263 = sphi 0, %s265
    %s266 = sphi 0, %s263
    %s267 = sphi 0, %s266
    %s283 = sphi 0, %s267
  $region4: #{categorical_cnn_dqn_forward.1} parent=0 // loop_header_branch
    %20 = sbr.rel (%p18) target = $region8
  $region5: #{categorical_cnn_dqn_forward.1} parent=0 // loop_body
    %s22 = ssub.s32 %s17, 1
    %s23 = ssub.s32 %s17, 2
    %s24 = sadd.s32 %s17, 1
    %s25 = ssub.s32 %s17, %s24
    %p26 = scmp.eq.s32.totalorder %s25, 0
    %s28 = sadd.s32 %s27, 1
    %s29 = scalar_select %p26, %s27, %s28
    %p32 = pneg %p26
    %p33 = scmp.eq.s32.totalorder %s17, 1
    %p34 = por %p32, %p33
    %p35 = scmp.ne.s32.totalorder %s27, %s30
    %p36 = scmp.eq.s32.totalorder %s17, 0
    %p37 = por %p35, %p36
    %p38 = scmp.ne.s32.totalorder %s27, %s30
    %p39 = scmp.eq.s32.totalorder %s22, 1
    %p40 = por %p38, %p39
    %p41 = scmp.ne.s32.totalorder %s30, %s31
    %p42 = scmp.eq.s32.totalorder %s22, 0
    %p43 = por %p41, %p42
    %p44 = scmp.ne.s32.totalorder %s30, %s31
    %p45 = scmp.eq.s32.totalorder %s23, 1
    %p46 = por %p44, %p45
    %p48 = scmp.ne.s32.totalorder %s31, %s47
    %p49 = scmp.eq.s32.totalorder %s23, 0
    %p50 = por %p48, %p49
    %s52 = sadd.s32 %s51, 1
    %p55 = scmp.eq.s32.totalorder %s17, 1
    %p56 = scmp.ne.s32.totalorder %s51, %s53
    %p57 = scmp.eq.s32.totalorder %s17, 0
    %p58 = por %p56, %p57
    %p59 = scmp.ne.s32.totalorder %s51, %s53
    %p60 = scmp.eq.s32.totalorder %s22, 1
    %p61 = por %p59, %p60
    %p62 = scmp.ne.s32.totalorder %s53, %s54
    %p63 = scmp.eq.s32.totalorder %s22, 0
    %p64 = por %p62, %p63
    %p65 = scmp.ne.s32.totalorder %s53, %s54
    %p66 = scmp.eq.s32.totalorder %s23, 1
    %p67 = por %p65, %p66
    %p69 = scmp.ne.s32.totalorder %s54, %s68
    %p70 = scmp.eq.s32.totalorder %s23, 0
    %p71 = por %p69, %p70
    %s73 = sadd.s32 %s72, 1
    %p76 = scmp.eq.s32.totalorder %s17, 1
    %p77 = scmp.ne.s32.totalorder %s72, %s74
    %p78 = scmp.eq.s32.totalorder %s17, 0
    %p79 = por %p77, %p78
    %p80 = scmp.ne.s32.totalorder %s72, %s74
    %p81 = scmp.eq.s32.totalorder %s22, 1
    %p82 = por %p80, %p81
    %p83 = scmp.ne.s32.totalorder %s74, %s75
    %p84 = scmp.eq.s32.totalorder %s22, 0
    %p85 = por %p83, %p84
    %p86 = scmp.ne.s32.totalorder %s74, %s75
    %p87 = scmp.eq.s32.totalorder %s23, 1
    %p88 = por %p86, %p87
    %p90 = scmp.ne.s32.totalorder %s75, %s89
    %p91 = scmp.eq.s32.totalorder %s23, 0
    %p92 = por %p90, %p91
    %s94 = sadd.s32 %s93, 1
    %p97 = scmp.eq.s32.totalorder %s17, 1
    %p98 = scmp.ne.s32.totalorder %s93, %s95
    %p99 = scmp.eq.s32.totalorder %s17, 0
    %p100 = por %p98, %p99
    %p101 = scmp.ne.s32.totalorder %s93, %s95
    %p102 = scmp.eq.s32.totalorder %s22, 1
    %p103 = por %p101, %p102
    %p104 = scmp.ne.s32.totalorder %s95, %s96
    %p105 = scmp.eq.s32.totalorder %s22, 0
    %p106 = por %p104, %p105
    %p107 = scmp.ne.s32.totalorder %s95, %s96
    %p108 = scmp.eq.s32.totalorder %s23, 1
    %p109 = por %p107, %p108
    %p111 = scmp.ne.s32.totalorder %s96, %s110
    %p112 = scmp.eq.s32.totalorder %s23, 0
    %p113 = por %p111, %p112
    %s115 = sadd.s32 %s114, 1
    %p118 = scmp.eq.s32.totalorder %s17, 1
    %p119 = scmp.ne.s32.totalorder %s114, %s116
    %p120 = scmp.eq.s32.totalorder %s17, 0
    %p121 = por %p119, %p120
    %p122 = scmp.ne.s32.totalorder %s114, %s116
    %p123 = scmp.eq.s32.totalorder %s22, 1
    %p124 = por %p122, %p123
    %p125 = scmp.ne.s32.totalorder %s116, %s117
    %p126 = scmp.eq.s32.totalorder %s22, 0
    %p127 = por %p125, %p126
    %p128 = scmp.ne.s32.totalorder %s116, %s117
    %p129 = scmp.eq.s32.totalorder %s23, 1
    %p130 = por %p128, %p129
    %p132 = scmp.ne.s32.totalorder %s117, %s131
    %p133 = scmp.eq.s32.totalorder %s23, 0
    %p134 = por %p132, %p133
    %s136 = sadd.s32 %s135, 1
    %p139 = scmp.eq.s32.totalorder %s17, 1
    %p140 = scmp.ne.s32.totalorder %s135, %s137
    %p141 = scmp.eq.s32.totalorder %s17, 0
    %p142 = por %p140, %p141
    %p143 = scmp.ne.s32.totalorder %s135, %s137
    %p144 = scmp.eq.s32.totalorder %s22, 1
    %p145 = por %p143, %p144
    %p146 = scmp.ne.s32.totalorder %s137, %s138
    %p147 = scmp.eq.s32.totalorder %s22, 0
    %p148 = por %p146, %p147
    %p149 = scmp.ne.s32.totalorder %s137, %s138
    %p150 = scmp.eq.s32.totalorder %s23, 1
    %p151 = por %p149, %p150
    %p153 = scmp.ne.s32.totalorder %s138, %s152
    %p154 = scmp.eq.s32.totalorder %s23, 0
    %p155 = por %p153, %p154
    %s157 = sadd.s32 %s156, 1
    %p160 = scmp.eq.s32.totalorder %s17, 1
    %p161 = scmp.ne.s32.totalorder %s156, %s158
    %p162 = scmp.eq.s32.totalorder %s17, 0
    %p163 = por %p161, %p162
    %p164 = scmp.ne.s32.totalorder %s156, %s158
    %p165 = scmp.eq.s32.totalorder %s22, 1
    %p166 = por %p164, %p165
    %p167 = scmp.ne.s32.totalorder %s158, %s159
    %p168 = scmp.eq.s32.totalorder %s22, 0
    %p169 = por %p167, %p168
    %p170 = scmp.ne.s32.totalorder %s158, %s159
    %p171 = scmp.eq.s32.totalorder %s23, 1
    %p172 = por %p170, %p171
    %p174 = scmp.ne.s32.totalorder %s159, %s173
    %p175 = scmp.eq.s32.totalorder %s23, 0
    %p176 = por %p174, %p175
    %s178 = sadd.s32 %s177, 1
    %p181 = scmp.eq.s32.totalorder %s17, 1
    %p182 = scmp.ne.s32.totalorder %s177, %s179
    %p183 = scmp.eq.s32.totalorder %s17, 0
    %p184 = por %p182, %p183
    %p185 = scmp.ne.s32.totalorder %s177, %s179
    %p186 = scmp.eq.s32.totalorder %s22, 1
    %p187 = por %p185, %p186
    %p188 = scmp.ne.s32.totalorder %s179, %s180
    %p189 = scmp.eq.s32.totalorder %s22, 0
    %p190 = por %p188, %p189
    %p191 = scmp.ne.s32.totalorder %s179, %s180
    %p192 = scmp.eq.s32.totalorder %s23, 1
    %p193 = por %p191, %p192
    %p195 = scmp.ne.s32.totalorder %s180, %s194
    %p196 = scmp.eq.s32.totalorder %s23, 0
    %p197 = por %p195, %p196
    %s199 = sadd.s32 %s198, 1
    %p202 = scmp.eq.s32.totalorder %s17, 1
    %p203 = scmp.ne.s32.totalorder %s198, %s200
    %p204 = scmp.eq.s32.totalorder %s17, 0
    %p205 = por %p203, %p204
    %p206 = scmp.ne.s32.totalorder %s198, %s200
    %p207 = scmp.eq.s32.totalorder %s22, 1
    %p208 = por %p206, %p207
    %p209 = scmp.ne.s32.totalorder %s200, %s201
    %p210 = scmp.eq.s32.totalorder %s22, 0
    %p211 = por %p209, %p210
    %p212 = scmp.ne.s32.totalorder %s200, %s201
    %p213 = scmp.eq.s32.totalorder %s23, 1
    %p214 = por %p212, %p213
    %p216 = scmp.ne.s32.totalorder %s201, %s215
    %p217 = scmp.eq.s32.totalorder %s23, 0
    %p218 = por %p216, %p217
    %s220 = sadd.s32 %s219, 1
    %p223 = scmp.eq.s32.totalorder %s17, 1
    %p224 = scmp.ne.s32.totalorder %s219, %s221
    %p225 = scmp.eq.s32.totalorder %s17, 0
    %p226 = por %p224, %p225
    %p227 = scmp.ne.s32.totalorder %s219, %s221
    %p228 = scmp.eq.s32.totalorder %s22, 1
    %p229 = por %p227, %p228
    %p230 = scmp.ne.s32.totalorder %s221, %s222
    %p231 = scmp.eq.s32.totalorder %s22, 0
    %p232 = por %p230, %p231
    %p233 = scmp.ne.s32.totalorder %s221, %s222
    %p234 = scmp.eq.s32.totalorder %s23, 1
    %p235 = por %p233, %p234
    %p237 = scmp.ne.s32.totalorder %s222, %s236
    %p238 = scmp.eq.s32.totalorder %s23, 0
    %p239 = por %p237, %p238
    %s241 = sadd.s32 %s240, 1
    %p244 = scmp.eq.s32.totalorder %s17, 1
    %p245 = scmp.ne.s32.totalorder %s240, %s242
    %p246 = scmp.eq.s32.totalorder %s17, 0
    %p247 = por %p245, %p246
    %p248 = scmp.ne.s32.totalorder %s240, %s242
    %p249 = scmp.eq.s32.totalorder %s22, 1
    %p250 = por %p248, %p249
    %p251 = scmp.ne.s32.totalorder %s242, %s243
    %p252 = scmp.eq.s32.totalorder %s22, 0
    %p253 = por %p251, %p252
    %p254 = scmp.ne.s32.totalorder %s242, %s243
    %p255 = scmp.eq.s32.totalorder %s23, 1
    %p256 = por %p254, %p255
    %p258 = scmp.ne.s32.totalorder %s243, %s257
    %p259 = scmp.eq.s32.totalorder %s23, 0
    %p260 = por %p258, %p259
    %s261 = ssub.s32 %s17, %s24
    %p262 = scmp.eq.s32.totalorder %s261, 0
    %s264 = sadd.s32 %s263, 1
    %s265 = scalar_select %p262, %s263, %s264
    %p268 = pneg %p262
    %p269 = scmp.eq.s32.totalorder %s17, 1
    %p270 = por %p268, %p269
    %p271 = scmp.ne.s32.totalorder %s263, %s266
    %p272 = scmp.eq.s32.totalorder %s17, 0
    %p273 = por %p271, %p272
    %p274 = scmp.ne.s32.totalorder %s263, %s266
    %p275 = scmp.eq.s32.totalorder %s22, 1
    %p276 = por %p274, %p275
    %p277 = scmp.ne.s32.totalorder %s266, %s267
    %p278 = scmp.eq.s32.totalorder %s22, 0
    %p279 = por %p277, %p278
    %p280 = scmp.ne.s32.totalorder %s266, %s267
    %p281 = scmp.eq.s32.totalorder %s23, 1
    %p282 = por %p280, %p281
    %p284 = scmp.ne.s32.totalorder %s267, %s283
    %p285 = scmp.eq.s32.totalorder %s23, 0
    %p286 = por %p284, %p285
    %p287 = scmp.le.s32.totalorder 1, %s17
    %p288 = scmp.lt.s32.totalorder %s17, 3
    %p289 = pnand %p287, %p288
    %p290 = pneg %p289
    // Predicated region
    $region9: #{categorical_cnn_dqn_forward.1} parent=5 // pred_check
      _
    $region10: #{categorical_cnn_dqn_forward.1} parent=5 // pred_check_branch
      %292 = sbr.rel (%p289) target = $region12
    $region11: #{categorical_cnn_dqn_forward.1} parent=5 // pred_region
      %s293 = ssub.s32 %s17, 1
      // Predicated region
      $region13: #{categorical_cnn_dqn_forward.1} parent=11 // pred_check
        %p294 = pneg %p64
      $region14: #{categorical_cnn_dqn_forward.1} parent=11 // pred_check_branch
        %296 = sbr.rel (%p294) target = $region16
      $region15: #{categorical_cnn_dqn_forward.1} parent=11 // pred_region
        _
      $region16: #{categorical_cnn_dqn_forward.1} parent=11 // pred_fallthru
        _
      // Predicated region
      $region17: #{categorical_cnn_dqn_forward.1} parent=11 // pred_check
        %p297 = pneg %p85
      $region18: #{categorical_cnn_dqn_forward.1} parent=11 // pred_check_branch
        %299 = sbr.rel (%p297) target = $region20
      $region19: #{categorical_cnn_dqn_forward.1} parent=11 // pred_region
        _
      $region20: #{categorical_cnn_dqn_forward.1} parent=11 // pred_fallthru
        _
      // Predicated region
      $region21: #{categorical_cnn_dqn_forward.1} parent=11 // pred_check
        %p300 = pneg %p106
      $region22: #{categorical_cnn_dqn_forward.1} parent=11 // pred_check_branch
        %302 = sbr.rel (%p300) target = $region24
      $region23: #{categorical_cnn_dqn_forward.1} parent=11 // pred_region
        _
      $region24: #{categorical_cnn_dqn_forward.1} parent=11 // pred_fallthru
        _
      // Predicated region
      $region25: #{categorical_cnn_dqn_forward.1} parent=11 // pred_check
        %p303 = pneg %p127
      $region26: #{categorical_cnn_dqn_forward.1} parent=11 // pred_check_branch
        %305 = sbr.rel (%p303) target = $region28
      $region27: #{categorical_cnn_dqn_forward.1} parent=11 // pred_region
        _
      $region28: #{categorical_cnn_dqn_forward.1} parent=11 // pred_fallthru
        _
      // Predicated region
      $region29: #{categorical_cnn_dqn_forward.1} parent=11 // pred_check
        %p306 = pneg %p148
      $region30: #{categorical_cnn_dqn_forward.1} parent=11 // pred_check_branch
        %308 = sbr.rel (%p306) target = $region32
      $region31: #{categorical_cnn_dqn_forward.1} parent=11 // pred_region
        _
      $region32: #{categorical_cnn_dqn_forward.1} parent=11 // pred_fallthru
        _
      // Predicated region
      $region33: #{categorical_cnn_dqn_forward.1} parent=11 // pred_check
        %p309 = pneg %p169
      $region34: #{categorical_cnn_dqn_forward.1} parent=11 // pred_check_branch
        %311 = sbr.rel (%p309) target = $region36
      $region35: #{categorical_cnn_dqn_forward.1} parent=11 // pred_region
        _
      $region36: #{categorical_cnn_dqn_forward.1} parent=11 // pred_fallthru
        _
      // Predicated region
      $region37: #{categorical_cnn_dqn_forward.1} parent=11 // pred_check
        %p312 = pneg %p190
      $region38: #{categorical_cnn_dqn_forward.1} parent=11 // pred_check_branch
        %314 = sbr.rel (%p312) target = $region40
      $region39: #{categorical_cnn_dqn_forward.1} parent=11 // pred_region
        _
      $region40: #{categorical_cnn_dqn_forward.1} parent=11 // pred_fallthru
        _
      // Predicated region
      $region41: #{categorical_cnn_dqn_forward.1} parent=11 // pred_check
        %p315 = pneg %p211
      $region42: #{categorical_cnn_dqn_forward.1} parent=11 // pred_check_branch
        %317 = sbr.rel (%p315) target = $region44
      $region43: #{categorical_cnn_dqn_forward.1} parent=11 // pred_region
        _
      $region44: #{categorical_cnn_dqn_forward.1} parent=11 // pred_fallthru
        _
      // Predicated region
      $region45: #{categorical_cnn_dqn_forward.1} parent=11 // pred_check
        %p318 = pneg %p232
      $region46: #{categorical_cnn_dqn_forward.1} parent=11 // pred_check_branch
        %320 = sbr.rel (%p318) target = $region48
      $region47: #{categorical_cnn_dqn_forward.1} parent=11 // pred_region
        _
      $region48: #{categorical_cnn_dqn_forward.1} parent=11 // pred_fallthru
        _
      // Predicated region
      $region49: #{categorical_cnn_dqn_forward.1} parent=11 // pred_check
        %p321 = pneg %p253
      $region50: #{categorical_cnn_dqn_forward.1} parent=11 // pred_check_branch
        %323 = sbr.rel (%p321) target = $region52
      $region51: #{categorical_cnn_dqn_forward.1} parent=11 // pred_region
        _
      $region52: #{categorical_cnn_dqn_forward.1} parent=11 // pred_fallthru
        _
    $region12: #{categorical_cnn_dqn_forward.1} parent=5 // pred_fallthru
      _
    %p324 = scmp.lt.s32.totalorder %s17, 2
    // Predicated region
    $region53: #{categorical_cnn_dqn_forward.1} parent=5 // pred_check
      %p325 = pneg %p324
    $region54: #{categorical_cnn_dqn_forward.1} parent=5 // pred_check_branch
      %327 = sbr.rel (%p325) target = $region56
    $region55: #{categorical_cnn_dqn_forward.1} parent=5 // pred_region
      // Predicated region
      $region57: #{categorical_cnn_dqn_forward.1} parent=55 // pred_check
        %p328 = pneg %p37
      $region58: #{categorical_cnn_dqn_forward.1} parent=55 // pred_check_branch
        %330 = sbr.rel (%p328) target = $region60
      $region59: #{categorical_cnn_dqn_forward.1} parent=55 // pred_region
        %p331 = scmp.lt.s32.totalorder %s17, 1
        %s332 = scalar_select %p331, %s17, 1
        %s333 = smul.addr %s332, 16
        %s334 = smul.addr %s333, 4
        %s335 = scalar_lea.vmem %s0, %s334
      $region60: #{categorical_cnn_dqn_forward.1} parent=55 // pred_fallthru
        _
    $region56: #{categorical_cnn_dqn_forward.1} parent=5 // pred_fallthru
      _
    %p336 = scmp.le.s32.totalorder 1, %s17
    %p337 = scmp.lt.s32.totalorder %s17, 3
    %p338 = pnand %p336, %p337
    %p339 = pneg %p338
    // Predicated region
    $region61: #{categorical_cnn_dqn_forward.1} parent=5 // pred_check
      _
    $region62: #{categorical_cnn_dqn_forward.1} parent=5 // pred_check_branch
      %341 = sbr.rel (%p338) target = $region64
    $region63: #{categorical_cnn_dqn_forward.1} parent=5 // pred_region
      %s342 = ssub.s32 %s17, 1
      %p343 = scmp.lt.s32.totalorder %s22, 1
      %s344 = scalar_select %p343, %s22, 1
      %s345 = smul.addr %s344, 16
      %s346 = smul.addr %s345, 4
      %s347 = scalar_lea.vmem %s0, %s346
      %p348 = pneg %p43
      %p349 = pneg %p40
      %p350 = pneg %p64
      %p351 = pneg %p61
      %p352 = pneg %p85
      %p353 = pneg %p82
      %p354 = pneg %p106
      %p355 = pneg %p103
      %p356 = pneg %p127
      %p357 = pneg %p124
      %p358 = pneg %p148
      %p359 = pneg %p145
      %p360 = pneg %p169
      %p361 = pneg %p166
      %p362 = pneg %p190
      %p363 = pneg %p187
      %p364 = pneg %p211
      %p365 = pneg %p208
      %p366 = pneg %p232
      %p367 = pneg %p229
      %p368 = pneg %p253
      %p369 = pneg %p250
      %p370 = pneg %p279
      %p371 = pneg %p276
      %p372 = scmp.lt.s32.totalorder %s22, 1
      %s373 = scalar_select %p372, %s22, 1
      %s374 = smul.addr %s373, 8
      %s375 = scalar_lea.vmem %s11, %s374
      %p376 = scmp.lt.s32.totalorder %s22, 1
      %s377 = scalar_select %p376, %s22, 1
      %s378 = smul.addr %s377, 16
      %s379 = smul.addr %s378, 4
      %s380 = scalar_lea.vmem %s0, %s379
      %p381 = scmp.lt.s32.totalorder %s22, 1
      %s382 = scalar_select %p381, %s22, 1
      %s383 = smul.addr %s382, 8
      %s384 = scalar_lea.vmem %s11, %s383
      %v386 = vld [vmem:[%s380] sm:$0xff]
      %v387 = vld [vmem:[%s380 + $0x8] sm:$0xff]
      %v388 = vld [vmem:[%s380 + $0x10] sm:$0xff]
      %v389 = vld [vmem:[%s380 + $0x18] sm:$0xff]
      %v390 = vld [vmem:[%s380 + $0x20] sm:$0xff]
      %v391 = vld [vmem:[%s380 + $0x28] sm:$0xff]
      %v392 = vld [vmem:[%s380 + $0x30] sm:$0xff]
      %v393 = vld [vmem:[%s380 + $0x38] sm:$0xff]
      %v394 = vld [vmem:[%s1] sm:$0xf]
      %v395 = vld [vmem:[%s1 + $0x4] sm:$0xf]
      %v396 = vld [vmem:[%s1 + $0x8] sm:$0xf]
      %v397 = vld [vmem:[%s1 + $0xc] sm:$0xf]
      %v398 = vld [vmem:[%s1 + $0x10] sm:$0xf]
      %v399 = vld [vmem:[%s1 + $0x14] sm:$0xf]
      %v400 = vld [vmem:[%s1 + $0x18] sm:$0xf]
      %v401 = vld [vmem:[%s1 + $0x1c] sm:$0xf]
      %v402 = vld [vmem:[%s1 + $0x20] sm:$0xf]
      %v403 = vld [vmem:[%s1 + $0x24] sm:$0xf]
      %v404 = vld [vmem:[%s1 + $0x28] sm:$0xf]
      %v405 = vld [vmem:[%s1 + $0x2c] sm:$0xf]
      %v406 = vld [vmem:[%s1 + $0x30] sm:$0xf]
      %v407 = vld [vmem:[%s1 + $0x34] sm:$0xf]
      %v408 = vld [vmem:[%s1 + $0x38] sm:$0xf]
      %v409 = vld [vmem:[%s1 + $0x3c] sm:$0xf]
      %v410 = vld [vmem:[%s1 + $0x40] sm:$0xf]
      %v411 = vld [vmem:[%s1 + $0x44] sm:$0xf]
      %v412 = vld [vmem:[%s1 + $0x48] sm:$0xf]
      %v413 = vld [vmem:[%s1 + $0x4c] sm:$0xf]
      %v414 = vld [vmem:[%s1 + $0x50] sm:$0xf]
      %v415 = vld [vmem:[%s1 + $0x54] sm:$0xf]
      %v416 = vld [vmem:[%s1 + $0x58] sm:$0xf]
      %v417 = vld [vmem:[%s1 + $0x5c] sm:$0xf]
      %v418 = vld [vmem:[%s1 + $0x60] sm:$0xf]
      %v419 = vld [vmem:[%s1 + $0x64] sm:$0xf]
      %v420 = vld [vmem:[%s1 + $0x68] sm:$0xf]
      %v421 = vld [vmem:[%s1 + $0x6c] sm:$0xf]
      %v422 = vld [vmem:[%s1 + $0x70] sm:$0xf]
      %v423 = vld [vmem:[%s1 + $0x74] sm:$0xf]
      %v424 = vld [vmem:[%s1 + $0x78] sm:$0xf]
      %v425 = vld [vmem:[%s1 + $0x7c] sm:$0xf]
      %v426 = vld [vmem:[%s2] sm:$0x1]
      %v428 = vlaneseq
      %v429 = vshrl.u32 %v428, 7
      %v430 = vsub.s32 0, %v429
      %v431 = vrot.slane %v426, %v430
      %v441 = vunpack.c.l.b16 %v386
      %v442 = vunpack.c.h.b16 %v386
      %v443 = vunpack.c.l.b16 %v387
      %v444 = vunpack.c.h.b16 %v387
      %v445 = vunpack.c.l.b16 %v388
      %v446 = vunpack.c.h.b16 %v388
      %v447 = vunpack.c.l.b16 %v389
      %v448 = vunpack.c.h.b16 %v389
      %v449 = vunpack.c.l.b16 %v390
      %v450 = vunpack.c.h.b16 %v390
      %v451 = vunpack.c.l.b16 %v391
      %v452 = vunpack.c.h.b16 %v391
      %v453 = vunpack.c.l.b16 %v392
      %v454 = vunpack.c.h.b16 %v392
      %v455 = vunpack.c.l.b16 %v393
      %v456 = vunpack.c.h.b16 %v393
      %v457 = vpack.c.b16 %v443, %v441
      %v458 = vpack.c.b16 %v444, %v442
      %v459 = vpack.c.b16 %v447, %v445
      %v460 = vpack.c.b16 %v448, %v446
      %v461 = vpack.c.b16 %v451, %v449
      %v462 = vpack.c.b16 %v452, %v450
      %v463 = vpack.c.b16 %v455, %v453
      %v464 = vpack.c.b16 %v456, %v454
      %v505 = vunpack.c.l.b16 %v394
      %v506 = vunpack.c.l.b16 %v395
      %v507 = vunpack.c.l.b16 %v396
      %v508 = vunpack.c.l.b16 %v397
      %v509 = vunpack.c.l.b16 %v398
      %v510 = vunpack.c.l.b16 %v399
      %v511 = vunpack.c.l.b16 %v400
      %v512 = vunpack.c.l.b16 %v401
      %v513 = vunpack.c.l.b16 %v402
      %v514 = vunpack.c.l.b16 %v403
      %v515 = vunpack.c.l.b16 %v404
      %v516 = vunpack.c.l.b16 %v405
      %v517 = vunpack.c.l.b16 %v406
      %v518 = vunpack.c.l.b16 %v407
      %v519 = vunpack.c.l.b16 %v408
      %v520 = vunpack.c.l.b16 %v409
      %v521 = vunpack.c.l.b16 %v410
      %v522 = vunpack.c.l.b16 %v411
      %v523 = vunpack.c.l.b16 %v412
      %v524 = vunpack.c.l.b16 %v413
      %v525 = vunpack.c.l.b16 %v414
      %v526 = vunpack.c.l.b16 %v415
      %v527 = vunpack.c.l.b16 %v416
      %v528 = vunpack.c.l.b16 %v417
      %v529 = vunpack.c.l.b16 %v418
      %v530 = vunpack.c.l.b16 %v419
      %v531 = vunpack.c.l.b16 %v420
      %v532 = vunpack.c.l.b16 %v421
      %v533 = vunpack.c.l.b16 %v422
      %v534 = vunpack.c.l.b16 %v423
      %v535 = vunpack.c.l.b16 %v424
      %v536 = vunpack.c.l.b16 %v425
      %v537 = vpack.c.b16 %v506, %v505
      %v538 = vpack.c.b16 %v508, %v507
      %v539 = vpack.c.b16 %v510, %v509
      %v540 = vpack.c.b16 %v512, %v511
      %v541 = vpack.c.b16 %v514, %v513
      %v542 = vpack.c.b16 %v516, %v515
      %v543 = vpack.c.b16 %v518, %v517
      %v544 = vpack.c.b16 %v520, %v519
      %v545 = vpack.c.b16 %v522, %v521
      %v546 = vpack.c.b16 %v524, %v523
      %v547 = vpack.c.b16 %v526, %v525
      %v548 = vpack.c.b16 %v528, %v527
      %v549 = vpack.c.b16 %v530, %v529
      %v550 = vpack.c.b16 %v532, %v531
      %v551 = vpack.c.b16 %v534, %v533
      %v552 = vpack.c.b16 %v536, %v535
      %569 = vmatprep.subr.bf16.mxu0 0
      %570 = vmatpush1.bf16.msra.mxu0 %v537
      %571 = vmatprep.subr.bf16.mxu0 0
      %572 = vmatpush1.bf16.msra.mxu0 %v538
      %573 = vmatprep.subr.bf16.mxu0 0
      %574 = vmatpush1.bf16.msra.mxu0 %v539
      %575 = vmatprep.subr.bf16.mxu0 0
      %576 = vmatpush1.bf16.msra.mxu0 %v540
      %577 = vmatprep.subr.bf16.mxu0 0
      %578 = vmatpush1.bf16.msra.mxu0 %v541
      %579 = vmatprep.subr.bf16.mxu0 0
      %580 = vmatpush1.bf16.msra.mxu0 %v542
      %581 = vmatprep.subr.bf16.mxu0 0
      %582 = vmatpush1.bf16.msra.mxu0 %v543
      %583 = vmatprep.subr.bf16.mxu0 0
      %584 = vmatpush1.bf16.msra.mxu0 %v544
      %585 = vmatprep.subr.bf16.mxu0 0
      %586 = vmatpush1.bf16.msra.mxu0 %v545
      %587 = vmatprep.subr.bf16.mxu0 0
      %588 = vmatpush1.bf16.msra.mxu0 %v546
      %589 = vmatprep.subr.bf16.mxu0 0
      %590 = vmatpush1.bf16.msra.mxu0 %v547
      %591 = vmatprep.subr.bf16.mxu0 0
      %592 = vmatpush1.bf16.msra.mxu0 %v548
      %593 = vmatprep.subr.bf16.mxu0 0
      %594 = vmatpush1.bf16.msra.mxu0 %v549
      %595 = vmatprep.subr.bf16.mxu0 0
      %596 = vmatpush1.bf16.msra.mxu0 %v550
      %597 = vmatprep.subr.bf16.mxu0 0
      %598 = vmatpush1.bf16.msra.mxu0 %v551
      %599 = vmatprep.subr.bf16.mxu0 0
      %600 = vmatpush1.bf16.msra.mxu0 %v552
      %601 = vmatprep.mubr.bf16.mxu0 %v458
      %602 = vmatmul.mubr.bf16.gmra.mrb[0].mxu0 %v457
      %v603 = vpop.f32.mrb[0].mxu0
      %v604 = vadd.f32 %v431, %v603
      %v605 = vpop.f32.mrb[0].mxu0
      %v606 = vpop.f32.mrb[0].mxu0
      %v607 = vadd.f32 %v431, %v606
      %v608 = vpop.f32.mrb[0].mxu0
      %609 = vmatprep.mubr.bf16.mxu0 %v460
      %610 = vmatmul.mubr.bf16.gmra.mrb[0].mxu0 %v459
      %v611 = vpop.f32.mrb[0].mxu0
      %v612 = vadd.f32 %v431, %v611
      %v613 = vpop.f32.mrb[0].mxu0
      %v614 = vpop.f32.mrb[0].mxu0
      %v615 = vadd.f32 %v431, %v614
      %v616 = vpop.f32.mrb[0].mxu0
      %617 = vmatprep.mubr.bf16.mxu0 %v462
      %618 = vmatmul.mubr.bf16.gmra.mrb[0].mxu0 %v461
      %v619 = vpop.f32.mrb[0].mxu0
      %v620 = vadd.f32 %v431, %v619
      %v621 = vpop.f32.mrb[0].mxu0
      %v622 = vpop.f32.mrb[0].mxu0
      %v623 = vadd.f32 %v431, %v622
      %v624 = vpop.f32.mrb[0].mxu0
      %625 = vmatprep.mubr.bf16.mxu0 %v464
      %626 = vmatmul.mubr.bf16.gmra.mrb[0].mxu0 %v463
      %v627 = vpop.f32.mrb[0].mxu0
      %v628 = vadd.f32 %v431, %v627
      %v629 = vpop.f32.mrb[0].mxu0
      %v630 = vpop.f32.mrb[0].mxu0
      %v631 = vadd.f32 %v431, %v630
      %v632 = vpop.f32.mrb[0].mxu0
      %633 = vdwg.mxu0
      %v634 = vmax.f32 %v604, 0.0
      %v635 = vmax.f32 %v607, 0.0
      %v636 = vmax.f32 %v612, 0.0
      %v637 = vmax.f32 %v615, 0.0
      %v638 = vmax.f32 %v620, 0.0
      %v639 = vmax.f32 %v623, 0.0
      %v640 = vmax.f32 %v628, 0.0
      %v641 = vmax.f32 %v631, 0.0
      %v643 = vrot.slane %v634, 1
      %644 = vrot.lane.b32.xlu0 %v643, 32
      %v645 = vpop.permute.xlu0 %644
      %v647 = vrot.slane %v634, 2
      %648 = vrot.lane.b32.xlu0 %v647, 64
      %v649 = vpop.permute.xlu0 %648
      %v651 = vrot.slane %v634, 3
      %652 = vrot.lane.b32.xlu0 %v651, 96
      %v653 = vpop.permute.xlu0 %652
      %v656 = vrot.slane %v635, 1
      %657 = vrot.lane.b32.xlu0 %v656, 32
      %v658 = vpop.permute.xlu0 %657
      %v660 = vrot.slane %v635, 2
      %661 = vrot.lane.b32.xlu0 %v660, 64
      %v662 = vpop.permute.xlu0 %661
      %v664 = vrot.slane %v635, 3
      %665 = vrot.lane.b32.xlu0 %v664, 96
      %v666 = vpop.permute.xlu0 %665
      %v669 = vrot.slane %v636, 1
      %670 = vrot.lane.b32.xlu0 %v669, 32
      %v671 = vpop.permute.xlu0 %670
      %v673 = vrot.slane %v636, 2
      %674 = vrot.lane.b32.xlu0 %v673, 64
      %v675 = vpop.permute.xlu0 %674
      %v677 = vrot.slane %v636, 3
      %678 = vrot.lane.b32.xlu0 %v677, 96
      %v679 = vpop.permute.xlu0 %678
      %v682 = vrot.slane %v637, 1
      %683 = vrot.lane.b32.xlu0 %v682, 32
      %v684 = vpop.permute.xlu0 %683
      %v686 = vrot.slane %v637, 2
      %687 = vrot.lane.b32.xlu0 %v686, 64
      %v688 = vpop.permute.xlu0 %687
      %v690 = vrot.slane %v637, 3
      %691 = vrot.lane.b32.xlu0 %v690, 96
      %v692 = vpop.permute.xlu0 %691
      %vm694 = vcmask 261120
      %v695 = vsel %vm694, %v634, %v645
      %vm696 = vcmask 523264
      %v697 = vsel %vm696, %v695, %v649
      %vm698 = vcmask 785408
      %v699 = vsel %vm698, %v697, %v653
      %v700 = vsel %vm694, %v635, %v658
      %v701 = vsel %vm696, %v700, %v662
      %v702 = vsel %vm698, %v701, %v666
      %v703 = vsel %vm694, %v636, %v671
      %v704 = vsel %vm696, %v703, %v675
      %v705 = vsel %vm698, %v704, %v679
      %v706 = vsel %vm694, %v637, %v684
      %v707 = vsel %vm696, %v706, %v688
      %v708 = vsel %vm698, %v707, %v692
      %v710 = vrot.slane %v638, 1
      %711 = vrot.lane.b32.xlu0 %v710, 32
      %v712 = vpop.permute.xlu0 %711
      %v714 = vrot.slane %v638, 2
      %715 = vrot.lane.b32.xlu0 %v714, 64
      %v716 = vpop.permute.xlu0 %715
      %v718 = vrot.slane %v638, 3
      %719 = vrot.lane.b32.xlu0 %v718, 96
      %v720 = vpop.permute.xlu0 %719
      %v723 = vrot.slane %v639, 1
      %724 = vrot.lane.b32.xlu0 %v723, 32
      %v725 = vpop.permute.xlu0 %724
      %v727 = vrot.slane %v639, 2
      %728 = vrot.lane.b32.xlu0 %v727, 64
      %v729 = vpop.permute.xlu0 %728
      %v731 = vrot.slane %v639, 3
      %732 = vrot.lane.b32.xlu0 %v731, 96
      %v733 = vpop.permute.xlu0 %732
      %v735 = vsel %vm694, %v638, %v712
      %v736 = vsel %vm696, %v735, %v716
      %v737 = vsel %vm698, %v736, %v720
      %v738 = vsel %vm694, %v639, %v725
      %v739 = vsel %vm696, %v738, %v729
      %v740 = vsel %vm698, %v739, %v733
      %v742 = vrot.slane %v640, 1
      %743 = vrot.lane.b32.xlu0 %v742, 32
      %v744 = vpop.permute.xlu0 %743
      %v746 = vrot.slane %v640, 2
      %747 = vrot.lane.b32.xlu0 %v746, 64
      %v748 = vpop.permute.xlu0 %747
      %v750 = vrot.slane %v640, 3
      %751 = vrot.lane.b32.xlu0 %v750, 96
      %v752 = vpop.permute.xlu0 %751
      %v755 = vrot.slane %v641, 1
      %756 = vrot.lane.b32.xlu0 %v755, 32
      %v757 = vpop.permute.xlu0 %756
      %v759 = vrot.slane %v641, 2
      %760 = vrot.lane.b32.xlu0 %v759, 64
      %v761 = vpop.permute.xlu0 %760
      %v763 = vrot.slane %v641, 3
      %764 = vrot.lane.b32.xlu0 %v763, 96
      %v765 = vpop.permute.xlu0 %764
      %v767 = vsel %vm694, %v640, %v744
      %v768 = vsel %vm696, %v767, %v748
      %v769 = vsel %vm698, %v768, %v752
      %v770 = vsel %vm694, %v641, %v757
      %v771 = vsel %vm696, %v770, %v761
      %v772 = vsel %vm698, %v771, %v765
      %v777 = vrot.slane %v699, 1
      %v778 = vrot.slane %v702, 1
      %v779 = vrot.slane %v705, 1
      %v780 = vrot.slane %v708, 1
      %v785 = vrot.slane %v699, 2
      %v786 = vrot.slane %v702, 2
      %v787 = vrot.slane %v705, 2
      %v788 = vrot.slane %v708, 2
      %v795 = vrot.slane %v705, 5
      %v796 = vrot.slane %v708, 5
      %v797 = vrot.slane %v737, 5
      %v798 = vrot.slane %v740, 5
      %v803 = vrot.slane %v705, 6
      %v804 = vrot.slane %v708, 6
      %v805 = vrot.slane %v737, 6
      %v806 = vrot.slane %v740, 6
      %v811 = vrot.slane %v705, 7
      %v812 = vrot.slane %v708, 7
      %v813 = vrot.slane %v737, 7
      %v814 = vrot.slane %v740, 7
      %v821 = vrot.slane %v737, 2
      %v822 = vrot.slane %v740, 2
      %v823 = vrot.slane %v769, 2
      %v824 = vrot.slane %v772, 2
      %v829 = vrot.slane %v737, 3
      %v830 = vrot.slane %v740, 3
      %v831 = vrot.slane %v769, 3
      %v832 = vrot.slane %v772, 3
      %v837 = vrot.slane %v737, 4
      %v838 = vrot.slane %v740, 4
      %v839 = vrot.slane %v769, 4
      %v840 = vrot.slane %v772, 4
      %vm845 = vcmask 1040384
      %v846 = vsel %vm845, %v699, %v777
      %v847 = vsel %vm845, %v702, %v778
      %v848 = vsel %vm845, %v705, %v779
      %v849 = vsel %vm845, %v708, %v780
      %vm850 = vcmask 1041408
      %v851 = vsel %vm850, %v846, %v785
      %v852 = vsel %vm850, %v847, %v786
      %v853 = vsel %vm850, %v848, %v787
      %v854 = vsel %vm850, %v849, %v788
      %vm855 = vcmask 1042432
      %v856 = vsel %vm855, %v851, %v795
      %v857 = vsel %vm855, %v852, %v796
      %v858 = vsel %vm855, %v853, %v797
      %v859 = vsel %vm855, %v854, %v798
      %vm860 = vcmask 1043456
      %v861 = vsel %vm860, %v856, %v803
      %v862 = vsel %vm860, %v857, %v804
      %v863 = vsel %vm860, %v858, %v805
      %v864 = vsel %vm860, %v859, %v806
      %vm865 = vcmask 1044480
      %v866 = vsel %vm865, %v861, %v811
      %v867 = vsel %vm865, %v862, %v812
      %v868 = vsel %vm865, %v863, %v813
      %v869 = vsel %vm865, %v864, %v814
      %vm870 = vcmask 1045504
      %v871 = vsel %vm870, %v866, %v821
      %v872 = vsel %vm870, %v867, %v822
      %v873 = vsel %vm870, %v868, %v823
      %v874 = vsel %vm870, %v869, %v824
      %vm875 = vcmask 1046528
      %v876 = vsel %vm875, %v871, %v829
      %v877 = vsel %vm875, %v872, %v830
      %v878 = vsel %vm875, %v873, %v831
      %v879 = vsel %vm875, %v874, %v832
      %v880 = vpack.c.bf16 %v837, %v876
      %v881 = vpack.c.bf16 %v838, %v877
      %v882 = vpack.c.bf16 %v839, %v878
      %v883 = vpack.c.bf16 %v840, %v879
      %v884 = vld [vmem:[%s3] sm:$0xf]
      %v885 = vld [vmem:[%s3 + $0x4] sm:$0xf]
      %v886 = vld [vmem:[%s3 + $0x8] sm:$0xf]
      %v887 = vld [vmem:[%s3 + $0xc] sm:$0xf]
      %v888 = vld [vmem:[%s3 + $0x10] sm:$0xf]
      %v889 = vld [vmem:[%s3 + $0x14] sm:$0xf]
      %v890 = vld [vmem:[%s3 + $0x18] sm:$0xf]
      %v891 = vld [vmem:[%s3 + $0x1c] sm:$0xf]
      %v892 = vld [vmem:[%s3 + $0x20] sm:$0xf]
      %v893 = vld [vmem:[%s3 + $0x24] sm:$0xf]
      %v894 = vld [vmem:[%s3 + $0x28] sm:$0xf]
      %v895 = vld [vmem:[%s3 + $0x2c] sm:$0xf]
      %v896 = vld [vmem:[%s3 + $0x30] sm:$0xf]
      %v897 = vld [vmem:[%s3 + $0x34] sm:$0xf]
      %v898 = vld [vmem:[%s3 + $0x38] sm:$0xf]
      %v899 = vld [vmem:[%s3 + $0x3c] sm:$0xf]
      %v900 = vld [vmem:[%s3 + $0x40] sm:$0xf]
      %v901 = vld [vmem:[%s3 + $0x44] sm:$0xf]
      %v902 = vld [vmem:[%s3 + $0x48] sm:$0xf]
      %v903 = vld [vmem:[%s3 + $0x4c] sm:$0xf]
      %v904 = vld [vmem:[%s3 + $0x50] sm:$0xf]
      %v905 = vld [vmem:[%s3 + $0x54] sm:$0xf]
      %v906 = vld [vmem:[%s3 + $0x58] sm:$0xf]
      %v907 = vld [vmem:[%s3 + $0x5c] sm:$0xf]
      %v908 = vld [vmem:[%s3 + $0x60] sm:$0xf]
      %v909 = vld [vmem:[%s3 + $0x64] sm:$0xf]
      %v910 = vld [vmem:[%s3 + $0x68] sm:$0xf]
      %v911 = vld [vmem:[%s3 + $0x6c] sm:$0xf]
      %v912 = vld [vmem:[%s3 + $0x70] sm:$0xf]
      %v913 = vld [vmem:[%s3 + $0x74] sm:$0xf]
      %v914 = vld [vmem:[%s3 + $0x78] sm:$0xf]
      %v915 = vld [vmem:[%s3 + $0x7c] sm:$0xf]
      %v916 = vld [vmem:[%s3 + $0x80] sm:$0xf]
      %v917 = vld [vmem:[%s3 + $0x84] sm:$0xf]
      %v918 = vld [vmem:[%s3 + $0x88] sm:$0xf]
      %v919 = vld [vmem:[%s3 + $0x8c] sm:$0xf]
      %v920 = vld [vmem:[%s3 + $0x90] sm:$0xf]
      %v921 = vld [vmem:[%s3 + $0x94] sm:$0xf]
      %v922 = vld [vmem:[%s3 + $0x98] sm:$0xf]
      %v923 = vld [vmem:[%s3 + $0x9c] sm:$0xf]
      %v924 = vld [vmem:[%s3 + $0xa0] sm:$0xf]
      %v925 = vld [vmem:[%s3 + $0xa4] sm:$0xf]
      %v926 = vld [vmem:[%s3 + $0xa8] sm:$0xf]
      %v927 = vld [vmem:[%s3 + $0xac] sm:$0xf]
      %v928 = vld [vmem:[%s3 + $0xb0] sm:$0xf]
      %v929 = vld [vmem:[%s3 + $0xb4] sm:$0xf]
      %v930 = vld [vmem:[%s3 + $0xb8] sm:$0xf]
      %v931 = vld [vmem:[%s3 + $0xbc] sm:$0xf]
      %v932 = vld [vmem:[%s3 + $0xc0] sm:$0xf]
      %v933 = vld [vmem:[%s3 + $0xc4] sm:$0xf]
      %v934 = vld [vmem:[%s3 + $0xc8] sm:$0xf]
      %v935 = vld [vmem:[%s3 + $0xcc] sm:$0xf]
      %v936 = vld [vmem:[%s3 + $0xd0] sm:$0xf]
      %v937 = vld [vmem:[%s3 + $0xd4] sm:$0xf]
      %v938 = vld [vmem:[%s3 + $0xd8] sm:$0xf]
      %v939 = vld [vmem:[%s3 + $0xdc] sm:$0xf]
      %v940 = vld [vmem:[%s3 + $0xe0] sm:$0xf]
      %v941 = vld [vmem:[%s3 + $0xe4] sm:$0xf]
      %v942 = vld [vmem:[%s3 + $0xe8] sm:$0xf]
      %v943 = vld [vmem:[%s3 + $0xec] sm:$0xf]
      %v944 = vld [vmem:[%s3 + $0xf0] sm:$0xf]
      %v945 = vld [vmem:[%s3 + $0xf4] sm:$0xf]
      %v946 = vld [vmem:[%s3 + $0xf8] sm:$0xf]
      %v947 = vld [vmem:[%s3 + $0xfc] sm:$0xf]
      %v948 = vld [vmem:[%s4] sm:$0x1]
      %v950 = vlaneseq
      %v951 = vshrl.u32 %v950, 7
      %v952 = vsub.s32 0, %v951
      %v953 = vrot.slane %v948, %v952
      %v1019 = vunpack.c.l.b16 %v884
      %v1020 = vunpack.c.l.b16 %v885
      %v1021 = vunpack.c.l.b16 %v886
      %v1022 = vunpack.c.l.b16 %v887
      %v1023 = vunpack.c.l.b16 %v888
      %v1024 = vunpack.c.l.b16 %v889
      %v1025 = vunpack.c.l.b16 %v890
      %v1026 = vunpack.c.l.b16 %v891
      %v1027 = vunpack.c.l.b16 %v892
      %v1028 = vunpack.c.l.b16 %v893
      %v1029 = vunpack.c.l.b16 %v894
      %v1030 = vunpack.c.l.b16 %v895
      %v1031 = vunpack.c.l.b16 %v896
      %v1032 = vunpack.c.l.b16 %v897
      %v1033 = vunpack.c.l.b16 %v898
      %v1034 = vunpack.c.l.b16 %v899
      %v1035 = vunpack.c.l.b16 %v900
      %v1036 = vunpack.c.l.b16 %v901
      %v1037 = vunpack.c.l.b16 %v902
      %v1038 = vunpack.c.l.b16 %v903
      %v1039 = vunpack.c.l.b16 %v904
      %v1040 = vunpack.c.l.b16 %v905
      %v1041 = vunpack.c.l.b16 %v906
      %v1042 = vunpack.c.l.b16 %v907
      %v1043 = vunpack.c.l.b16 %v908
      %v1044 = vunpack.c.l.b16 %v909
      %v1045 = vunpack.c.l.b16 %v910
      %v1046 = vunpack.c.l.b16 %v911
      %v1047 = vunpack.c.l.b16 %v912
      %v1048 = vunpack.c.l.b16 %v913
      %v1049 = vunpack.c.l.b16 %v914
      %v1050 = vunpack.c.l.b16 %v915
      %v1051 = vunpack.c.l.b16 %v916
      %v1052 = vunpack.c.l.b16 %v917
      %v1053 = vunpack.c.l.b16 %v918
      %v1054 = vunpack.c.l.b16 %v919
      %v1055 = vunpack.c.l.b16 %v920
      %v1056 = vunpack.c.l.b16 %v921
      %v1057 = vunpack.c.l.b16 %v922
      %v1058 = vunpack.c.l.b16 %v923
      %v1059 = vunpack.c.l.b16 %v924
      %v1060 = vunpack.c.l.b16 %v925
      %v1061 = vunpack.c.l.b16 %v926
      %v1062 = vunpack.c.l.b16 %v927
      %v1063 = vunpack.c.l.b16 %v928
      %v1064 = vunpack.c.l.b16 %v929
      %v1065 = vunpack.c.l.b16 %v930
      %v1066 = vunpack.c.l.b16 %v931
      %v1067 = vunpack.c.l.b16 %v932
      %v1068 = vunpack.c.l.b16 %v933
      %v1069 = vunpack.c.l.b16 %v934
      %v1070 = vunpack.c.l.b16 %v935
      %v1071 = vunpack.c.l.b16 %v936
      %v1072 = vunpack.c.l.b16 %v937
      %v1073 = vunpack.c.l.b16 %v938
      %v1074 = vunpack.c.l.b16 %v939
      %v1075 = vunpack.c.l.b16 %v940
      %v1076 = vunpack.c.l.b16 %v941
      %v1077 = vunpack.c.l.b16 %v942
      %v1078 = vunpack.c.l.b16 %v943
      %v1079 = vunpack.c.l.b16 %v944
      %v1080 = vunpack.c.l.b16 %v945
      %v1081 = vunpack.c.l.b16 %v946
      %v1082 = vunpack.c.l.b16 %v947
      %v1083 = vpack.c.b16 %v1020, %v1019
      %v1084 = vpack.c.b16 %v1022, %v1021
      %v1085 = vpack.c.b16 %v1024, %v1023
      %v1086 = vpack.c.b16 %v1026, %v1025
      %v1087 = vpack.c.b16 %v1028, %v1027
      %v1088 = vpack.c.b16 %v1030, %v1029
      %v1089 = vpack.c.b16 %v1032, %v1031
      %v1090 = vpack.c.b16 %v1034, %v1033
      %v1091 = vpack.c.b16 %v1036, %v1035
      %v1092 = vpack.c.b16 %v1038, %v1037
      %v1093 = vpack.c.b16 %v1040, %v1039
      %v1094 = vpack.c.b16 %v1042, %v1041
      %v1095 = vpack.c.b16 %v1044, %v1043
      %v1096 = vpack.c.b16 %v1046, %v1045
      %v1097 = vpack.c.b16 %v1048, %v1047
      %v1098 = vpack.c.b16 %v1050, %v1049
      %v1099 = vpack.c.b16 %v1052, %v1051
      %v1100 = vpack.c.b16 %v1054, %v1053
      %v1101 = vpack.c.b16 %v1056, %v1055
      %v1102 = vpack.c.b16 %v1058, %v1057
      %v1103 = vpack.c.b16 %v1060, %v1059
      %v1104 = vpack.c.b16 %v1062, %v1061
      %v1105 = vpack.c.b16 %v1064, %v1063
      %v1106 = vpack.c.b16 %v1066, %v1065
      %v1107 = vpack.c.b16 %v1068, %v1067
      %v1108 = vpack.c.b16 %v1070, %v1069
      %v1109 = vpack.c.b16 %v1072, %v1071
      %v1110 = vpack.c.b16 %v1074, %v1073
      %v1111 = vpack.c.b16 %v1076, %v1075
      %v1112 = vpack.c.b16 %v1078, %v1077
      %v1113 = vpack.c.b16 %v1080, %v1079
      %v1114 = vpack.c.b16 %v1082, %v1081
      %1147 = vmatprep.subr.bf16.mxu0 0
      %1148 = vmatpush1.bf16.msra.mxu0 %v1083
      %1149 = vmatprep.subr.bf16.mxu0 0
      %1150 = vmatpush1.bf16.msra.mxu0 %v1084
      %1151 = vmatprep.subr.bf16.mxu0 0
      %1152 = vmatpush1.bf16.msra.mxu0 %v1085
      %1153 = vmatprep.subr.bf16.mxu0 0
      %1154 = vmatpush1.bf16.msra.mxu0 %v1086
      %1155 = vmatprep.subr.bf16.mxu0 0
      %1156 = vmatpush1.bf16.msra.mxu0 %v1087
      %1157 = vmatprep.subr.bf16.mxu0 0
      %1158 = vmatpush1.bf16.msra.mxu0 %v1088
      %1159 = vmatprep.subr.bf16.mxu0 0
      %1160 = vmatpush1.bf16.msra.mxu0 %v1089
      %1161 = vmatprep.subr.bf16.mxu0 0
      %1162 = vmatpush1.bf16.msra.mxu0 %v1090
      %1163 = vmatprep.subr.bf16.mxu0 0
      %1164 = vmatpush1.bf16.msra.mxu0 %v1091
      %1165 = vmatprep.subr.bf16.mxu0 0
      %1166 = vmatpush1.bf16.msra.mxu0 %v1092
      %1167 = vmatprep.subr.bf16.mxu0 0
      %1168 = vmatpush1.bf16.msra.mxu0 %v1093
      %1169 = vmatprep.subr.bf16.mxu0 0
      %1170 = vmatpush1.bf16.msra.mxu0 %v1094
      %1171 = vmatprep.subr.bf16.mxu0 0
      %1172 = vmatpush1.bf16.msra.mxu0 %v1095
      %1173 = vmatprep.subr.bf16.mxu0 0
      %1174 = vmatpush1.bf16.msra.mxu0 %v1096
      %1175 = vmatprep.subr.bf16.mxu0 0
      %1176 = vmatpush1.bf16.msra.mxu0 %v1097
      %1177 = vmatprep.subr.bf16.mxu0 0
      %1178 = vmatpush1.bf16.msra.mxu0 %v1098
      %1179 = vmatprep.mubr.bf16.mxu0 %v881
      %1180 = vmatmul.mubr.bf16.gmra.mrb[0].mxu0 %v880
      %v1181 = vpop.f32.mrb[0].mxu0
      %v1182 = vadd.f32 %v953, %v1181
      %v1183 = vpop.f32.mrb[0].mxu0
      %v1184 = vpop.f32.mrb[0].mxu0
      %v1185 = vadd.f32 %v953, %v1184
      %v1186 = vpop.f32.mrb[0].mxu0
      %1187 = vdwg.mxu0
      %1188 = vmatprep.subr.bf16.mxu0 0
      %1189 = vmatpush1.bf16.msra.mxu0 %v1099
      %1190 = vmatprep.subr.bf16.mxu0 0
      %1191 = vmatpush1.bf16.msra.mxu0 %v1100
      %1192 = vmatprep.subr.bf16.mxu0 0
      %1193 = vmatpush1.bf16.msra.mxu0 %v1101
      %1194 = vmatprep.subr.bf16.mxu0 0
      %1195 = vmatpush1.bf16.msra.mxu0 %v1102
      %1196 = vmatprep.subr.bf16.mxu0 0
      %1197 = vmatpush1.bf16.msra.mxu0 %v1103
      %1198 = vmatprep.subr.bf16.mxu0 0
      %1199 = vmatpush1.bf16.msra.mxu0 %v1104
      %1200 = vmatprep.subr.bf16.mxu0 0
      %1201 = vmatpush1.bf16.msra.mxu0 %v1105
      %1202 = vmatprep.subr.bf16.mxu0 0
      %1203 = vmatpush1.bf16.msra.mxu0 %v1106
      %1204 = vmatprep.subr.bf16.mxu0 0
      %1205 = vmatpush1.bf16.msra.mxu0 %v1107
      %1206 = vmatprep.subr.bf16.mxu0 0
      %1207 = vmatpush1.bf16.msra.mxu0 %v1108
      %1208 = vmatprep.subr.bf16.mxu0 0
      %1209 = vmatpush1.bf16.msra.mxu0 %v1109
      %1210 = vmatprep.subr.bf16.mxu0 0
      %1211 = vmatpush1.bf16.msra.mxu0 %v1110
      %1212 = vmatprep.subr.bf16.mxu0 0
      %1213 = vmatpush1.bf16.msra.mxu0 %v1111
      %1214 = vmatprep.subr.bf16.mxu0 0
      %1215 = vmatpush1.bf16.msra.mxu0 %v1112
      %1216 = vmatprep.subr.bf16.mxu0 0
      %1217 = vmatpush1.bf16.msra.mxu0 %v1113
      %1218 = vmatprep.subr.bf16.mxu0 0
      %1219 = vmatpush1.bf16.msra.mxu0 %v1114
      %1220 = vmatprep.mubr.bf16.mxu0 %v883
      %1221 = vmatmul.mubr.bf16.gmra.mrb[0].mxu0 %v882
      %v1222 = vpop.f32.mrb[0].mxu0
      %v1223 = vadd.f32 %v1182, %v1222
      %v1224 = vpop.f32.mrb[0].mxu0
      %v1225 = vpop.f32.mrb[0].mxu0
      %v1226 = vadd.f32 %v1185, %v1225
      %v1227 = vpop.f32.mrb[0].mxu0
      %1228 = vdwg.mxu0
      %v1229 = vmax.f32 %v1223, 0.0
      %v1230 = vmax.f32 %v1226, 0.0
      %v1232 = vrot.slane %v1229, 1
      %1233 = vrot.lane.b32.xlu0 %v1232, 64
      %v1234 = vpop.permute.xlu0 %1233
      %v1236 = vrot.slane %v1229, 2
      %v1238 = vrot.slane %v1229, 3
      %1239 = vrot.lane.b32.xlu0 %v1238, 64
      %v1240 = vpop.permute.xlu0 %1239
      %v1242 = vrot.slane %v1229, 4
      %v1244 = vrot.slane %v1229, 5
      %1245 = vrot.lane.b32.xlu0 %v1244, 64
      %v1246 = vpop.permute.xlu0 %1245
      %v1248 = vrot.slane %v1229, 6
      %v1250 = vrot.slane %v1229, 7
      %1251 = vrot.lane.b32.xlu0 %v1250, 64
      %v1252 = vpop.permute.xlu0 %1251
      %v1254 = vsel %vm696, %v1229, %v1234
      %v1255 = vsel %vm696, %v1236, %v1240
      %v1256 = vsel %vm696, %v1242, %v1246
      %v1257 = vsel %vm696, %v1248, %v1252
      %v1258 = vpack.c.bf16 %v1254, %v1254
      %v1259 = vpack.c.bf16 %v1255, %v1255
      %v1260 = vpack.c.bf16 %v1256, %v1256
      %v1261 = vpack.c.bf16 %v1257, %v1257
      %v1262 = vpack.c.bf16 %v1230, %v1230
      %v1263 = vld [vmem:[%s5] sm:$0xf]
      %v1264 = vld [vmem:[%s5 + $0x4] sm:$0xf]
      %v1265 = vld [vmem:[%s5 + $0x8] sm:$0xf]
      %v1266 = vld [vmem:[%s5 + $0xc] sm:$0xf]
      %v1267 = vld [vmem:[%s5 + $0x10] sm:$0xf]
      %v1268 = vld [vmem:[%s5 + $0x14] sm:$0xf]
      %v1269 = vld [vmem:[%s5 + $0x18] sm:$0xf]
      %v1270 = vld [vmem:[%s5 + $0x1c] sm:$0xf]
      %v1271 = vld [vmem:[%s5 + $0x20] sm:$0xf]
      %v1272 = vld [vmem:[%s5 + $0x24] sm:$0xf]
      %v1273 = vld [vmem:[%s5 + $0x28] sm:$0xf]
      %v1274 = vld [vmem:[%s5 + $0x2c] sm:$0xf]
      %v1275 = vld [vmem:[%s5 + $0x30] sm:$0xf]
      %v1276 = vld [vmem:[%s5 + $0x34] sm:$0xf]
      %v1277 = vld [vmem:[%s5 + $0x38] sm:$0xf]
      %v1278 = vld [vmem:[%s5 + $0x3c] sm:$0xf]
      %v1279 = vld [vmem:[%s5 + $0x40] sm:$0xf]
      %v1280 = vld [vmem:[%s5 + $0x44] sm:$0xf]
      %v1281 = vld [vmem:[%s5 + $0x48] sm:$0xf]
      %v1282 = vld [vmem:[%s5 + $0x4c] sm:$0xf]
      %v1283 = vld [vmem:[%s5 + $0x50] sm:$0xf]
      %v1284 = vld [vmem:[%s5 + $0x54] sm:$0xf]
      %v1285 = vld [vmem:[%s5 + $0x58] sm:$0xf]
      %v1286 = vld [vmem:[%s5 + $0x5c] sm:$0xf]
      %v1287 = vld [vmem:[%s5 + $0x60] sm:$0xf]
      %v1288 = vld [vmem:[%s5 + $0x64] sm:$0xf]
      %v1289 = vld [vmem:[%s5 + $0x68] sm:$0xf]
      %v1290 = vld [vmem:[%s5 + $0x6c] sm:$0xf]
      %v1291 = vld [vmem:[%s5 + $0x70] sm:$0xf]
      %v1292 = vld [vmem:[%s5 + $0x74] sm:$0xf]
      %v1293 = vld [vmem:[%s5 + $0x78] sm:$0xf]
      %v1294 = vld [vmem:[%s5 + $0x7c] sm:$0xf]
      %v1295 = vld [vmem:[%s5 + $0x80] sm:$0xf]
      %v1296 = vld [vmem:[%s5 + $0x84] sm:$0xf]
      %v1297 = vld [vmem:[%s5 + $0x88] sm:$0xf]
      %v1298 = vld [vmem:[%s5 + $0x8c] sm:$0xf]
      %v1299 = vld [vmem:[%s5 + $0x90] sm:$0xf]
      %v1300 = vld [vmem:[%s5 + $0x94] sm:$0xf]
      %v1301 = vld [vmem:[%s5 + $0x98] sm:$0xf]
      %v1302 = vld [vmem:[%s5 + $0x9c] sm:$0xf]
      %v1303 = vld [vmem:[%s5 + $0xa0] sm:$0xf]
      %v1304 = vld [vmem:[%s5 + $0xa4] sm:$0xf]
      %v1305 = vld [vmem:[%s5 + $0xa8] sm:$0xf]
      %v1306 = vld [vmem:[%s5 + $0xac] sm:$0xf]
      %v1307 = vld [vmem:[%s5 + $0xb0] sm:$0xf]
      %v1308 = vld [vmem:[%s5 + $0xb4] sm:$0xf]
      %v1309 = vld [vmem:[%s5 + $0xb8] sm:$0xf]
      %v1310 = vld [vmem:[%s5 + $0xbc] sm:$0xf]
      %v1311 = vld [vmem:[%s5 + $0xc0] sm:$0xf]
      %v1312 = vld [vmem:[%s5 + $0xc4] sm:$0xf]
      %v1313 = vld [vmem:[%s5 + $0xc8] sm:$0xf]
      %v1314 = vld [vmem:[%s5 + $0xcc] sm:$0xf]
      %v1315 = vld [vmem:[%s5 + $0xd0] sm:$0xf]
      %v1316 = vld [vmem:[%s5 + $0xd4] sm:$0xf]
      %v1317 = vld [vmem:[%s5 + $0xd8] sm:$0xf]
      %v1318 = vld [vmem:[%s5 + $0xdc] sm:$0xf]
      %v1319 = vld [vmem:[%s5 + $0xe0] sm:$0xf]
      %v1320 = vld [vmem:[%s5 + $0xe4] sm:$0xf]
      %v1321 = vld [vmem:[%s5 + $0xe8] sm:$0xf]
      %v1322 = vld [vmem:[%s5 + $0xec] sm:$0xf]
      %v1323 = vld [vmem:[%s5 + $0xf0] sm:$0xf]
      %v1324 = vld [vmem:[%s5 + $0xf4] sm:$0xf]
      %v1325 = vld [vmem:[%s5 + $0xf8] sm:$0xf]
      %v1326 = vld [vmem:[%s5 + $0xfc] sm:$0xf]
      %v1327 = vld [vmem:[%s5 + $0x100] sm:$0xf]
      %v1328 = vld [vmem:[%s5 + $0x104] sm:$0xf]
      %v1329 = vld [vmem:[%s5 + $0x108] sm:$0xf]
      %v1330 = vld [vmem:[%s5 + $0x10c] sm:$0xf]
      %v1331 = vld [vmem:[%s5 + $0x110] sm:$0xf]
      %v1332 = vld [vmem:[%s5 + $0x114] sm:$0xf]
      %v1333 = vld [vmem:[%s5 + $0x118] sm:$0xf]
      %v1334 = vld [vmem:[%s5 + $0x11c] sm:$0xf]
      %v1335 = vld [vmem:[%s6] sm:$0x1]
      %v1408 = vunpack.c.l.b16 %v1263
      %v1409 = vunpack.c.l.b16 %v1264
      %v1410 = vunpack.c.l.b16 %v1265
      %v1411 = vunpack.c.l.b16 %v1266
      %v1412 = vunpack.c.l.b16 %v1267
      %v1413 = vunpack.c.l.b16 %v1268
      %v1414 = vunpack.c.l.b16 %v1269
      %v1415 = vunpack.c.l.b16 %v1270
      %v1416 = vunpack.c.l.b16 %v1271
      %v1417 = vunpack.c.l.b16 %v1272
      %v1418 = vunpack.c.l.b16 %v1273
      %v1419 = vunpack.c.l.b16 %v1274
      %v1420 = vunpack.c.l.b16 %v1275
      %v1421 = vunpack.c.l.b16 %v1276
      %v1422 = vunpack.c.l.b16 %v1277
      %v1423 = vunpack.c.l.b16 %v1278
      %v1424 = vunpack.c.l.b16 %v1279
      %v1425 = vunpack.c.l.b16 %v1280
      %v1426 = vunpack.c.l.b16 %v1281
      %v1427 = vunpack.c.l.b16 %v1282
      %v1428 = vunpack.c.l.b16 %v1283
      %v1429 = vunpack.c.l.b16 %v1284
      %v1430 = vunpack.c.l.b16 %v1285
      %v1431 = vunpack.c.l.b16 %v1286
      %v1432 = vunpack.c.l.b16 %v1287
      %v1433 = vunpack.c.l.b16 %v1288
      %v1434 = vunpack.c.l.b16 %v1289
      %v1435 = vunpack.c.l.b16 %v1290
      %v1436 = vunpack.c.l.b16 %v1291
      %v1437 = vunpack.c.l.b16 %v1292
      %v1438 = vunpack.c.l.b16 %v1293
      %v1439 = vunpack.c.l.b16 %v1294
      %v1440 = vunpack.c.l.b16 %v1295
      %v1441 = vunpack.c.l.b16 %v1296
      %v1442 = vunpack.c.l.b16 %v1297
      %v1443 = vunpack.c.l.b16 %v1298
      %v1444 = vunpack.c.l.b16 %v1299
      %v1445 = vunpack.c.l.b16 %v1300
      %v1446 = vunpack.c.l.b16 %v1301
      %v1447 = vunpack.c.l.b16 %v1302
      %v1448 = vunpack.c.l.b16 %v1303
      %v1449 = vunpack.c.l.b16 %v1304
      %v1450 = vunpack.c.l.b16 %v1305
      %v1451 = vunpack.c.l.b16 %v1306
      %v1452 = vunpack.c.l.b16 %v1307
      %v1453 = vunpack.c.l.b16 %v1308
      %v1454 = vunpack.c.l.b16 %v1309
      %v1455 = vunpack.c.l.b16 %v1310
      %v1456 = vunpack.c.l.b16 %v1311
      %v1457 = vunpack.c.l.b16 %v1312
      %v1458 = vunpack.c.l.b16 %v1313
      %v1459 = vunpack.c.l.b16 %v1314
      %v1460 = vunpack.c.l.b16 %v1315
      %v1461 = vunpack.c.l.b16 %v1316
      %v1462 = vunpack.c.l.b16 %v1317
      %v1463 = vunpack.c.l.b16 %v1318
      %v1464 = vunpack.c.l.b16 %v1319
      %v1465 = vunpack.c.l.b16 %v1320
      %v1466 = vunpack.c.l.b16 %v1321
      %v1467 = vunpack.c.l.b16 %v1322
      %v1468 = vunpack.c.l.b16 %v1323
      %v1469 = vunpack.c.l.b16 %v1324
      %v1470 = vunpack.c.l.b16 %v1325
      %v1471 = vunpack.c.l.b16 %v1326
      %v1472 = vunpack.c.l.b16 %v1327
      %v1473 = vunpack.c.l.b16 %v1328
      %v1474 = vunpack.c.l.b16 %v1329
      %v1475 = vunpack.c.l.b16 %v1330
      %v1476 = vunpack.c.l.b16 %v1331
      %v1477 = vunpack.c.l.b16 %v1332
      %v1478 = vunpack.c.l.b16 %v1333
      %v1479 = vunpack.c.l.b16 %v1334
      %v1480 = vpack.c.b16 %v1409, %v1408
      %v1481 = vpack.c.b16 %v1411, %v1410
      %v1482 = vpack.c.b16 %v1413, %v1412
      %v1483 = vpack.c.b16 %v1415, %v1414
      %v1484 = vpack.c.b16 %v1417, %v1416
      %v1485 = vpack.c.b16 %v1419, %v1418
      %v1486 = vpack.c.b16 %v1421, %v1420
      %v1487 = vpack.c.b16 %v1423, %v1422
      %v1488 = vpack.c.b16 %v1425, %v1424
      %v1489 = vpack.c.b16 %v1427, %v1426
      %v1490 = vpack.c.b16 %v1429, %v1428
      %v1491 = vpack.c.b16 %v1431, %v1430
      %v1492 = vpack.c.b16 %v1433, %v1432
      %v1493 = vpack.c.b16 %v1435, %v1434
      %v1494 = vpack.c.b16 %v1437, %v1436
      %v1495 = vpack.c.b16 %v1439, %v1438
      %v1496 = vpack.c.b16 %v1441, %v1440
      %v1497 = vpack.c.b16 %v1443, %v1442
      %v1498 = vpack.c.b16 %v1445, %v1444
      %v1499 = vpack.c.b16 %v1447, %v1446
      %v1500 = vpack.c.b16 %v1449, %v1448
      %v1501 = vpack.c.b16 %v1451, %v1450
      %v1502 = vpack.c.b16 %v1453, %v1452
      %v1503 = vpack.c.b16 %v1455, %v1454
      %v1504 = vpack.c.b16 %v1457, %v1456
      %v1505 = vpack.c.b16 %v1459, %v1458
      %v1506 = vpack.c.b16 %v1461, %v1460
      %v1507 = vpack.c.b16 %v1463, %v1462
      %v1508 = vpack.c.b16 %v1465, %v1464
      %v1509 = vpack.c.b16 %v1467, %v1466
      %v1510 = vpack.c.b16 %v1469, %v1468
      %v1511 = vpack.c.b16 %v1471, %v1470
      %v1512 = vpack.c.b16 %v1473, %v1472
      %v1513 = vpack.c.b16 %v1475, %v1474
      %v1514 = vpack.c.b16 %v1477, %v1476
      %v1515 = vpack.c.b16 %v1479, %v1478
      %v1553 = vsel %vm696, %v1262, 0
      %1555 = vmatprep.subr.bf16.mxu0 0
      %1556 = vmatpush1.bf16.msra.mxu0 %v1480
      %1557 = vmatprep.subr.bf16.mxu0 0
      %1558 = vmatpush1.bf16.msra.mxu0 %v1481
      %1559 = vmatprep.subr.bf16.mxu0 0
      %1560 = vmatpush1.bf16.msra.mxu0 %v1482
      %1561 = vmatprep.subr.bf16.mxu0 0
      %1562 = vmatpush1.bf16.msra.mxu0 %v1483
      %1563 = vmatprep.subr.bf16.mxu0 0
      %1564 = vmatpush1.bf16.msra.mxu0 %v1484
      %1565 = vmatprep.subr.bf16.mxu0 0
      %1566 = vmatpush1.bf16.msra.mxu0 %v1485
      %1567 = vmatprep.subr.bf16.mxu0 0
      %1568 = vmatpush1.bf16.msra.mxu0 %v1486
      %1569 = vmatprep.subr.bf16.mxu0 0
      %1570 = vmatpush1.bf16.msra.mxu0 %v1487
      %1571 = vmatprep.subr.bf16.mxu0 0
      %1572 = vmatpush1.bf16.msra.mxu0 %v1488
      %1573 = vmatprep.subr.bf16.mxu0 0
      %1574 = vmatpush1.bf16.msra.mxu0 %v1489
      %1575 = vmatprep.subr.bf16.mxu0 0
      %1576 = vmatpush1.bf16.msra.mxu0 %v1490
      %1577 = vmatprep.subr.bf16.mxu0 0
      %1578 = vmatpush1.bf16.msra.mxu0 %v1491
      %1579 = vmatprep.subr.bf16.mxu0 0
      %1580 = vmatpush1.bf16.msra.mxu0 %v1492
      %1581 = vmatprep.subr.bf16.mxu0 0
      %1582 = vmatpush1.bf16.msra.mxu0 %v1493
      %1583 = vmatprep.subr.bf16.mxu0 0
      %1584 = vmatpush1.bf16.msra.mxu0 %v1494
      %1585 = vmatprep.subr.bf16.mxu0 0
      %1586 = vmatpush1.bf16.msra.mxu0 %v1495
      %1587 = vmatprep.mubr.bf16.mxu0 %v1259
      %1588 = vmatmul.mubr.bf16.gmra.mrb[0].mxu0 %v1258
      %v1589 = vpop.f32.mrb[0].mxu0
      %v1590 = vadd.f32 %v1335, %v1589
      %v1591 = vpop.f32.mrb[0].mxu0
      %v1592 = vpop.f32.mrb[0].mxu0
      %v1593 = vpop.f32.mrb[0].mxu0
      %1594 = vdwg.mxu0
      %1595 = vmatprep.subr.bf16.mxu0 0
      %1596 = vmatpush1.bf16.msra.mxu0 %v1496
      %1597 = vmatprep.subr.bf16.mxu0 0
      %1598 = vmatpush1.bf16.msra.mxu0 %v1497
      %1599 = vmatprep.subr.bf16.mxu0 0
      %1600 = vmatpush1.bf16.msra.mxu0 %v1498
      %1601 = vmatprep.subr.bf16.mxu0 0
      %1602 = vmatpush1.bf16.msra.mxu0 %v1499
      %1603 = vmatprep.subr.bf16.mxu0 0
      %1604 = vmatpush1.bf16.msra.mxu0 %v1500
      %1605 = vmatprep.subr.bf16.mxu0 0
      %1606 = vmatpush1.bf16.msra.mxu0 %v1501
      %1607 = vmatprep.subr.bf16.mxu0 0
      %1608 = vmatpush1.bf16.msra.mxu0 %v1502
      %1609 = vmatprep.subr.bf16.mxu0 0
      %1610 = vmatpush1.bf16.msra.mxu0 %v1503
      %1611 = vmatprep.subr.bf16.mxu0 0
      %1612 = vmatpush1.bf16.msra.mxu0 %v1504
      %1613 = vmatprep.subr.bf16.mxu0 0
      %1614 = vmatpush1.bf16.msra.mxu0 %v1505
      %1615 = vmatprep.subr.bf16.mxu0 0
      %1616 = vmatpush1.bf16.msra.mxu0 %v1506
      %1617 = vmatprep.subr.bf16.mxu0 0
      %1618 = vmatpush1.bf16.msra.mxu0 %v1507
      %1619 = vmatprep.subr.bf16.mxu0 0
      %1620 = vmatpush1.bf16.msra.mxu0 %v1508
      %1621 = vmatprep.subr.bf16.mxu0 0
      %1622 = vmatpush1.bf16.msra.mxu0 %v1509
      %1623 = vmatprep.subr.bf16.mxu0 0
      %1624 = vmatpush1.bf16.msra.mxu0 %v1510
      %1625 = vmatprep.subr.bf16.mxu0 0
      %1626 = vmatpush1.bf16.msra.mxu0 %v1511
      %1627 = vmatprep.mubr.bf16.mxu0 %v1261
      %1628 = vmatmul.mubr.bf16.gmra.mrb[0].mxu0 %v1260
      %v1629 = vpop.f32.mrb[0].mxu0
      %v1630 = vadd.f32 %v1590, %v1629
      %v1631 = vpop.f32.mrb[0].mxu0
      %v1632 = vpop.f32.mrb[0].mxu0
      %v1633 = vpop.f32.mrb[0].mxu0
      %1634 = vdwg.mxu0
      %1635 = vmatprep.subr.bf16.mxu0 0
      %1636 = vmatpush1.bf16.msra.mxu0 %v1512
      %1637 = vmatprep.subr.bf16.mxu0 0
      %1638 = vmatpush1.bf16.msra.mxu0 %v1513
      %1639 = vmatprep.subr.bf16.mxu0 0
      %1640 = vmatpush1.bf16.msra.mxu0 %v1514
      %1641 = vmatprep.subr.bf16.mxu0 0
      %1642 = vmatpush1.bf16.msra.mxu0 %v1515
      %1643 = vmatprep.subr.bf16.mxu0 0
      %1644 = vmatpush1.bf16.msra.mxu0 0
      %1645 = vmatprep.subr.bf16.mxu0 0
      %1646 = vmatpush1.bf16.msra.mxu0 0
      %1647 = vmatprep.subr.bf16.mxu0 0
      %1648 = vmatpush1.bf16.msra.mxu0 0
      %1649 = vmatprep.subr.bf16.mxu0 0
      %1650 = vmatpush1.bf16.msra.mxu0 0
      %1651 = vmatprep.subr.bf16.mxu0 0
      %1652 = vmatpush1.bf16.msra.mxu0 0
      %1653 = vmatprep.subr.bf16.mxu0 0
      %1654 = vmatpush1.bf16.msra.mxu0 0
      %1655 = vmatprep.subr.bf16.mxu0 0
      %1656 = vmatpush1.bf16.msra.mxu0 0
      %1657 = vmatprep.subr.bf16.mxu0 0
      %1658 = vmatpush1.bf16.msra.mxu0 0
      %1659 = vmatprep.subr.bf16.mxu0 0
      %1660 = vmatpush1.bf16.msra.mxu0 0
      %1661 = vmatprep.subr.bf16.mxu0 0
      %1662 = vmatpush1.bf16.msra.mxu0 0
      %1663 = vmatprep.subr.bf16.mxu0 0
      %1664 = vmatpush1.bf16.msra.mxu0 0
      %1665 = vmatprep.subr.bf16.mxu0 0
      %1666 = vmatpush1.bf16.msra.mxu0 0
      %1667 = vmatprep.mubr.bf16.mxu0 0
      %1668 = vmatmul.mubr.bf16.gmra.mrb[0].mxu0 %v1553
      %v1669 = vpop.f32.mrb[0].mxu0
      %v1670 = vadd.f32 %v1630, %v1669
      %v1671 = vpop.f32.mrb[0].mxu0
      %v1672 = vpop.f32.mrb[0].mxu0
      %v1673 = vpop.f32.mrb[0].mxu0
      %1674 = vdwg.mxu0
      %v1675 = vmax.f32 %v1670, 0.0
      %v1676 = vpack.c.bf16 %v1675, %v1675
      %v1677 = vld [vmem:[%s7] sm:$0xff]
      %v1678 = vld [vmem:[%s7 + $0x8] sm:$0xff]
      %v1679 = vld [vmem:[%s7 + $0x10] sm:$0xff]
      %v1680 = vld [vmem:[%s7 + $0x18] sm:$0xff]
      %v1681 = vld [vmem:[%s7 + $0x20] sm:$0xff]
      %v1682 = vld [vmem:[%s7 + $0x28] sm:$0xff]
      %v1683 = vld [vmem:[%s7 + $0x30] sm:$0xff]
      %v1684 = vld [vmem:[%s7 + $0x38] sm:$0xff]
      %v1685 = vld [vmem:[%s7 + $0x40] sm:$0xff]
      %v1686 = vld [vmem:[%s7 + $0x48] sm:$0xff]
      %v1687 = vld [vmem:[%s7 + $0x50] sm:$0xff]
      %v1688 = vld [vmem:[%s7 + $0x58] sm:$0xff]
      %v1689 = vld [vmem:[%s7 + $0x60] sm:$0xff]
      %v1690 = vld [vmem:[%s7 + $0x68] sm:$0xff]
      %v1691 = vld [vmem:[%s7 + $0x70] sm:$0xff]
      %v1692 = vld [vmem:[%s7 + $0x78] sm:$0xff]
      %v1693 = vld [vmem:[%s8] sm:$0xf]
      %v1710 = vunpack.c.l.b16 %v1677
      %v1711 = vunpack.c.h.b16 %v1677
      %v1712 = vunpack.c.l.b16 %v1678
      %v1713 = vunpack.c.h.b16 %v1678
      %v1714 = vunpack.c.l.b16 %v1679
      %v1715 = vunpack.c.h.b16 %v1679
      %v1716 = vunpack.c.l.b16 %v1680
      %v1717 = vunpack.c.h.b16 %v1680
      %v1718 = vunpack.c.l.b16 %v1681
      %v1719 = vunpack.c.h.b16 %v1681
      %v1720 = vunpack.c.l.b16 %v1682
      %v1721 = vunpack.c.h.b16 %v1682
      %v1722 = vunpack.c.l.b16 %v1683
      %v1723 = vunpack.c.h.b16 %v1683
      %v1724 = vunpack.c.l.b16 %v1684
      %v1725 = vunpack.c.h.b16 %v1684
      %v1726 = vunpack.c.l.b16 %v1685
      %v1727 = vunpack.c.h.b16 %v1685
      %v1728 = vunpack.c.l.b16 %v1686
      %v1729 = vunpack.c.h.b16 %v1686
      %v1730 = vunpack.c.l.b16 %v1687
      %v1731 = vunpack.c.h.b16 %v1687
      %v1732 = vunpack.c.l.b16 %v1688
      %v1733 = vunpack.c.h.b16 %v1688
      %v1734 = vunpack.c.l.b16 %v1689
      %v1735 = vunpack.c.h.b16 %v1689
      %v1736 = vunpack.c.l.b16 %v1690
      %v1737 = vunpack.c.h.b16 %v1690
      %v1738 = vunpack.c.l.b16 %v1691
      %v1739 = vunpack.c.h.b16 %v1691
      %v1740 = vunpack.c.l.b16 %v1692
      %v1741 = vunpack.c.h.b16 %v1692
      %v1742 = vpack.c.b16 %v1714, %v1710
      %v1743 = vpack.c.b16 %v1715, %v1711
      %v1744 = vpack.c.b16 %v1716, %v1712
      %v1745 = vpack.c.b16 %v1717, %v1713
      %v1746 = vpack.c.b16 %v1722, %v1718
      %v1747 = vpack.c.b16 %v1723, %v1719
      %v1748 = vpack.c.b16 %v1724, %v1720
      %v1749 = vpack.c.b16 %v1725, %v1721
      %v1750 = vpack.c.b16 %v1730, %v1726
      %v1751 = vpack.c.b16 %v1731, %v1727
      %v1752 = vpack.c.b16 %v1732, %v1728
      %v1753 = vpack.c.b16 %v1733, %v1729
      %v1754 = vpack.c.b16 %v1738, %v1734
      %v1755 = vpack.c.b16 %v1739, %v1735
      %v1756 = vpack.c.b16 %v1740, %v1736
      %v1757 = vpack.c.b16 %v1741, %v1737
      %v1775 = vlaneseq
      %v1776 = vshrl.u32 %v1775, 7
      %v1777 = vsub.s32 0, %v1776
      %v1778 = vrot.slane %v1693, %v1777
      %v1779 = vlaneseq
      %v1780 = vshrl.u32 %v1779, 7
      %v1781 = vsub.s32 1, %v1780
      %v1782 = vrot.slane %v1693, %v1781
      %v1783 = vlaneseq
      %v1784 = vshrl.u32 %v1783, 7
      %v1785 = vsub.s32 2, %v1784
      %v1786 = vrot.slane %v1693, %v1785
      %v1787 = vlaneseq
      %v1788 = vshrl.u32 %v1787, 7
      %v1789 = vsub.s32 3, %v1788
      %v1790 = vrot.slane %v1693, %v1789
      %v1796 = vsel %vm696, %v1676, 0
      %1798 = vmatprep.subr.bf16.mxu0 %v1743
      %1799 = vmatpush1.bf16.msra.mxu0 %v1742
      %1800 = vmatprep.subr.bf16.mxu0 %v1747
      %1801 = vmatpush1.bf16.msra.mxu0 %v1746
      %1802 = vmatprep.subr.bf16.mxu0 %v1751
      %1803 = vmatpush1.bf16.msra.mxu0 %v1750
      %1804 = vmatprep.subr.bf16.mxu0 %v1755
      %1805 = vmatpush1.bf16.msra.mxu0 %v1754
      %1806 = vmatprep.subr.bf16.mxu0 0
      %1807 = vmatpush1.bf16.msra.mxu0 0
      %1808 = vmatprep.subr.bf16.mxu0 0
      %1809 = vmatpush1.bf16.msra.mxu0 0
      %1810 = vmatprep.subr.bf16.mxu0 0
      %1811 = vmatpush1.bf16.msra.mxu0 0
      %1812 = vmatprep.subr.bf16.mxu0 0
      %1813 = vmatpush1.bf16.msra.mxu0 0
      %1814 = vmatprep.subr.bf16.mxu0 0
      %1815 = vmatpush1.bf16.msra.mxu0 0
      %1816 = vmatprep.subr.bf16.mxu0 0
      %1817 = vmatpush1.bf16.msra.mxu0 0
      %1818 = vmatprep.subr.bf16.mxu0 0
      %1819 = vmatpush1.bf16.msra.mxu0 0
      %1820 = vmatprep.subr.bf16.mxu0 0
      %1821 = vmatpush1.bf16.msra.mxu0 0
      %1822 = vmatprep.subr.bf16.mxu0 0
      %1823 = vmatpush1.bf16.msra.mxu0 0
      %1824 = vmatprep.subr.bf16.mxu0 0
      %1825 = vmatpush1.bf16.msra.mxu0 0
      %1826 = vmatprep.subr.bf16.mxu0 0
      %1827 = vmatpush1.bf16.msra.mxu0 0
      %1828 = vmatprep.subr.bf16.mxu0 0
      %1829 = vmatpush1.bf16.msra.mxu0 0
      %1830 = vmatprep.mubr.bf16.mxu0 0
      %1831 = vmatmul.mubr.bf16.gmra.mrb[0].mxu0 %v1796
      %v1832 = vpop.f32.mrb[0].mxu0
      %v1833 = vadd.f32 %v1778, %v1832
      %v1834 = vpop.f32.mrb[0].mxu0
      %v1835 = vadd.f32 %v1782, %v1834
      %v1836 = vpop.f32.mrb[0].mxu0
      %v1837 = vpop.f32.mrb[0].mxu0
      %1838 = vdwg.mxu0
      %1839 = vmatprep.subr.bf16.mxu0 %v1745
      %1840 = vmatpush1.bf16.msra.mxu0 %v1744
      %1841 = vmatprep.subr.bf16.mxu0 %v1749
      %1842 = vmatpush1.bf16.msra.mxu0 %v1748
      %1843 = vmatprep.subr.bf16.mxu0 %v1753
      %1844 = vmatpush1.bf16.msra.mxu0 %v1752
      %1845 = vmatprep.subr.bf16.mxu0 %v1757
      %1846 = vmatpush1.bf16.msra.mxu0 %v1756
      %1847 = vmatprep.subr.bf16.mxu0 0
      %1848 = vmatpush1.bf16.msra.mxu0 0
      %1849 = vmatprep.subr.bf16.mxu0 0
      %1850 = vmatpush1.bf16.msra.mxu0 0
      %1851 = vmatprep.subr.bf16.mxu0 0
      %1852 = vmatpush1.bf16.msra.mxu0 0
      %1853 = vmatprep.subr.bf16.mxu0 0
      %1854 = vmatpush1.bf16.msra.mxu0 0
      %1855 = vmatprep.subr.bf16.mxu0 0
      %1856 = vmatpush1.bf16.msra.mxu0 0
      %1857 = vmatprep.subr.bf16.mxu0 0
      %1858 = vmatpush1.bf16.msra.mxu0 0
      %1859 = vmatprep.subr.bf16.mxu0 0
      %1860 = vmatpush1.bf16.msra.mxu0 0
      %1861 = vmatprep.subr.bf16.mxu0 0
      %1862 = vmatpush1.bf16.msra.mxu0 0
      %1863 = vmatprep.subr.bf16.mxu0 0
      %1864 = vmatpush1.bf16.msra.mxu0 0
      %1865 = vmatprep.subr.bf16.mxu0 0
      %1866 = vmatpush1.bf16.msra.mxu0 0
      %1867 = vmatprep.subr.bf16.mxu0 0
      %1868 = vmatpush1.bf16.msra.mxu0 0
      %1869 = vmatprep.subr.bf16.mxu0 0
      %1870 = vmatpush1.bf16.msra.mxu0 0
      %1871 = vmatprep.mubr.bf16.mxu0 0
      %1872 = vmatmul.mubr.bf16.gmra.mrb[0].mxu0 %v1796
      %v1873 = vpop.f32.mrb[0].mxu0
      %v1874 = vadd.f32 %v1786, %v1873
      %v1875 = vpop.f32.mrb[0].mxu0
      %v1876 = vadd.f32 %v1790, %v1875
      %v1877 = vpop.f32.mrb[0].mxu0
      %v1878 = vpop.f32.mrb[0].mxu0
      %1879 = vdwg.mxu0
      %v1880 = vmax.f32 %v1833, 0.0
      %v1881 = vmax.f32 %v1835, 0.0
      %v1882 = vmax.f32 %v1874, 0.0
      %v1883 = vmax.f32 %v1876, 0.0
      %v1884 = vpack.c.bf16 %v1880, %v1880
      %v1885 = vpack.c.bf16 %v1881, %v1881
      %v1886 = vpack.c.bf16 %v1882, %v1882
      %v1887 = vpack.c.bf16 %v1883, %v1883
      %v1888 = vld [vmem:[%s9] sm:$0xff]
      %v1889 = vld [vmem:[%s9 + $0x8] sm:$0xf]
      %v1890 = vld [vmem:[%s9 + $0xc] sm:$0xff]
      %v1891 = vld [vmem:[%s9 + $0x14] sm:$0xf]
      %v1892 = vld [vmem:[%s9 + $0x18] sm:$0xff]
      %v1893 = vld [vmem:[%s9 + $0x20] sm:$0xf]
      %v1894 = vld [vmem:[%s9 + $0x24] sm:$0xff]
      %v1895 = vld [vmem:[%s9 + $0x2c] sm:$0xf]
      %v1896 = vld [vmem:[%s9 + $0x30] sm:$0xff]
      %v1897 = vld [vmem:[%s9 + $0x38] sm:$0xf]
      %v1898 = vld [vmem:[%s9 + $0x3c] sm:$0xff]
      %v1899 = vld [vmem:[%s9 + $0x44] sm:$0xf]
      %v1900 = vld [vmem:[%s9 + $0x48] sm:$0xff]
      %v1901 = vld [vmem:[%s9 + $0x50] sm:$0xf]
      %v1902 = vld [vmem:[%s9 + $0x54] sm:$0xff]
      %v1903 = vld [vmem:[%s9 + $0x5c] sm:$0xf]
      %v1904 = vld [vmem:[%s9 + $0x60] sm:$0xff]
      %v1905 = vld [vmem:[%s9 + $0x68] sm:$0xf]
      %v1906 = vld [vmem:[%s9 + $0x6c] sm:$0xff]
      %v1907 = vld [vmem:[%s9 + $0x74] sm:$0xf]
      %v1908 = vld [vmem:[%s9 + $0x78] sm:$0xff]
      %v1909 = vld [vmem:[%s9 + $0x80] sm:$0xf]
      %v1910 = vld [vmem:[%s9 + $0x84] sm:$0xff]
      %v1911 = vld [vmem:[%s9 + $0x8c] sm:$0xf]
      %v1912 = vld [vmem:[%s9 + $0x90] sm:$0xff]
      %v1913 = vld [vmem:[%s9 + $0x98] sm:$0xf]
      %v1914 = vld [vmem:[%s9 + $0x9c] sm:$0xff]
      %v1915 = vld [vmem:[%s9 + $0xa4] sm:$0xf]
      %v1916 = vld [vmem:[%s9 + $0xa8] sm:$0xff]
      %v1917 = vld [vmem:[%s9 + $0xb0] sm:$0xf]
      %v1918 = vld [vmem:[%s9 + $0xb4] sm:$0xff]
      %v1919 = vld [vmem:[%s9 + $0xbc] sm:$0xf]
      %v1920 = vld [vmem:[%s9 + $0xc0] sm:$0xff]
      %v1921 = vld [vmem:[%s9 + $0xc8] sm:$0xf]
      %v1922 = vld [vmem:[%s9 + $0xcc] sm:$0xff]
      %v1923 = vld [vmem:[%s9 + $0xd4] sm:$0xf]
      %v1924 = vld [vmem:[%s9 + $0xd8] sm:$0xff]
      %v1925 = vld [vmem:[%s9 + $0xe0] sm:$0xf]
      %v1926 = vld [vmem:[%s9 + $0xe4] sm:$0xff]
      %v1927 = vld [vmem:[%s9 + $0xec] sm:$0xf]
      %v1928 = vld [vmem:[%s9 + $0xf0] sm:$0xff]
      %v1929 = vld [vmem:[%s9 + $0xf8] sm:$0xf]
      %v1930 = vld [vmem:[%s9 + $0xfc] sm:$0xff]
      %v1931 = vld [vmem:[%s9 + $0x104] sm:$0xf]
      %v1932 = vld [vmem:[%s9 + $0x108] sm:$0xff]
      %v1933 = vld [vmem:[%s9 + $0x110] sm:$0xf]
      %v1934 = vld [vmem:[%s9 + $0x114] sm:$0xff]
      %v1935 = vld [vmem:[%s9 + $0x11c] sm:$0xf]
      %v1936 = vld [vmem:[%s9 + $0x120] sm:$0xff]
      %v1937 = vld [vmem:[%s9 + $0x128] sm:$0xf]
      %v1938 = vld [vmem:[%s9 + $0x12c] sm:$0xff]
      %v1939 = vld [vmem:[%s9 + $0x134] sm:$0xf]
      %v1940 = vld [vmem:[%s9 + $0x138] sm:$0xff]
      %v1941 = vld [vmem:[%s9 + $0x140] sm:$0xf]
      %v1942 = vld [vmem:[%s9 + $0x144] sm:$0xff]
      %v1943 = vld [vmem:[%s9 + $0x14c] sm:$0xf]
      %v1944 = vld [vmem:[%s9 + $0x150] sm:$0xff]
      %v1945 = vld [vmem:[%s9 + $0x158] sm:$0xf]
      %v1946 = vld [vmem:[%s9 + $0x15c] sm:$0xff]
      %v1947 = vld [vmem:[%s9 + $0x164] sm:$0xf]
      %v1948 = vld [vmem:[%s9 + $0x168] sm:$0xff]
      %v1949 = vld [vmem:[%s9 + $0x170] sm:$0xf]
      %v1950 = vld [vmem:[%s9 + $0x174] sm:$0xff]
      %v1951 = vld [vmem:[%s9 + $0x17c] sm:$0xf]
      %v1952 = vld [vmem:[%s9 + $0x180] sm:$0xff]
      %v1953 = vld [vmem:[%s9 + $0x188] sm:$0xf]
      %v1954 = vld [vmem:[%s9 + $0x18c] sm:$0xff]
      %v1955 = vld [vmem:[%s9 + $0x194] sm:$0xf]
      %v1956 = vld [vmem:[%s9 + $0x198] sm:$0xff]
      %v1957 = vld [vmem:[%s9 + $0x1a0] sm:$0xf]
      %v1958 = vld [vmem:[%s9 + $0x1a4] sm:$0xff]
      %v1959 = vld [vmem:[%s9 + $0x1ac] sm:$0xf]
      %v1960 = vld [vmem:[%s9 + $0x1b0] sm:$0xff]
      %v1961 = vld [vmem:[%s9 + $0x1b8] sm:$0xf]
      %v1962 = vld [vmem:[%s9 + $0x1bc] sm:$0xff]
      %v1963 = vld [vmem:[%s9 + $0x1c4] sm:$0xf]
      %v1964 = vld [vmem:[%s9 + $0x1c8] sm:$0xff]
      %v1965 = vld [vmem:[%s9 + $0x1d0] sm:$0xf]
      %v1966 = vld [vmem:[%s9 + $0x1d4] sm:$0xff]
      %v1967 = vld [vmem:[%s9 + $0x1dc] sm:$0xf]
      %v1968 = vld [vmem:[%s9 + $0x1e0] sm:$0xff]
      %v1969 = vld [vmem:[%s9 + $0x1e8] sm:$0xf]
      %v1970 = vld [vmem:[%s9 + $0x1ec] sm:$0xff]
      %v1971 = vld [vmem:[%s9 + $0x1f4] sm:$0xf]
      %v1972 = vld [vmem:[%s9 + $0x1f8] sm:$0xff]
      %v1973 = vld [vmem:[%s9 + $0x200] sm:$0xf]
      %v1974 = vld [vmem:[%s9 + $0x204] sm:$0xff]
      %v1975 = vld [vmem:[%s9 + $0x20c] sm:$0xf]
      %v1976 = vld [vmem:[%s9 + $0x210] sm:$0xff]
      %v1977 = vld [vmem:[%s9 + $0x218] sm:$0xf]
      %v1978 = vld [vmem:[%s9 + $0x21c] sm:$0xff]
      %v1979 = vld [vmem:[%s9 + $0x224] sm:$0xf]
      %v1980 = vld [vmem:[%s9 + $0x228] sm:$0xff]
      %v1981 = vld [vmem:[%s9 + $0x230] sm:$0xf]
      %v1982 = vld [vmem:[%s9 + $0x234] sm:$0xff]
      %v1983 = vld [vmem:[%s9 + $0x23c] sm:$0xf]
      %v1984 = vld [vmem:[%s9 + $0x240] sm:$0xff]
      %v1985 = vld [vmem:[%s9 + $0x248] sm:$0xf]
      %v1986 = vld [vmem:[%s9 + $0x24c] sm:$0xff]
      %v1987 = vld [vmem:[%s9 + $0x254] sm:$0xf]
      %v1988 = vld [vmem:[%s9 + $0x258] sm:$0xff]
      %v1989 = vld [vmem:[%s9 + $0x260] sm:$0xf]
      %v1990 = vld [vmem:[%s9 + $0x264] sm:$0xff]
      %v1991 = vld [vmem:[%s9 + $0x26c] sm:$0xf]
      %v1992 = vld [vmem:[%s9 + $0x270] sm:$0xff]
      %v1993 = vld [vmem:[%s9 + $0x278] sm:$0xf]
      %v1994 = vld [vmem:[%s9 + $0x27c] sm:$0xff]
      %v1995 = vld [vmem:[%s9 + $0x284] sm:$0xf]
      %v1996 = vld [vmem:[%s9 + $0x288] sm:$0xff]
      %v1997 = vld [vmem:[%s9 + $0x290] sm:$0xf]
      %v1998 = vld [vmem:[%s9 + $0x294] sm:$0xff]
      %v1999 = vld [vmem:[%s9 + $0x29c] sm:$0xf]
      %v2000 = vld [vmem:[%s9 + $0x2a0] sm:$0xff]
      %v2001 = vld [vmem:[%s9 + $0x2a8] sm:$0xf]
      %v2002 = vld [vmem:[%s9 + $0x2ac] sm:$0xff]
      %v2003 = vld [vmem:[%s9 + $0x2b4] sm:$0xf]
      %v2004 = vld [vmem:[%s9 + $0x2b8] sm:$0xff]
      %v2005 = vld [vmem:[%s9 + $0x2c0] sm:$0xf]
      %v2006 = vld [vmem:[%s9 + $0x2c4] sm:$0xff]
      %v2007 = vld [vmem:[%s9 + $0x2cc] sm:$0xf]
      %v2008 = vld [vmem:[%s9 + $0x2d0] sm:$0xff]
      %v2009 = vld [vmem:[%s9 + $0x2d8] sm:$0xf]
      %v2010 = vld [vmem:[%s9 + $0x2dc] sm:$0xff]
      %v2011 = vld [vmem:[%s9 + $0x2e4] sm:$0xf]
      %v2012 = vld [vmem:[%s9 + $0x2e8] sm:$0xff]
      %v2013 = vld [vmem:[%s9 + $0x2f0] sm:$0xf]
      %v2014 = vld [vmem:[%s9 + $0x2f4] sm:$0xff]
      %v2015 = vld [vmem:[%s9 + $0x2fc] sm:$0xf]
      %v2016 = vld [vmem:[%s10] sm:$0x7]
      %v2145 = vunpack.c.l.b16 %v1888
      %v2146 = vunpack.c.h.b16 %v1888
      %v2147 = vunpack.c.l.b16 %v1889
      %v2148 = vunpack.c.l.b16 %v1890
      %v2149 = vunpack.c.h.b16 %v1890
      %v2150 = vunpack.c.l.b16 %v1891
      %v2151 = vunpack.c.l.b16 %v1892
      %v2152 = vunpack.c.h.b16 %v1892
      %v2153 = vunpack.c.l.b16 %v1893
      %v2154 = vunpack.c.l.b16 %v1894
      %v2155 = vunpack.c.h.b16 %v1894
      %v2156 = vunpack.c.l.b16 %v1895
      %v2157 = vunpack.c.l.b16 %v1896
      %v2158 = vunpack.c.h.b16 %v1896
      %v2159 = vunpack.c.l.b16 %v1897
      %v2160 = vunpack.c.l.b16 %v1898
      %v2161 = vunpack.c.h.b16 %v1898
      %v2162 = vunpack.c.l.b16 %v1899
      %v2163 = vunpack.c.l.b16 %v1900
      %v2164 = vunpack.c.h.b16 %v1900
      %v2165 = vunpack.c.l.b16 %v1901
      %v2166 = vunpack.c.l.b16 %v1902
      %v2167 = vunpack.c.h.b16 %v1902
      %v2168 = vunpack.c.l.b16 %v1903
      %v2169 = vunpack.c.l.b16 %v1904
      %v2170 = vunpack.c.h.b16 %v1904
      %v2171 = vunpack.c.l.b16 %v1905
      %v2172 = vunpack.c.l.b16 %v1906
      %v2173 = vunpack.c.h.b16 %v1906
      %v2174 = vunpack.c.l.b16 %v1907
      %v2175 = vunpack.c.l.b16 %v1908
      %v2176 = vunpack.c.h.b16 %v1908
      %v2177 = vunpack.c.l.b16 %v1909
      %v2178 = vunpack.c.l.b16 %v1910
      %v2179 = vunpack.c.h.b16 %v1910
      %v2180 = vunpack.c.l.b16 %v1911
      %v2181 = vunpack.c.l.b16 %v1912
      %v2182 = vunpack.c.h.b16 %v1912
      %v2183 = vunpack.c.l.b16 %v1913
      %v2184 = vunpack.c.l.b16 %v1914
      %v2185 = vunpack.c.h.b16 %v1914
      %v2186 = vunpack.c.l.b16 %v1915
      %v2187 = vunpack.c.l.b16 %v1916
      %v2188 = vunpack.c.h.b16 %v1916
      %v2189 = vunpack.c.l.b16 %v1917
      %v2190 = vunpack.c.l.b16 %v1918
      %v2191 = vunpack.c.h.b16 %v1918
      %v2192 = vunpack.c.l.b16 %v1919
      %v2193 = vunpack.c.l.b16 %v1920
      %v2194 = vunpack.c.h.b16 %v1920
      %v2195 = vunpack.c.l.b16 %v1921
      %v2196 = vunpack.c.l.b16 %v1922
      %v2197 = vunpack.c.h.b16 %v1922
      %v2198 = vunpack.c.l.b16 %v1923
      %v2199 = vunpack.c.l.b16 %v1924
      %v2200 = vunpack.c.h.b16 %v1924
      %v2201 = vunpack.c.l.b16 %v1925
      %v2202 = vunpack.c.l.b16 %v1926
      %v2203 = vunpack.c.h.b16 %v1926
      %v2204 = vunpack.c.l.b16 %v1927
      %v2205 = vunpack.c.l.b16 %v1928
      %v2206 = vunpack.c.h.b16 %v1928
      %v2207 = vunpack.c.l.b16 %v1929
      %v2208 = vunpack.c.l.b16 %v1930
      %v2209 = vunpack.c.h.b16 %v1930
      %v2210 = vunpack.c.l.b16 %v1931
      %v2211 = vunpack.c.l.b16 %v1932
      %v2212 = vunpack.c.h.b16 %v1932
      %v2213 = vunpack.c.l.b16 %v1933
      %v2214 = vunpack.c.l.b16 %v1934
      %v2215 = vunpack.c.h.b16 %v1934
      %v2216 = vunpack.c.l.b16 %v1935
      %v2217 = vunpack.c.l.b16 %v1936
      %v2218 = vunpack.c.h.b16 %v1936
      %v2219 = vunpack.c.l.b16 %v1937
      %v2220 = vunpack.c.l.b16 %v1938
      %v2221 = vunpack.c.h.b16 %v1938
      %v2222 = vunpack.c.l.b16 %v1939
      %v2223 = vunpack.c.l.b16 %v1940
      %v2224 = vunpack.c.h.b16 %v1940
      %v2225 = vunpack.c.l.b16 %v1941
      %v2226 = vunpack.c.l.b16 %v1942
      %v2227 = vunpack.c.h.b16 %v1942
      %v2228 = vunpack.c.l.b16 %v1943
      %v2229 = vunpack.c.l.b16 %v1944
      %v2230 = vunpack.c.h.b16 %v1944
      %v2231 = vunpack.c.l.b16 %v1945
      %v2232 = vunpack.c.l.b16 %v1946
      %v2233 = vunpack.c.h.b16 %v1946
      %v2234 = vunpack.c.l.b16 %v1947
      %v2235 = vunpack.c.l.b16 %v1948
      %v2236 = vunpack.c.h.b16 %v1948
      %v2237 = vunpack.c.l.b16 %v1949
      %v2238 = vunpack.c.l.b16 %v1950
      %v2239 = vunpack.c.h.b16 %v1950
      %v2240 = vunpack.c.l.b16 %v1951
      %v2241 = vunpack.c.l.b16 %v1952
      %v2242 = vunpack.c.h.b16 %v1952
      %v2243 = vunpack.c.l.b16 %v1953
      %v2244 = vunpack.c.l.b16 %v1954
      %v2245 = vunpack.c.h.b16 %v1954
      %v2246 = vunpack.c.l.b16 %v1955
      %v2247 = vunpack.c.l.b16 %v1956
      %v2248 = vunpack.c.h.b16 %v1956
      %v2249 = vunpack.c.l.b16 %v1957
      %v2250 = vunpack.c.l.b16 %v1958
      %v2251 = vunpack.c.h.b16 %v1958
      %v2252 = vunpack.c.l.b16 %v1959
      %v2253 = vunpack.c.l.b16 %v1960
      %v2254 = vunpack.c.h.b16 %v1960
      %v2255 = vunpack.c.l.b16 %v1961
      %v2256 = vunpack.c.l.b16 %v1962
      %v2257 = vunpack.c.h.b16 %v1962
      %v2258 = vunpack.c.l.b16 %v1963
      %v2259 = vunpack.c.l.b16 %v1964
      %v2260 = vunpack.c.h.b16 %v1964
      %v2261 = vunpack.c.l.b16 %v1965
      %v2262 = vunpack.c.l.b16 %v1966
      %v2263 = vunpack.c.h.b16 %v1966
      %v2264 = vunpack.c.l.b16 %v1967
      %v2265 = vunpack.c.l.b16 %v1968
      %v2266 = vunpack.c.h.b16 %v1968
      %v2267 = vunpack.c.l.b16 %v1969
      %v2268 = vunpack.c.l.b16 %v1970
      %v2269 = vunpack.c.h.b16 %v1970
      %v2270 = vunpack.c.l.b16 %v1971
      %v2271 = vunpack.c.l.b16 %v1972
      %v2272 = vunpack.c.h.b16 %v1972
      %v2273 = vunpack.c.l.b16 %v1973
      %v2274 = vunpack.c.l.b16 %v1974
      %v2275 = vunpack.c.h.b16 %v1974
      %v2276 = vunpack.c.l.b16 %v1975
      %v2277 = vunpack.c.l.b16 %v1976
      %v2278 = vunpack.c.h.b16 %v1976
      %v2279 = vunpack.c.l.b16 %v1977
      %v2280 = vunpack.c.l.b16 %v1978
      %v2281 = vunpack.c.h.b16 %v1978
      %v2282 = vunpack.c.l.b16 %v1979
      %v2283 = vunpack.c.l.b16 %v1980
      %v2284 = vunpack.c.h.b16 %v1980
      %v2285 = vunpack.c.l.b16 %v1981
      %v2286 = vunpack.c.l.b16 %v1982
      %v2287 = vunpack.c.h.b16 %v1982
      %v2288 = vunpack.c.l.b16 %v1983
      %v2289 = vunpack.c.l.b16 %v1984
      %v2290 = vunpack.c.h.b16 %v1984
      %v2291 = vunpack.c.l.b16 %v1985
      %v2292 = vunpack.c.l.b16 %v1986
      %v2293 = vunpack.c.h.b16 %v1986
      %v2294 = vunpack.c.l.b16 %v1987
      %v2295 = vunpack.c.l.b16 %v1988
      %v2296 = vunpack.c.h.b16 %v1988
      %v2297 = vunpack.c.l.b16 %v1989
      %v2298 = vunpack.c.l.b16 %v1990
      %v2299 = vunpack.c.h.b16 %v1990
      %v2300 = vunpack.c.l.b16 %v1991
      %v2301 = vunpack.c.l.b16 %v1992
      %v2302 = vunpack.c.h.b16 %v1992
      %v2303 = vunpack.c.l.b16 %v1993
      %v2304 = vunpack.c.l.b16 %v1994
      %v2305 = vunpack.c.h.b16 %v1994
      %v2306 = vunpack.c.l.b16 %v1995
      %v2307 = vunpack.c.l.b16 %v1996
      %v2308 = vunpack.c.h.b16 %v1996
      %v2309 = vunpack.c.l.b16 %v1997
      %v2310 = vunpack.c.l.b16 %v1998
      %v2311 = vunpack.c.h.b16 %v1998
      %v2312 = vunpack.c.l.b16 %v1999
      %v2313 = vunpack.c.l.b16 %v2000
      %v2314 = vunpack.c.h.b16 %v2000
      %v2315 = vunpack.c.l.b16 %v2001
      %v2316 = vunpack.c.l.b16 %v2002
      %v2317 = vunpack.c.h.b16 %v2002
      %v2318 = vunpack.c.l.b16 %v2003
      %v2319 = vunpack.c.l.b16 %v2004
      %v2320 = vunpack.c.h.b16 %v2004
      %v2321 = vunpack.c.l.b16 %v2005
      %v2322 = vunpack.c.l.b16 %v2006
      %v2323 = vunpack.c.h.b16 %v2006
      %v2324 = vunpack.c.l.b16 %v2007
      %v2325 = vunpack.c.l.b16 %v2008
      %v2326 = vunpack.c.h.b16 %v2008
      %v2327 = vunpack.c.l.b16 %v2009
      %v2328 = vunpack.c.l.b16 %v2010
      %v2329 = vunpack.c.h.b16 %v2010
      %v2330 = vunpack.c.l.b16 %v2011
      %v2331 = vunpack.c.l.b16 %v2012
      %v2332 = vunpack.c.h.b16 %v2012
      %v2333 = vunpack.c.l.b16 %v2013
      %v2334 = vunpack.c.l.b16 %v2014
      %v2335 = vunpack.c.h.b16 %v2014
      %v2336 = vunpack.c.l.b16 %v2015
      %v2337 = vpack.c.b16 %v2148, %v2145
      %v2338 = vpack.c.b16 %v2149, %v2146
      %v2339 = vpack.c.b16 %v2150, %v2147
      %v2340 = vpack.c.b16 %v2154, %v2151
      %v2341 = vpack.c.b16 %v2155, %v2152
      %v2342 = vpack.c.b16 %v2156, %v2153
      %v2343 = vpack.c.b16 %v2160, %v2157
      %v2344 = vpack.c.b16 %v2161, %v2158
      %v2345 = vpack.c.b16 %v2162, %v2159
      %v2346 = vpack.c.b16 %v2166, %v2163
      %v2347 = vpack.c.b16 %v2167, %v2164
      %v2348 = vpack.c.b16 %v2168, %v2165
      %v2349 = vpack.c.b16 %v2172, %v2169
      %v2350 = vpack.c.b16 %v2173, %v2170
      %v2351 = vpack.c.b16 %v2174, %v2171
      %v2352 = vpack.c.b16 %v2178, %v2175
      %v2353 = vpack.c.b16 %v2179, %v2176
      %v2354 = vpack.c.b16 %v2180, %v2177
      %v2355 = vpack.c.b16 %v2184, %v2181
      %v2356 = vpack.c.b16 %v2185, %v2182
      %v2357 = vpack.c.b16 %v2186, %v2183
      %v2358 = vpack.c.b16 %v2190, %v2187
      %v2359 = vpack.c.b16 %v2191, %v2188
      %v2360 = vpack.c.b16 %v2192, %v2189
      %v2361 = vpack.c.b16 %v2196, %v2193
      %v2362 = vpack.c.b16 %v2197, %v2194
      %v2363 = vpack.c.b16 %v2198, %v2195
      %v2364 = vpack.c.b16 %v2202, %v2199
      %v2365 = vpack.c.b16 %v2203, %v2200
      %v2366 = vpack.c.b16 %v2204, %v2201
      %v2367 = vpack.c.b16 %v2208, %v2205
      %v2368 = vpack.c.b16 %v2209, %v2206
      %v2369 = vpack.c.b16 %v2210, %v2207
      %v2370 = vpack.c.b16 %v2214, %v2211
      %v2371 = vpack.c.b16 %v2215, %v2212
      %v2372 = vpack.c.b16 %v2216, %v2213
      %v2373 = vpack.c.b16 %v2220, %v2217
      %v2374 = vpack.c.b16 %v2221, %v2218
      %v2375 = vpack.c.b16 %v2222, %v2219
      %v2376 = vpack.c.b16 %v2226, %v2223
      %v2377 = vpack.c.b16 %v2227, %v2224
      %v2378 = vpack.c.b16 %v2228, %v2225
      %v2379 = vpack.c.b16 %v2232, %v2229
      %v2380 = vpack.c.b16 %v2233, %v2230
      %v2381 = vpack.c.b16 %v2234, %v2231
      %v2382 = vpack.c.b16 %v2238, %v2235
      %v2383 = vpack.c.b16 %v2239, %v2236
      %v2384 = vpack.c.b16 %v2240, %v2237
      %v2385 = vpack.c.b16 %v2244, %v2241
      %v2386 = vpack.c.b16 %v2245, %v2242
      %v2387 = vpack.c.b16 %v2246, %v2243
      %v2388 = vpack.c.b16 %v2250, %v2247
      %v2389 = vpack.c.b16 %v2251, %v2248
      %v2390 = vpack.c.b16 %v2252, %v2249
      %v2391 = vpack.c.b16 %v2256, %v2253
      %v2392 = vpack.c.b16 %v2257, %v2254
      %v2393 = vpack.c.b16 %v2258, %v2255
      %v2394 = vpack.c.b16 %v2262, %v2259
      %v2395 = vpack.c.b16 %v2263, %v2260
      %v2396 = vpack.c.b16 %v2264, %v2261
      %v2397 = vpack.c.b16 %v2268, %v2265
      %v2398 = vpack.c.b16 %v2269, %v2266
      %v2399 = vpack.c.b16 %v2270, %v2267
      %v2400 = vpack.c.b16 %v2274, %v2271
      %v2401 = vpack.c.b16 %v2275, %v2272
      %v2402 = vpack.c.b16 %v2276, %v2273
      %v2403 = vpack.c.b16 %v2280, %v2277
      %v2404 = vpack.c.b16 %v2281, %v2278
      %v2405 = vpack.c.b16 %v2282, %v2279
      %v2406 = vpack.c.b16 %v2286, %v2283
      %v2407 = vpack.c.b16 %v2287, %v2284
      %v2408 = vpack.c.b16 %v2288, %v2285
      %v2409 = vpack.c.b16 %v2292, %v2289
      %v2410 = vpack.c.b16 %v2293, %v2290
      %v2411 = vpack.c.b16 %v2294, %v2291
      %v2412 = vpack.c.b16 %v2298, %v2295
      %v2413 = vpack.c.b16 %v2299, %v2296
      %v2414 = vpack.c.b16 %v2300, %v2297
      %v2415 = vpack.c.b16 %v2304, %v2301
      %v2416 = vpack.c.b16 %v2305, %v2302
      %v2417 = vpack.c.b16 %v2306, %v2303
      %v2418 = vpack.c.b16 %v2310, %v2307
      %v2419 = vpack.c.b16 %v2311, %v2308
      %v2420 = vpack.c.b16 %v2312, %v2309
      %v2421 = vpack.c.b16 %v2316, %v2313
      %v2422 = vpack.c.b16 %v2317, %v2314
      %v2423 = vpack.c.b16 %v2318, %v2315
      %v2424 = vpack.c.b16 %v2322, %v2319
      %v2425 = vpack.c.b16 %v2323, %v2320
      %v2426 = vpack.c.b16 %v2324, %v2321
      %v2427 = vpack.c.b16 %v2328, %v2325
      %v2428 = vpack.c.b16 %v2329, %v2326
      %v2429 = vpack.c.b16 %v2330, %v2327
      %v2430 = vpack.c.b16 %v2334, %v2331
      %v2431 = vpack.c.b16 %v2335, %v2332
      %v2432 = vpack.c.b16 %v2336, %v2333
      %v2530 = vlaneseq
      %v2531 = vshrl.u32 %v2530, 7
      %v2532 = vsub.s32 0, %v2531
      %v2533 = vrot.slane %v2016, %v2532
      %v2534 = vlaneseq
      %v2535 = vshrl.u32 %v2534, 7
      %v2536 = vsub.s32 1, %v2535
      %v2537 = vrot.slane %v2016, %v2536
      %v2538 = vlaneseq
      %v2539 = vshrl.u32 %v2538, 7
      %v2540 = vsub.s32 2, %v2539
      %v2541 = vrot.slane %v2016, %v2540
      %2545 = vmatprep.subr.bf16.mxu0 %v2338
      %2546 = vmatpush1.bf16.msra.mxu0 %v2337
      %2547 = vmatprep.subr.bf16.mxu0 %v2341
      %2548 = vmatpush1.bf16.msra.mxu0 %v2340
      %2549 = vmatprep.subr.bf16.mxu0 %v2344
      %2550 = vmatpush1.bf16.msra.mxu0 %v2343
      %2551 = vmatprep.subr.bf16.mxu0 %v2347
      %2552 = vmatpush1.bf16.msra.mxu0 %v2346
      %2553 = vmatprep.subr.bf16.mxu0 %v2350
      %2554 = vmatpush1.bf16.msra.mxu0 %v2349
      %2555 = vmatprep.subr.bf16.mxu0 %v2353
      %2556 = vmatpush1.bf16.msra.mxu0 %v2352
      %2557 = vmatprep.subr.bf16.mxu0 %v2356
      %2558 = vmatpush1.bf16.msra.mxu0 %v2355
      %2559 = vmatprep.subr.bf16.mxu0 %v2359
      %2560 = vmatpush1.bf16.msra.mxu0 %v2358
      %2561 = vmatprep.subr.bf16.mxu0 %v2362
      %2562 = vmatpush1.bf16.msra.mxu0 %v2361
      %2563 = vmatprep.subr.bf16.mxu0 %v2365
      %2564 = vmatpush1.bf16.msra.mxu0 %v2364
      %2565 = vmatprep.subr.bf16.mxu0 %v2368
      %2566 = vmatpush1.bf16.msra.mxu0 %v2367
      %2567 = vmatprep.subr.bf16.mxu0 %v2371
      %2568 = vmatpush1.bf16.msra.mxu0 %v2370
      %2569 = vmatprep.subr.bf16.mxu0 %v2374
      %2570 = vmatpush1.bf16.msra.mxu0 %v2373
      %2571 = vmatprep.subr.bf16.mxu0 %v2377
      %2572 = vmatpush1.bf16.msra.mxu0 %v2376
      %2573 = vmatprep.subr.bf16.mxu0 %v2380
      %2574 = vmatpush1.bf16.msra.mxu0 %v2379
      %2575 = vmatprep.subr.bf16.mxu0 %v2383
      %2576 = vmatpush1.bf16.msra.mxu0 %v2382
      %2577 = vmatprep.mubr.bf16.mxu0 %v1885
      %2578 = vmatmul.mubr.bf16.gmra.mrb[0].mxu0 %v1884
      %v2579 = vpop.f32.mrb[0].mxu0
      %v2580 = vadd.f32 %v2533, %v2579
      %v2581 = vpop.f32.mrb[0].mxu0
      %v2582 = vadd.f32 %v2537, %v2581
      %v2583 = vpop.f32.mrb[0].mxu0
      %v2584 = vpop.f32.mrb[0].mxu0
      %2585 = vdwg.mxu0
      %2586 = vmatprep.subr.bf16.mxu0 %v2386
      %2587 = vmatpush1.bf16.msra.mxu0 %v2385
      %2588 = vmatprep.subr.bf16.mxu0 %v2389
      %2589 = vmatpush1.bf16.msra.mxu0 %v2388
      %2590 = vmatprep.subr.bf16.mxu0 %v2392
      %2591 = vmatpush1.bf16.msra.mxu0 %v2391
      %2592 = vmatprep.subr.bf16.mxu0 %v2395
      %2593 = vmatpush1.bf16.msra.mxu0 %v2394
      %2594 = vmatprep.subr.bf16.mxu0 %v2398
      %2595 = vmatpush1.bf16.msra.mxu0 %v2397
      %2596 = vmatprep.subr.bf16.mxu0 %v2401
      %2597 = vmatpush1.bf16.msra.mxu0 %v2400
      %2598 = vmatprep.subr.bf16.mxu0 %v2404
      %2599 = vmatpush1.bf16.msra.mxu0 %v2403
      %2600 = vmatprep.subr.bf16.mxu0 %v2407
      %2601 = vmatpush1.bf16.msra.mxu0 %v2406
      %2602 = vmatprep.subr.bf16.mxu0 %v2410
      %2603 = vmatpush1.bf16.msra.mxu0 %v2409
      %2604 = vmatprep.subr.bf16.mxu0 %v2413
      %2605 = vmatpush1.bf16.msra.mxu0 %v2412
      %2606 = vmatprep.subr.bf16.mxu0 %v2416
      %2607 = vmatpush1.bf16.msra.mxu0 %v2415
      %2608 = vmatprep.subr.bf16.mxu0 %v2419
      %2609 = vmatpush1.bf16.msra.mxu0 %v2418
      %2610 = vmatprep.subr.bf16.mxu0 %v2422
      %2611 = vmatpush1.bf16.msra.mxu0 %v2421
      %2612 = vmatprep.subr.bf16.mxu0 %v2425
      %2613 = vmatpush1.bf16.msra.mxu0 %v2424
      %2614 = vmatprep.subr.bf16.mxu0 %v2428
      %2615 = vmatpush1.bf16.msra.mxu0 %v2427
      %2616 = vmatprep.subr.bf16.mxu0 %v2431
      %2617 = vmatpush1.bf16.msra.mxu0 %v2430
      %2618 = vmatprep.mubr.bf16.mxu0 %v1887
      %2619 = vmatmul.mubr.bf16.gmra.mrb[0].mxu0 %v1886
      %v2620 = vpop.f32.mrb[0].mxu0
      %v2621 = vadd.f32 %v2580, %v2620
      %v2622 = vpop.f32.mrb[0].mxu0
      %v2623 = vadd.f32 %v2582, %v2622
      %v2624 = vpop.f32.mrb[0].mxu0
      %v2625 = vpop.f32.mrb[0].mxu0
      %2626 = vdwg.mxu0
      %2627 = vmatprep.subr.bf16.mxu0 0
      %2628 = vmatpush1.bf16.msra.mxu0 %v2339
      %2629 = vmatprep.subr.bf16.mxu0 0
      %2630 = vmatpush1.bf16.msra.mxu0 %v2342
      %2631 = vmatprep.subr.bf16.mxu0 0
      %2632 = vmatpush1.bf16.msra.mxu0 %v2345
      %2633 = vmatprep.subr.bf16.mxu0 0
      %2634 = vmatpush1.bf16.msra.mxu0 %v2348
      %2635 = vmatprep.subr.bf16.mxu0 0
      %2636 = vmatpush1.bf16.msra.mxu0 %v2351
      %2637 = vmatprep.subr.bf16.mxu0 0
      %2638 = vmatpush1.bf16.msra.mxu0 %v2354
      %2639 = vmatprep.subr.bf16.mxu0 0
      %2640 = vmatpush1.bf16.msra.mxu0 %v2357
      %2641 = vmatprep.subr.bf16.mxu0 0
      %2642 = vmatpush1.bf16.msra.mxu0 %v2360
      %2643 = vmatprep.subr.bf16.mxu0 0
      %2644 = vmatpush1.bf16.msra.mxu0 %v2363
      %2645 = vmatprep.subr.bf16.mxu0 0
      %2646 = vmatpush1.bf16.msra.mxu0 %v2366
      %2647 = vmatprep.subr.bf16.mxu0 0
      %2648 = vmatpush1.bf16.msra.mxu0 %v2369
      %2649 = vmatprep.subr.bf16.mxu0 0
      %2650 = vmatpush1.bf16.msra.mxu0 %v2372
      %2651 = vmatprep.subr.bf16.mxu0 0
      %2652 = vmatpush1.bf16.msra.mxu0 %v2375
      %2653 = vmatprep.subr.bf16.mxu0 0
      %2654 = vmatpush1.bf16.msra.mxu0 %v2378
      %2655 = vmatprep.subr.bf16.mxu0 0
      %2656 = vmatpush1.bf16.msra.mxu0 %v2381
      %2657 = vmatprep.subr.bf16.mxu0 0
      %2658 = vmatpush1.bf16.msra.mxu0 %v2384
      %2659 = vmatprep.mubr.bf16.mxu0 %v1885
      %2660 = vmatmul.mubr.bf16.gmra.mrb[0].mxu0 %v1884
      %v2661 = vpop.f32.mrb[0].mxu0
      %v2662 = vadd.f32 %v2541, %v2661
      %v2663 = vpop.f32.mrb[0].mxu0
      %v2664 = vpop.f32.mrb[0].mxu0
      %v2665 = vpop.f32.mrb[0].mxu0
      %2666 = vdwg.mxu0
      %2667 = vmatprep.subr.bf16.mxu0 0
      %2668 = vmatpush1.bf16.msra.mxu0 %v2387
      %2669 = vmatprep.subr.bf16.mxu0 0
      %2670 = vmatpush1.bf16.msra.mxu0 %v2390
      %2671 = vmatprep.subr.bf16.mxu0 0
      %2672 = vmatpush1.bf16.msra.mxu0 %v2393
      %2673 = vmatprep.subr.bf16.mxu0 0
      %2674 = vmatpush1.bf16.msra.mxu0 %v2396
      %2675 = vmatprep.subr.bf16.mxu0 0
      %2676 = vmatpush1.bf16.msra.mxu0 %v2399
      %2677 = vmatprep.subr.bf16.mxu0 0
      %2678 = vmatpush1.bf16.msra.mxu0 %v2402
      %2679 = vmatprep.subr.bf16.mxu0 0
      %2680 = vmatpush1.bf16.msra.mxu0 %v2405
      %2681 = vmatprep.subr.bf16.mxu0 0
      %2682 = vmatpush1.bf16.msra.mxu0 %v2408
      %2683 = vmatprep.subr.bf16.mxu0 0
      %2684 = vmatpush1.bf16.msra.mxu0 %v2411
      %2685 = vmatprep.subr.bf16.mxu0 0
      %2686 = vmatpush1.bf16.msra.mxu0 %v2414
      %2687 = vmatprep.subr.bf16.mxu0 0
      %2688 = vmatpush1.bf16.msra.mxu0 %v2417
      %2689 = vmatprep.subr.bf16.mxu0 0
      %2690 = vmatpush1.bf16.msra.mxu0 %v2420
      %2691 = vmatprep.subr.bf16.mxu0 0
      %2692 = vmatpush1.bf16.msra.mxu0 %v2423
      %2693 = vmatprep.subr.bf16.mxu0 0
      %2694 = vmatpush1.bf16.msra.mxu0 %v2426
      %2695 = vmatprep.subr.bf16.mxu0 0
      %2696 = vmatpush1.bf16.msra.mxu0 %v2429
      %2697 = vmatprep.subr.bf16.mxu0 0
      %2698 = vmatpush1.bf16.msra.mxu0 %v2432
      %2699 = vmatprep.mubr.bf16.mxu0 %v1887
      %2700 = vmatmul.mubr.bf16.gmra.mrb[0].mxu0 %v1886
      %v2701 = vpop.f32.mrb[0].mxu0
      %v2702 = vadd.f32 %v2662, %v2701
      %v2703 = vpop.f32.mrb[0].mxu0
      %v2704 = vpop.f32.mrb[0].mxu0
      %v2705 = vpop.f32.mrb[0].mxu0
      %2706 = vdwg.mxu0
      %vm2707 = vcmask 409600
      %v2708 = vsel %vm2707, %v2621, -inf
      %2709 = vmax.xlane.f32.xlu0 %v2708
      %v2710 = vpop.xlane.xlu0 %2709
      %v2711 = vsub.f32 %v2621, %v2710
      %v2712 = vmul.f32 %v2711, 1.442695
      %v2713 = vpow.pop %v2712
      %v2714 = vsel %vm2707, %v2713, 0.0
      %2715 = vadd.xlane.f32.xlu0 %v2714
      %v2716 = vpop.xlane.xlu0 %2715
      %v2717 = vrcp.pop %v2716
      %v2718 = vmul.f32 %v2713, %v2717
      %vm2719 = vcmask 827800
      %v2720 = vsel %vm2719, %v2621, -inf
      %2721 = vmax.xlane.f32.xlu0 %v2720
      %v2722 = vpop.xlane.xlu0 %2721
      %v2723 = vsub.f32 %v2621, %v2722
      %v2724 = vmul.f32 %v2723, 1.442695
      %v2725 = vpow.pop %v2724
      %2727 = vrot.lane.b32.xlu0 %v2725, 77
      %v2728 = vpop.permute.xlu0 %2727
      %v2730 = vsel %vm2707, %v2728, 0.0
      %2731 = vadd.xlane.f32.xlu0 %v2730
      %v2732 = vpop.xlane.xlu0 %2731
      %v2733 = vrcp.pop %v2732
      %v2734 = vmul.f32 %v2725, %v2733
      %vm2735 = vcmask 1041200
      %v2736 = vsel %vm2735, %v2621, -inf
      %vm2737 = vcmask 196608
      %v2738 = vsel %vm2737, %v2623, -inf
      %v2739 = vmax.f32 %v2736, %v2738
      %2740 = vmax.xlane.f32.xlu0 %v2739
      %v2741 = vpop.xlane.xlu0 %2740
      %v2742 = vsub.f32 %v2621, %v2741
      %v2743 = vsub.f32 %v2623, %v2741
      %v2744 = vmul.f32 %v2742, 1.442695
      %v2745 = vpow.pop %v2744
      %v2746 = vmul.f32 %v2743, 1.442695
      %v2747 = vpow.pop %v2746
      %2750 = vrot.lane.b32.xlu0 %v2745, 26
      %v2751 = vpop.permute.xlu0 %2750
      %2752 = vrot.lane.b32.xlu0 %v2747, 26
      %v2753 = vpop.permute.xlu0 %2752
      %vm2754 = vcmask 211968
      %v2755 = vsel %vm2754, %v2751, %v2753
      %v2757 = vsel %vm2707, %v2755, 0.0
      %2758 = vadd.xlane.f32.xlu0 %v2757
      %v2759 = vpop.xlane.xlu0 %2758
      %v2760 = vrcp.pop %v2759
      %v2761 = vmul.f32 %v2745, %v2760
      %v2762 = vmul.f32 %v2747, %v2760
      %vm2763 = vcmask 614600
      %v2764 = vsel %vm2763, %v2623, -inf
      %2765 = vmax.xlane.f32.xlu0 %v2764
      %v2766 = vpop.xlane.xlu0 %2765
      %v2767 = vsub.f32 %v2623, %v2766
      %v2768 = vmul.f32 %v2767, 1.442695
      %v2769 = vpow.pop %v2768
      %2771 = vrot.lane.b32.xlu0 %v2769, 103
      %v2772 = vpop.permute.xlu0 %2771
      %v2774 = vsel %vm2707, %v2772, 0.0
      %2775 = vadd.xlane.f32.xlu0 %v2774
      %v2776 = vpop.xlane.xlu0 %2775
      %v2777 = vrcp.pop %v2776
      %v2778 = vmul.f32 %v2769, %v2777
      %vm2779 = vcmask 1032800
      %v2780 = vsel %vm2779, %v2623, -inf
      %2781 = vmax.xlane.f32.xlu0 %v2780
      %v2782 = vpop.xlane.xlu0 %2781
      %v2783 = vsub.f32 %v2623, %v2782
      %v2784 = vmul.f32 %v2783, 1.442695
      %v2785 = vpow.pop %v2784
      %2787 = vrot.lane.b32.xlu0 %v2785, 52
      %v2788 = vpop.permute.xlu0 %2787
      %v2790 = vsel %vm2707, %v2788, 0.0
      %2791 = vadd.xlane.f32.xlu0 %v2790
      %v2792 = vpop.xlane.xlu0 %2791
      %v2793 = vrcp.pop %v2792
      %v2794 = vmul.f32 %v2785, %v2793
      %vm2795 = vcmask 1041400
      %v2796 = vsel %vm2795, %v2623, -inf
      %vm2797 = vcmask 401408
      %v2798 = vsel %vm2797, %v2702, -inf
      %v2799 = vmax.f32 %v2796, %v2798
      %2800 = vmax.xlane.f32.xlu0 %v2799
      %v2801 = vpop.xlane.xlu0 %2800
      %v2802 = vsub.f32 %v2623, %v2801
      %v2803 = vsub.f32 %v2702, %v2801
      %v2804 = vmul.f32 %v2802, 1.442695
      %v2805 = vpow.pop %v2804
      %v2806 = vmul.f32 %v2803, 1.442695
      %v2807 = vpow.pop %v2806
      %2810 = vrot.lane.b32.xlu0 %v2805, 1
      %v2811 = vpop.permute.xlu0 %2810
      %2812 = vrot.lane.b32.xlu0 %v2807, 1
      %v2813 = vpop.permute.xlu0 %2812
      %vm2814 = vcmask 7168
      %v2815 = vsel %vm2814, %v2811, %v2813
      %v2817 = vsel %vm2707, %v2815, 0.0
      %2818 = vadd.xlane.f32.xlu0 %v2817
      %v2819 = vpop.xlane.xlu0 %2818
      %v2820 = vrcp.pop %v2819
      %v2821 = vmul.f32 %v2805, %v2820
      %v2822 = vmul.f32 %v2807, %v2820
      %v2824 = vrot.slane %v2734, 7
      %2825 = vrot.lane.b32.xlu0 %v2824, 77
      %v2826 = vpop.permute.xlu0 %2825
      %v2830 = vrot.slane %v2761, 6
      %v2831 = vrot.slane %v2762, 6
      %2832 = vrot.lane.b32.xlu0 %v2830, 26
      %v2833 = vpop.permute.xlu0 %2832
      %2834 = vrot.lane.b32.xlu0 %v2831, 26
      %v2835 = vpop.permute.xlu0 %2834
      %v2836 = vsel %vm2754, %v2833, %v2835
      %v2839 = vrot.slane %v2778, 5
      %2840 = vrot.lane.b32.xlu0 %v2839, 103
      %v2841 = vpop.permute.xlu0 %2840
      %v2844 = vrot.slane %v2794, 4
      %2845 = vrot.lane.b32.xlu0 %v2844, 52
      %v2846 = vpop.permute.xlu0 %2845
      %v2850 = vrot.slane %v2821, 3
      %v2851 = vrot.slane %v2822, 3
      %2852 = vrot.lane.b32.xlu0 %v2850, 1
      %v2853 = vpop.permute.xlu0 %2852
      %2854 = vrot.lane.b32.xlu0 %v2851, 1
      %v2855 = vpop.permute.xlu0 %2854
      %v2856 = vsel %vm2814, %v2853, %v2855
      %v2858 = vsel %vm845, %v2718, %v2826
      %v2859 = vsel %vm850, %v2858, %v2836
      %v2860 = vsel %vm855, %v2859, %v2841
      %v2861 = vsel %vm860, %v2860, %v2846
      %v2862 = vsel %vm865, %v2861, %v2856
      %vm2863 = vcmask 414720
      %2864 = vst.msk [vmem:[%s384] sm:$0x3f] %vm2863, %v2862
      %p2865 = scmp.lt.s32.totalorder %s22, 1
      %s2866 = scalar_select %p2865, %s22, 1
      %s2867 = smul.addr %s2866, 8
      %s2868 = scalar_lea.vmem %s11, %s2867
      // Predicated region
      $region65: #{categorical_cnn_dqn_forward.1} parent=63 // pred_check
        %p2869 = pneg %p276
      $region66: #{categorical_cnn_dqn_forward.1} parent=63 // pred_check_branch
        %2871 = sbr.rel (%p2869) target = $region68
      $region67: #{categorical_cnn_dqn_forward.1} parent=63 // pred_region
        _
      $region68: #{categorical_cnn_dqn_forward.1} parent=63 // pred_fallthru
        _
    $region64: #{categorical_cnn_dqn_forward.1} parent=5 // pred_fallthru
      _
    %p2872 = scmp.le.s32.totalorder 2, %s17
    // Predicated region
    $region69: #{categorical_cnn_dqn_forward.1} parent=5 // pred_check
      %p2873 = pneg %p2872
    $region70: #{categorical_cnn_dqn_forward.1} parent=5 // pred_check_branch
      %2875 = sbr.rel (%p2873) target = $region72
    $region71: #{categorical_cnn_dqn_forward.1} parent=5 // pred_region
      %s2876 = ssub.s32 %s17, 2
      // Predicated region
      $region73: #{categorical_cnn_dqn_forward.1} parent=71 // pred_check
        %p2877 = pneg %p282
      $region74: #{categorical_cnn_dqn_forward.1} parent=71 // pred_check_branch
        %2879 = sbr.rel (%p2877) target = $region76
      $region75: #{categorical_cnn_dqn_forward.1} parent=71 // pred_region
        %p2880 = scmp.lt.s32.totalorder %s23, 1
        %s2881 = scalar_select %p2880, %s23, 1
        %s2882 = smul.addr %s2881, 8
        %s2883 = scalar_lea.vmem %s11, %s2882
      $region76: #{categorical_cnn_dqn_forward.1} parent=71 // pred_fallthru
        _
    $region72: #{categorical_cnn_dqn_forward.1} parent=5 // pred_fallthru
      _
  $region6: #{categorical_cnn_dqn_forward.1} parent=0 // loop_footer
    %s21 = sadd.s32 1, %s17
  $region7: #{categorical_cnn_dqn_forward.1} parent=0 // loop_footer_branch
    %16 = sbr.rel target = $region3
  $region8: #{categorical_cnn_dqn_forward.1} parent=0 // loop_exit
    _

</llo_original>
